<compile_context>
chip_gen: v7x
topology: tpu7x:2x2x1
jax: 0.10.0
libtpu: 0.0.40
codegen_flags: <defaults>
</compile_context>

<pallas_src>
import functools

import numpy as np
import jax
import jax.numpy as jnp
from jax.experimental import pallas as pl
from jax.experimental.pallas import tpu as pltpu

# ---------------- configuration (small, deterministic) ----------------
N_BATCH = 2
IN_C = 4
MID_C = 32
FEAT_H = 16
FEAT_W = 16
FEAT_STRIDE = 16
RATIOS = (0.5, 1.0, 2.0)
SCALES = (8.0, 16.0, 32.0)
N_ANCHOR = len(RATIOS) * len(SCALES)          # 9
IMG_H = FEAT_H * FEAT_STRIDE                  # 256  (img_shape[i].shape[-2:])
IMG_W = FEAT_W * FEAT_STRIDE                  # 256
SCALE = 1.0
MIN_SIZE = 16.0
N_POST = 32                                   # fixed proposals per image

HW = FEAT_H * FEAT_W                          # 256
K_TOTAL = HW * N_ANCHOR                       # 2304
A = N_ANCHOR

# ---- fused-head / output-slab column layout (128 lanes, f32) ----
C_SCORE = 0                                   # 18 cols: interleaved (bg, fg) per anchor
C_LOC = C_SCORE + 2 * A                       # 18; 36 cols: interleaved (dy,dx,dh,dw)
C_BG = C_LOC + 4 * A                          # 54
C_FG = C_BG + A                               # 63
C_DY = C_FG + A                               # 72
C_DX = C_DY + A                               # 81
C_DH = C_DX + A                               # 90
C_DW = C_DH + A                               # 99
N_USED = C_DW + A                             # 108
OUT_SLAB = 128                                # lane-dense pad to 128

# output slab (the kernel overwrites the de-interleaved scratch columns):
#   0:18 score | 18:54 loc | 54:63 fg prob | 63:72 y1 | 72:81 x1
#   81:90 y2 | 90:99 x2 | 99:108 masked score | 108:128 zeros
C_FGP = C_BG
C_Y1 = C_FG
C_X1 = C_DY
C_Y2 = C_DX
C_X2 = C_DH
C_MS = C_DW

LOG_MAX_RATIO = float(np.log(1000.0 / 16.0))  # clamp for exp(dh), exp(dw)


# ---------------- the fused Pallas kernel ----------------
def rpn_fused_kernel(xcol_ref, w1_ref, b1_ref, w2_ref, b2_ref, aux_ref, o_ref):
    # xcol_ref: (HW, 9*IN_C) im2col patches for one image
    # w2_ref:   (MID_C, 128) fused score/loc/de-interleaved head weights
    # aux_ref:  (HW, 36) anchor aux [ah | aw | acy | acx], 9 cols each
    # o_ref:    (HW, 128) lane-dense output slab

    # 3x3 conv as a single MXU matmul + ReLU
    hid = jnp.dot(xcol_ref[...], w1_ref[...],
                  preferred_element_type=jnp.float32) + b1_ref[...]
    hid = jnp.maximum(hid, 0.0)

    # all 1x1 head convs in one lane-dense matmul
    out = jnp.dot(hid, w2_ref[...],
                  preferred_element_type=jnp.float32) + b2_ref[...]
    # cols 0:54 (score | loc) and 108:128 (zero pad) are already final
    o_ref[...] = out

    # (bg, fg) pair softmax -> foreground probability (de-interleaved columns)
    s_bg = out[:, C_BG:C_BG + A]
    s_fg = out[:, C_FG:C_FG + A]
    m = jnp.maximum(s_bg, s_fg)
    e_bg = jnp.exp(s_bg - m)
    e_fg = jnp.exp(s_fg - m)
    fg = e_fg / (e_bg + e_fg)

    # proposal decode (loc2bbox) + clip + min-size masking
    dy = out[:, C_DY:C_DY + A]
    dx = out[:, C_DX:C_DX + A]
    dh = out[:, C_DH:C_DH + A]
    dw = out[:, C_DW:C_DW + A]

    ah = aux_ref[:, 0 * A:1 * A]
    aw = aux_ref[:, 1 * A:2 * A]
    acy = aux_ref[:, 2 * A:3 * A]
    acx = aux_ref[:, 3 * A:4 * A]

    cy = dy * ah + acy
    cx = dx * aw + acx
    hh = jnp.exp(jnp.minimum(dh, LOG_MAX_RATIO)) * ah
    ww = jnp.exp(jnp.minimum(dw, LOG_MAX_RATIO)) * aw

    y1 = jnp.clip(cy - 0.5 * hh, 0.0, float(IMG_H))
    x1 = jnp.clip(cx - 0.5 * ww, 0.0, float(IMG_W))
    y2 = jnp.clip(cy + 0.5 * hh, 0.0, float(IMG_H))
    x2 = jnp.clip(cx + 0.5 * ww, 0.0, float(IMG_W))

    min_sz = MIN_SIZE * SCALE
    keep = jnp.logical_and((y2 - y1) >= min_sz, (x2 - x1) >= min_sz)
    ms = jnp.where(keep, fg, jnp.full_like(fg, -1e9))

    # direct column-range stores into the slab (no concatenate / XLU shuffle)
    o_ref[:, C_FGP:C_FGP + A] = fg
    o_ref[:, C_Y1:C_Y1 + A] = y1
    o_ref[:, C_X1:C_X1 + A] = x1
    o_ref[:, C_Y2:C_Y2 + A] = y2
    o_ref[:, C_X2:C_X2 + A] = x2
    o_ref[:, C_MS:C_MS + A] = ms


# ---------------- glue: anchors / anchor aux / params ----------------
def make_anchors():
    base = FEAT_STRIDE
    py, px = base / 2.0, base / 2.0
    anchor_base = np.zeros((N_ANCHOR, 4), dtype=np.float32)
    for i, r in enumerate(RATIOS):
        for j, s in enumerate(SCALES):
            h = base * s * np.sqrt(r)
            w = base * s * np.sqrt(1.0 / r)
            k = i * len(SCALES) + j
            anchor_base[k] = [py - h / 2, px - w / 2, py + h / 2, px + w / 2]
    sy = np.arange(0, FEAT_H * FEAT_STRIDE, FEAT_STRIDE)
    sx = np.arange(0, FEAT_W * FEAT_STRIDE, FEAT_STRIDE)
    sxg, syg = np.meshgrid(sx, sy)
    shift = np.stack([syg.ravel(), sxg.ravel(),
                      syg.ravel(), sxg.ravel()], axis=1).astype(np.float32)
    anchors = (anchor_base[None, :, :] + shift[:, None, :]).reshape(-1, 4)
    return jnp.asarray(anchors)[None]                               # (1, K, 4)


def make_anchor_aux(anchors):
    # (HW, 36) = [ah(9) | aw(9) | acy(9) | acx(9)], precomputed once.
    a = np.asarray(anchors[0]).reshape(HW, N_ANCHOR, 4)
    ah = a[:, :, 2] - a[:, :, 0]
    aw = a[:, :, 3] - a[:, :, 1]
    acy = a[:, :, 0] + 0.5 * ah
    acx = a[:, :, 1] + 0.5 * aw
    aux = np.concatenate([ah, aw, acy, acx], axis=1).astype(np.float32)
    return jnp.asarray(aux)                                         # (HW, 36)


def init_params(key):
    ks = jax.random.split(key, 3)
    w1 = jax.random.normal(ks[0], (3, 3, IN_C, MID_C), jnp.float32) * 0.01
    b1 = jnp.zeros((1, MID_C), jnp.float32)
    # score conv: 2A channels interleaved (bg, fg) per anchor
    ws = np.asarray(jax.random.normal(ks[1], (MID_C, 2 * A), jnp.float32)) * 0.01
    bs = np.zeros((2 * A,), np.float32)
    # loc conv: 4A channels interleaved (dy, dx, dh, dw) per anchor
    wl = np.asarray(jax.random.normal(ks[2], (MID_C, 4 * A), jnp.float32)) * 0.01
    bl = np.zeros((4 * A,), np.float32)

    # Fuse all 1x1 heads into one lane-dense (MID_C, 128) weight + bias.
    w2 = np.zeros((MID_C, OUT_SLAB), np.float32)
    b2 = np.zeros((1, OUT_SLAB), np.float32)
    w2[:, C_SCORE:C_SCORE + 2 * A] = ws
    b2[0, C_SCORE:C_SCORE + 2 * A] = bs
    w2[:, C_LOC:C_LOC + 4 * A] = wl
    b2[0, C_LOC:C_LOC + 4 * A] = bl
    w2[:, C_BG:C_BG + A] = ws[:, 0::2]
    b2[0, C_BG:C_BG + A] = bs[0::2]
    w2[:, C_FG:C_FG + A] = ws[:, 1::2]
    b2[0, C_FG:C_FG + A] = bs[1::2]
    w2[:, C_DY:C_DY + A] = wl[:, 0::4]
    b2[0, C_DY:C_DY + A] = bl[0::4]
    w2[:, C_DX:C_DX + A] = wl[:, 1::4]
    b2[0, C_DX:C_DX + A] = bl[1::4]
    w2[:, C_DH:C_DH + A] = wl[:, 2::4]
    b2[0, C_DH:C_DH + A] = bl[2::4]
    w2[:, C_DW:C_DW + A] = wl[:, 3::4]
    b2[0, C_DW:C_DW + A] = bl[3::4]

    return {
        "w1": w1.reshape(9 * IN_C, MID_C),   # rows ordered (dy, dx, c) = im2col order
        "b1": b1,
        "w2": jnp.asarray(w2),
        "b2": jnp.asarray(b2),
    }


# ---------------- forward (wrapper calling the fused kernel) ----------------
def rpn_forward(x, params, anchors, anchor_aux, scale):
    del scale  # folded into MIN_SIZE * SCALE constant inside the kernel
    n = x.shape[0]

    # im2col (layout glue): NCHW -> padded NHWC -> (n*HW, 9*C)
    x_nhwc = jnp.transpose(x, (0, 2, 3, 1)).astype(jnp.float32)
    x_pad = jnp.pad(x_nhwc, ((0, 0), (1, 1), (1, 1), (0, 0)))
    cols = [x_pad[:, dy:dy + FEAT_H, dx:dx + FEAT_W, :]
            for dy in range(3) for dx in range(3)]
    xcol = jnp.concatenate(cols, axis=-1).reshape(n * HW, 9 * IN_C)

    const = lambda shape: pl.BlockSpec(shape, lambda i: (0, 0))

    slab = pl.pallas_call(
        rpn_fused_kernel,
        grid=(n,),  # one image per step; "parallel" -> v7x's 2 TCs split it
        in_specs=[
            pl.BlockSpec((HW, 9 * IN_C), lambda i: (i, 0)),
            const((9 * IN_C, MID_C)),
            const((1, MID_C)),
            const((MID_C, OUT_SLAB)),
            const((1, OUT_SLAB)),
            const((HW, 4 * A)),
        ],
        out_specs=pl.BlockSpec((HW, OUT_SLAB), lambda i: (i, 0)),
        out_shape=jax.ShapeDtypeStruct((n * HW, OUT_SLAB), jnp.float32),
        compiler_params=pltpu.CompilerParams(
            dimension_semantics=("parallel",)),
    )(xcol, params["w1"], params["b1"], params["w2"], params["b2"], anchor_aux)

    slab = slab.reshape(n, HW, OUT_SLAB)

    # rpn_score: interleaved (bg, fg) channels, NHWC order == permute(0,2,3,1).view(n,-1,2)
    rpn_score = slab[:, :, C_SCORE:C_SCORE + 2 * A].reshape(n, -1, 2)
    # rpn_offset: the head emits loc already in (n, h*w*A, 4) anchor order, so the
    # module's .view(n, -1, 4) is the identity and offsets pair with `anchors`.
    rpn_offset = slab[:, :, C_LOC:C_LOC + 4 * A].reshape(n, -1, 4)

    # decoded / clipped boxes: [y1|x1|y2|x2] blocks of 9 -> (n, K, 4)
    boxes = slab[:, :, C_Y1:C_Y1 + 4 * A].reshape(n, HW, 4, A)
    boxes = jnp.transpose(boxes, (0, 1, 3, 2)).reshape(n, K_TOTAL, 4)
    masked = slab[:, :, C_MS:C_MS + A].reshape(n, K_TOTAL)

    # TODO(synk): NMS and the dynamic-length min-size truncation of
    # ProposalCreator are replaced by a fixed-size score top-k (min-size is
    # applied via score masking); true NMS is sequential/data-dependent and
    # has no clean Pallas equivalent.
    _, top_idx = jax.lax.top_k(masked, N_POST)                      # (n, N_POST)
    rois = jnp.take_along_axis(boxes, top_idx[:, :, None], axis=1)  # (n, N_POST, 4)
    rois = rois.reshape(n * N_POST, 4)
    roi_indices = jnp.repeat(jnp.arange(n, dtype=jnp.int32), N_POST)

    return rpn_offset, rpn_score, rois, roi_indices, anchors


# ---------------- main ----------------
if __name__ == "__main__":
    key = jax.random.PRNGKey(0)
    kx, kp = jax.random.split(key)
    x = jax.random.normal(kx, (N_BATCH, IN_C, FEAT_H, FEAT_W), jnp.float32)
    params = init_params(kp)
    anchors = make_anchors()                                        # (1, K, 4)
    anchor_aux = make_anchor_aux(anchors)                           # (HW, 36)

    fwd = jax.jit(functools.partial(rpn_forward, params=params, anchors=anchors,
                                    anchor_aux=anchor_aux, scale=SCALE))
    rpn_offset, rpn_score, rois, roi_indices, anc = fwd(x)
    jax.block_until_ready((rpn_offset, rpn_score, rois, roi_indices, anc))

    assert rpn_offset.shape == (N_BATCH, K_TOTAL, 4)
    assert rpn_score.shape == (N_BATCH, K_TOTAL, 2)
    assert rois.shape == (N_BATCH * N_POST, 4)
    assert roi_indices.shape == (N_BATCH * N_POST,)
    assert roi_indices.dtype == jnp.int32
    assert anc.shape == (1, K_TOTAL, 4)
    assert bool(jnp.all(jnp.isfinite(rois)))
    assert bool(jnp.all(jnp.isfinite(rpn_score)))
    print("KERNEL_OK")
</pallas_src>

<mosaic_0001>
module attributes {stable_mosaic.version = 11 : i64} {
  func.func @rpn_fused_kernel(%arg0: i32, %arg1: memref<256x36xf32, #tpu.memory_space<vmem>>, %arg2: memref<36x32xf32, #tpu.memory_space<vmem>>, %arg3: memref<1x32xf32, #tpu.memory_space<vmem>>, %arg4: memref<32x128xf32, #tpu.memory_space<vmem>>, %arg5: memref<1x128xf32, #tpu.memory_space<vmem>>, %arg6: memref<256x36xf32, #tpu.memory_space<vmem>>, %arg7: memref<256x128xf32, #tpu.memory_space<vmem>>) attributes {dimension_semantics = [#tpu.dimension_semantics<parallel>], iteration_bounds = array<i64: 2>, scalar_prefetch = 0 : i64, scratch_operands = 0 : i64, tpu.core_type = #tpu.core_type<tc>, window_params = [{transform_indices = @transform_0, window_bounds = array<i64: 256, 36>}, {pipeline_mode = #tpu.pipeline_mode<synchronous>, transform_indices = @transform_1, window_bounds = array<i64: 36, 32>}, {pipeline_mode = #tpu.pipeline_mode<synchronous>, transform_indices = @transform_2, window_bounds = array<i64: 1, 32>}, {pipeline_mode = #tpu.pipeline_mode<synchronous>, transform_indices = @transform_3, window_bounds = array<i64: 32, 128>}, {pipeline_mode = #tpu.pipeline_mode<synchronous>, transform_indices = @transform_4, window_bounds = array<i64: 1, 128>}, {pipeline_mode = #tpu.pipeline_mode<synchronous>, transform_indices = @transform_5, window_bounds = array<i64: 256, 36>}, {transform_indices = @transform_6, window_bounds = array<i64: 256, 128>}]} {
    %c0 = arith.constant 0 : index
    %c0_0 = arith.constant 0 : index
    %0 = vector.load %arg1[%c0, %c0_0] : memref<256x36xf32, #tpu.memory_space<vmem>>, vector<256x36xf32>
    %c0_1 = arith.constant 0 : index
    %c0_2 = arith.constant 0 : index
    %1 = vector.load %arg2[%c0_1, %c0_2] : memref<36x32xf32, #tpu.memory_space<vmem>>, vector<36x32xf32>
    %cst = arith.constant dense<0.000000e+00> : vector<256x32xf32>
    %2 = tpu.matmul %0, %1, %cst {dimension_numbers = #tpu.dot_dimension_numbers<[1], [0], [0], [1], [0, 0, 1, 1], [], []>} : vector<256x36xf32>, vector<36x32xf32>, vector<256x32xf32> -> vector<256x32xf32>
    %c0_3 = arith.constant 0 : index
    %c0_4 = arith.constant 0 : index
    %3 = vector.load %arg3[%c0_3, %c0_4] : memref<1x32xf32, #tpu.memory_space<vmem>>, vector<1x32xf32>
    %4 = vector.broadcast %3 : vector<1x32xf32> to vector<256x32xf32>
    %5 = arith.addf %2, %4 : vector<256x32xf32>
    %cst_5 = arith.constant 0.000000e+00 : f32
    %6 = vector.broadcast %cst_5 : f32 to vector<256x32xf32>
    %7 = arith.maximumf %5, %6 : vector<256x32xf32>
    %c0_6 = arith.constant 0 : index
    %c0_7 = arith.constant 0 : index
    %8 = vector.load %arg4[%c0_6, %c0_7] : memref<32x128xf32, #tpu.memory_space<vmem>>, vector<32x128xf32>
    %cst_8 = arith.constant dense<0.000000e+00> : vector<256x128xf32>
    %9 = tpu.matmul %7, %8, %cst_8 {dimension_numbers = #tpu.dot_dimension_numbers<[1], [0], [0], [1], [0, 0, 1, 1], [], []>} : vector<256x32xf32>, vector<32x128xf32>, vector<256x128xf32> -> vector<256x128xf32>
    %c0_9 = arith.constant 0 : index
    %c0_10 = arith.constant 0 : index
    %10 = vector.load %arg5[%c0_9, %c0_10] : memref<1x128xf32, #tpu.memory_space<vmem>>, vector<1x128xf32>
    %11 = vector.broadcast %10 : vector<1x128xf32> to vector<256x128xf32>
    %12 = arith.addf %9, %11 : vector<256x128xf32>
    %c0_11 = arith.constant 0 : index
    %c0_12 = arith.constant 0 : index
    %13 = vector.load %arg7[%c0_11, %c0_12] : memref<256x128xf32, #tpu.memory_space<vmem>>, vector<256x128xf32>
    tpu.vector_store %arg7[%c0_11, %c0_12], %12 {strides = array<i32>} : memref<256x128xf32, #tpu.memory_space<vmem>>, vector<256x128xf32>,
    %14 = vector.extract_strided_slice %12 {offsets = [0, 54], sizes = [256, 9], strides = [1, 1]} : vector<256x128xf32> to vector<256x9xf32>
    %15 = vector.extract_strided_slice %12 {offsets = [0, 63], sizes = [256, 9], strides = [1, 1]} : vector<256x128xf32> to vector<256x9xf32>
    %16 = arith.maximumf %14, %15 : vector<256x9xf32>
    %17 = arith.subf %14, %16 : vector<256x9xf32>
    %18 = math.exp %17 : vector<256x9xf32>
    %19 = arith.subf %15, %16 : vector<256x9xf32>
    %20 = math.exp %19 : vector<256x9xf32>
    %21 = arith.addf %18, %20 : vector<256x9xf32>
    %22 = arith.divf %20, %21 : vector<256x9xf32>
    %23 = vector.extract_strided_slice %12 {offsets = [0, 72], sizes = [256, 9], strides = [1, 1]} : vector<256x128xf32> to vector<256x9xf32>
    %24 = vector.extract_strided_slice %12 {offsets = [0, 81], sizes = [256, 9], strides = [1, 1]} : vector<256x128xf32> to vector<256x9xf32>
    %25 = vector.extract_strided_slice %12 {offsets = [0, 90], sizes = [256, 9], strides = [1, 1]} : vector<256x128xf32> to vector<256x9xf32>
    %26 = vector.extract_strided_slice %12 {offsets = [0, 99], sizes = [256, 9], strides = [1, 1]} : vector<256x128xf32> to vector<256x9xf32>
    %c0_13 = arith.constant 0 : index
    %c0_14 = arith.constant 0 : index
    %27 = vector.load %arg6[%c0_13, %c0_14] : memref<256x36xf32, #tpu.memory_space<vmem>>, vector<256x9xf32>
    %c0_15 = arith.constant 0 : index
    %c9 = arith.constant 9 : index
    %28 = vector.load %arg6[%c0_15, %c9] : memref<256x36xf32, #tpu.memory_space<vmem>>, vector<256x9xf32>
    %c0_16 = arith.constant 0 : index
    %c18 = arith.constant 18 : index
    %29 = vector.load %arg6[%c0_16, %c18] : memref<256x36xf32, #tpu.memory_space<vmem>>, vector<256x9xf32>
    %c0_17 = arith.constant 0 : index
    %c27 = arith.constant 27 : index
    %30 = vector.load %arg6[%c0_17, %c27] : memref<256x36xf32, #tpu.memory_space<vmem>>, vector<256x9xf32>
    %31 = arith.mulf %23, %27 : vector<256x9xf32>
    %32 = arith.addf %31, %29 : vector<256x9xf32>
    %33 = arith.mulf %24, %28 : vector<256x9xf32>
    %34 = arith.addf %33, %30 : vector<256x9xf32>
    %cst_18 = arith.constant 4.13516665 : f32
    %35 = vector.broadcast %cst_18 : f32 to vector<256x9xf32>
    %36 = arith.minimumf %25, %35 : vector<256x9xf32>
    %37 = math.exp %36 : vector<256x9xf32>
    %38 = arith.mulf %37, %27 : vector<256x9xf32>
    %cst_19 = arith.constant 4.13516665 : f32
    %39 = vector.broadcast %cst_19 : f32 to vector<256x9xf32>
    %40 = arith.minimumf %26, %39 : vector<256x9xf32>
    %41 = math.exp %40 : vector<256x9xf32>
    %42 = arith.mulf %41, %28 : vector<256x9xf32>
    %cst_20 = arith.constant 5.000000e-01 : f32
    %43 = vector.broadcast %cst_20 : f32 to vector<256x9xf32>
    %44 = arith.mulf %43, %38 : vector<256x9xf32>
    %45 = arith.subf %32, %44 : vector<256x9xf32>
    %cst_21 = arith.constant 0.000000e+00 : f32
    %cst_22 = arith.constant 2.560000e+02 : f32
    %46 = vector.broadcast %cst_21 : f32 to vector<256x9xf32>
    %47 = arith.maximumf %46, %45 : vector<256x9xf32>
    %48 = vector.broadcast %cst_22 : f32 to vector<256x9xf32>
    %49 = arith.minimumf %48, %47 : vector<256x9xf32>
    %cst_23 = arith.constant 5.000000e-01 : f32
    %50 = vector.broadcast %cst_23 : f32 to vector<256x9xf32>
    %51 = arith.mulf %50, %42 : vector<256x9xf32>
    %52 = arith.subf %34, %51 : vector<256x9xf32>
    %cst_24 = arith.constant 0.000000e+00 : f32
    %cst_25 = arith.constant 2.560000e+02 : f32
    %53 = vector.broadcast %cst_24 : f32 to vector<256x9xf32>
    %54 = arith.maximumf %53, %52 : vector<256x9xf32>
    %55 = vector.broadcast %cst_25 : f32 to vector<256x9xf32>
    %56 = arith.minimumf %55, %54 : vector<256x9xf32>
    %cst_26 = arith.constant 5.000000e-01 : f32
    %57 = vector.broadcast %cst_26 : f32 to vector<256x9xf32>
    %58 = arith.mulf %57, %38 : vector<256x9xf32>
    %59 = arith.addf %32, %58 : vector<256x9xf32>
    %cst_27 = arith.constant 0.000000e+00 : f32
    %cst_28 = arith.constant 2.560000e+02 : f32
    %60 = vector.broadcast %cst_27 : f32 to vector<256x9xf32>
    %61 = arith.maximumf %60, %59 : vector<256x9xf32>
    %62 = vector.broadcast %cst_28 : f32 to vector<256x9xf32>
    %63 = arith.minimumf %62, %61 : vector<256x9xf32>
    %cst_29 = arith.constant 5.000000e-01 : f32
    %64 = vector.broadcast %cst_29 : f32 to vector<256x9xf32>
    %65 = arith.mulf %64, %42 : vector<256x9xf32>
    %66 = arith.addf %34, %65 : vector<256x9xf32>
    %cst_30 = arith.constant 0.000000e+00 : f32
    %cst_31 = arith.constant 2.560000e+02 : f32
    %67 = vector.broadcast %cst_30 : f32 to vector<256x9xf32>
    %68 = arith.maximumf %67, %66 : vector<256x9xf32>
    %69 = vector.broadcast %cst_31 : f32 to vector<256x9xf32>
    %70 = arith.minimumf %69, %68 : vector<256x9xf32>
    %71 = arith.subf %63, %49 : vector<256x9xf32>
    %cst_32 = arith.constant 1.600000e+01 : f32
    %72 = vector.broadcast %cst_32 : f32 to vector<256x9xf32>
    %73 = arith.cmpf oge, %71, %72 : vector<256x9xf32>
    %74 = arith.subf %70, %56 : vector<256x9xf32>
    %cst_33 = arith.constant 1.600000e+01 : f32
    %75 = vector.broadcast %cst_33 : f32 to vector<256x9xf32>
    %76 = arith.cmpf oge, %74, %75 : vector<256x9xf32>
    %77 = arith.andi %73, %76 : vector<256x9xi1>
    %cst_34 = arith.constant -1.000000e+09 : f32
    %78 = vector.broadcast %cst_34 : f32 to vector<256x9xf32>
    %79 = arith.select %77, %22, %78 : vector<256x9xi1>, vector<256x9xf32>
    %c0_35 = arith.constant 0 : index
    %c54 = arith.constant 54 : index
    %80 = vector.load %arg7[%c0_35, %c54] : memref<256x128xf32, #tpu.memory_space<vmem>>, vector<256x9xf32>
    tpu.vector_store %arg7[%c0_35, %c54], %22 {strides = array<i32>} : memref<256x128xf32, #tpu.memory_space<vmem>>, vector<256x9xf32>,
    %c0_36 = arith.constant 0 : index
    %c63 = arith.constant 63 : index
    %81 = vector.load %arg7[%c0_36, %c63] : memref<256x128xf32, #tpu.memory_space<vmem>>, vector<256x9xf32>
    tpu.vector_store %arg7[%c0_36, %c63], %49 {strides = array<i32>} : memref<256x128xf32, #tpu.memory_space<vmem>>, vector<256x9xf32>,
    %c0_37 = arith.constant 0 : index
    %c72 = arith.constant 72 : index
    %82 = vector.load %arg7[%c0_37, %c72] : memref<256x128xf32, #tpu.memory_space<vmem>>, vector<256x9xf32>
    tpu.vector_store %arg7[%c0_37, %c72], %56 {strides = array<i32>} : memref<256x128xf32, #tpu.memory_space<vmem>>, vector<256x9xf32>,
    %c0_38 = arith.constant 0 : index
    %c81 = arith.constant 81 : index
    %83 = vector.load %arg7[%c0_38, %c81] : memref<256x128xf32, #tpu.memory_space<vmem>>, vector<256x9xf32>
    tpu.vector_store %arg7[%c0_38, %c81], %63 {strides = array<i32>} : memref<256x128xf32, #tpu.memory_space<vmem>>, vector<256x9xf32>,
    %c0_39 = arith.constant 0 : index
    %c90 = arith.constant 90 : index
    %84 = vector.load %arg7[%c0_39, %c90] : memref<256x128xf32, #tpu.memory_space<vmem>>, vector<256x9xf32>
    tpu.vector_store %arg7[%c0_39, %c90], %70 {strides = array<i32>} : memref<256x128xf32, #tpu.memory_space<vmem>>, vector<256x9xf32>,
    %c0_40 = arith.constant 0 : index
    %c99 = arith.constant 99 : index
    %85 = vector.load %arg7[%c0_40, %c99] : memref<256x128xf32, #tpu.memory_space<vmem>>, vector<256x9xf32>
    tpu.vector_store %arg7[%c0_40, %c99], %79 {strides = array<i32>} : memref<256x128xf32, #tpu.memory_space<vmem>>, vector<256x9xf32>,
    return
  }
  func.func @transform_0(%arg0: i32) -> (i32, i32) {
    %c0_i32 = arith.constant 0 : i32
    %c0_i32_0 = arith.constant 0 : i32
    return %arg0, %c0_i32 : i32, i32
  }
  func.func @transform_1(%arg0: i32) -> (i32, i32) {
    %c0_i32 = arith.constant 0 : i32
    %c0_i32_0 = arith.constant 0 : i32
    %c0_i32_1 = arith.constant 0 : i32
    return %c0_i32, %c0_i32_0 : i32, i32
  }
  func.func @transform_2(%arg0: i32) -> (i32, i32) {
    %c0_i32 = arith.constant 0 : i32
    %c0_i32_0 = arith.constant 0 : i32
    %c0_i32_1 = arith.constant 0 : i32
    return %c0_i32, %c0_i32_0 : i32, i32
  }
  func.func @transform_3(%arg0: i32) -> (i32, i32) {
    %c0_i32 = arith.constant 0 : i32
    %c0_i32_0 = arith.constant 0 : i32
    %c0_i32_1 = arith.constant 0 : i32
    return %c0_i32, %c0_i32_0 : i32, i32
  }
  func.func @transform_4(%arg0: i32) -> (i32, i32) {
    %c0_i32 = arith.constant 0 : i32
    %c0_i32_0 = arith.constant 0 : i32
    %c0_i32_1 = arith.constant 0 : i32
    return %c0_i32, %c0_i32_0 : i32, i32
  }
  func.func @transform_5(%arg0: i32) -> (i32, i32) {
    %c0_i32 = arith.constant 0 : i32
    %c0_i32_0 = arith.constant 0 : i32
    %c0_i32_1 = arith.constant 0 : i32
    return %c0_i32, %c0_i32_0 : i32, i32
  }
  func.func @transform_6(%arg0: i32) -> (i32, i32) {
    %c0_i32 = arith.constant 0 : i32
    %c0_i32_0 = arith.constant 0 : i32
    return %arg0, %c0_i32 : i32, i32
  }
}

</mosaic_0001>

<llo_original>
// kernel: custom-call
$region0: #{custom-call}
  #allocation0 [shape = 'u32[8,128]{1,0}', space=vmem, size = 0x1000, scoped, tag = 'scratch']
  #allocation1 [shape = 'u32[8,128]{1,0}', space=vmem, size = 0x1000, scoped, tag = 'scratch']
  #allocation2 [shape = 'u32[8,128]{1,0}', space=vmem, size = 0x1000, scoped, tag = 'scratch']
  #allocation3 [shape = 'u32[8,128]{1,0}', space=vmem, size = 0x1000, scoped, tag = 'scratch']
  #allocation4 [shape = 'u32[8,128]{1,0}', space=vmem, size = 0x1000, scoped, tag = 'scratch']
  #allocation5 [shape = 'u32[8,128]{1,0}', space=vmem, size = 0x1000, scoped, tag = 'scratch']
  #allocation6 [shape = 'u32[8,128]{1,0}', space=vmem, size = 0x1000, scoped, tag = 'scratch']
  %s0 = inlined_call_operand.vmem [shape: f32[2,2304], index: 0, kind: input, shape index: {}]
  %s1 = inlined_call_operand.hbm [shape: f32[2,32], index: 1, kind: output, shape index: {0}]
  %s2 = inlined_call_operand.vmem [shape: s32[2,32], index: 2, kind: output, shape index: {1}]
  %3 = xla_tuple %s1, %s2
  %4 = xla_tuple 2147483648, 2147483647
  $region1: #{custom-call} parent=0
    #allocation7 [shape = 'u8[4096]{0}', space=vmem, size = 0x1000, scoped, tag = 'operand span for operand 1']
    #allocation8 [shape = 'u8[1024]{0}', space=vmem, size = 0x400, scoped, tag = 'packed  for operand 1']
    #allocation9 [shape = 's32[1]{0}', space=sflag, size = 0x4, scoped, tag = 'scoped memory for custom-call']
    #allocation10 [shape = 'u8[4096]{0}', space=vmem, size = 0x1000, scoped, tag = 'operand span for operand 2']
    #allocation11 [shape = 'u8[1024]{0}', space=vmem, size = 0x400, scoped, tag = 'packed  for operand 2']
    #allocation12 [shape = 'f32[32,2]{1,0:T(8,128)}', space=vmem, size = 0x4000, scoped, tag = 'scoped memory for custom-call']
    #allocation13 [shape = 'f32[32,2]{1,0:T(8,128)}', space=vmem, size = 0x4000, scoped, tag = 'scoped memory for custom-call']
    #allocation14 [shape = 's32[32,2]{1,0:T(8,128)}', space=vmem, size = 0x4000, scoped, tag = 'scoped memory for custom-call']
    #allocation15 [shape = 's32[32,2]{1,0:T(8,128)}', space=vmem, size = 0x4000, scoped, tag = 'scoped memory for custom-call']
    %5 = vsyncpa [#allocation9], 0
    %6 = xla_tuple [#allocation7], [#allocation10]
    %7 = vst [vmem:[#allocation12] sm:$0xff] 2147483648
    %s8 = scalar_lea.vmem [#allocation12], 8
    %9 = vst [vmem:[%s8] sm:$0xff] 2147483648
    %s10 = scalar_lea.vmem [#allocation12], 16
    %11 = vst [vmem:[%s10] sm:$0xff] 2147483648
    %s12 = scalar_lea.vmem [#allocation12], 24
    %13 = vst [vmem:[%s12] sm:$0xff] 2147483648
    %14 = vst [vmem:[#allocation14] sm:$0xff] 2147483647
    %s15 = scalar_lea.vmem [#allocation14], 8
    %16 = vst [vmem:[%s15] sm:$0xff] 2147483647
    %s17 = scalar_lea.vmem [#allocation14], 16
    %18 = vst [vmem:[%s17] sm:$0xff] 2147483647
    %s19 = scalar_lea.vmem [#allocation14], 24
    %20 = vst [vmem:[%s19] sm:$0xff] 2147483647
    %21 = xla_tuple [#allocation12], [#allocation14]
    %22 = xla_tuple [#allocation13], [#allocation15]
    $region2: #{custom-call} parent=1
      #allocation16 [shape = 'u8[20480]{0}', space=vmem, size = 0x5000, scoped, tag = 'operand span for operand 0']
      #allocation17 [shape = 's32[5120]{0}', space=vmem, size = 0x5000, scoped, tag = 'scoped memory for custom-call']
      // Predicated region
      $region3: #{custom-call} parent=2 // pred_check
        _
      $region4: #{custom-call} parent=2 // pred_check_branch
        %24 = sbr.rel (0) target = $region6
      $region5: #{custom-call} parent=2 // pred_region
        // Predicated region
        $region7: #{custom-call} parent=5 // pred_check
          _
        $region8: #{custom-call} parent=5 // pred_check_branch
          %26 = sbr.rel (0) target = $region10
        $region9: #{custom-call} parent=5 // pred_region
          // Predicated region
          $region11: #{custom-call} parent=9 // pred_check
            _
          $region12: #{custom-call} parent=9 // pred_check_branch
            %28 = sbr.rel (0) target = $region14
          $region13: #{custom-call} parent=9 // pred_region
            %s29 = scalar_lea.vmem %s0, 32
            %s30 = scalar_lea.vmem [#allocation16], 32
            loop: start=0, step=1, limit=1
            $region15: #{custom-call} parent=13 // loop_pre_header
              _
            $region16: #{custom-call} parent=13 // loop_header
              %s32 = sphi 0, %s36
              %p33 = scmp.ge.s32.totalorder %s32, 1
              %s37 = sphi %s0, %s0
              %s38 = sphi [#allocation16], [#allocation16]
            $region17: #{custom-call} parent=13 // loop_header_branch
              %35 = sbr.rel (%p33) target = $region21
            $region18: #{custom-call} parent=13 // loop_body
              %v39 = vld [vmem:[%s37] sm:$0xff]
              %40 = vst [vmem:[%s38] sm:$0xff] %v39
              %v41 = vld [vmem:[%s37 + $0x8] sm:$0xff]
              %42 = vst [vmem:[%s38 + $0x8] sm:$0xff] %v41
              %v43 = vld [vmem:[%s37 + $0x10] sm:$0xff]
              %44 = vst [vmem:[%s38 + $0x10] sm:$0xff] %v43
              %v45 = vld [vmem:[%s37 + $0x18] sm:$0xff]
              %46 = vst [vmem:[%s38 + $0x18] sm:$0xff] %v45
            $region19: #{custom-call} parent=13 // loop_footer
              %s36 = sadd.s32 1, %s32
            $region20: #{custom-call} parent=13 // loop_footer_branch
              %31 = sbr.rel target = $region16
            $region21: #{custom-call} parent=13 // loop_exit
              _
            loop: start=0, step=1, limit=1
            $region22: #{custom-call} parent=13 // loop_pre_header
              _
            $region23: #{custom-call} parent=13 // loop_header
              %s49 = sphi 0, %s53
              %p50 = scmp.ge.s32.totalorder %s49, 1
              %s54 = sphi %s29, %s29
              %s55 = sphi %s30, %s30
            $region24: #{custom-call} parent=13 // loop_header_branch
              %52 = sbr.rel (%p50) target = $region28
            $region25: #{custom-call} parent=13 // loop_body
              %v56 = vld [vmem:[%s54] sm:$0xf]
              %57 = vst [vmem:[%s55] sm:$0xf] %v56
            $region26: #{custom-call} parent=13 // loop_footer
              %s53 = sadd.s32 1, %s49
            $region27: #{custom-call} parent=13 // loop_footer_branch
              %48 = sbr.rel target = $region23
            $region28: #{custom-call} parent=13 // loop_exit
              _
          $region14: #{custom-call} parent=9 // pred_fallthru
            _
        $region10: #{custom-call} parent=5 // pred_fallthru
          _
        %58 = vnop
      $region6: #{custom-call} parent=2 // pred_fallthru
        _
      // Predicated region
      $region29: #{custom-call} parent=2 // pred_check
        _
      $region30: #{custom-call} parent=2 // pred_check_branch
        %60 = sbr.rel (0) target = $region32
      $region31: #{custom-call} parent=2 // pred_region
        _
      $region32: #{custom-call} parent=2 // pred_fallthru
        _
      %v61 = vlaneseq
      %v62 = vand.u32 %v61, 127
      %v63 = vlaneseq
      %v64 = vshrl.u32 %v63, 7
      %v65 = vshrl.u32 %v64, 1
      %v66 = vand.u32 %v64, 1
      %v67 = vmul.u32 %v65, 128
      %v68 = vadd.s32 %v62, %v67
      %v70 = vld [vmem:[#allocation16] sm:$0xff]
      %vm71 = vcmp.lt.s32.totalorder %v70, 0
      %v72 = vsub.s32 2147483647, %v70
      %v73 = vsel %vm71, %v72, %v70
      %vm75 = vcmp.lt.s32.totalorder %v68, 2304
      %v76 = vsel %vm75, %v73, 2147483648
      %77 = vst [vmem:[#allocation16] sm:$0xff] %v76
      %s78 = scalar_lea.vmem [#allocation16], 8
      %v79 = vld [vmem:[%s78] sm:$0xff]
      %vm80 = vcmp.lt.s32.totalorder %v79, 0
      %v81 = vsub.s32 2147483647, %v79
      %v82 = vsel %vm80, %v81, %v79
      %v83 = vadd.s32 %v68, 512
      %vm84 = vcmp.lt.s32.totalorder %v83, 2304
      %v85 = vsel %vm84, %v82, 2147483648
      %86 = vst [vmem:[%s78] sm:$0xff] %v85
      %s87 = scalar_lea.vmem [#allocation16], 16
      %v88 = vld [vmem:[%s87] sm:$0xff]
      %vm89 = vcmp.lt.s32.totalorder %v88, 0
      %v90 = vsub.s32 2147483647, %v88
      %v91 = vsel %vm89, %v90, %v88
      %v92 = vadd.s32 %v68, 1024
      %vm93 = vcmp.lt.s32.totalorder %v92, 2304
      %v94 = vsel %vm93, %v91, 2147483648
      %95 = vst [vmem:[%s87] sm:$0xff] %v94
      %s96 = scalar_lea.vmem [#allocation16], 24
      %v97 = vld [vmem:[%s96] sm:$0xff]
      %vm98 = vcmp.lt.s32.totalorder %v97, 0
      %v99 = vsub.s32 2147483647, %v97
      %v100 = vsel %vm98, %v99, %v97
      %v101 = vadd.s32 %v68, 1536
      %vm102 = vcmp.lt.s32.totalorder %v101, 2304
      %v103 = vsel %vm102, %v100, 2147483648
      %104 = vst [vmem:[%s96] sm:$0xff] %v103
      %s105 = scalar_lea.vmem [#allocation16], 32
      %v106 = vld [vmem:[%s105] sm:$0xff]
      %vm107 = vcmp.lt.s32.totalorder %v106, 0
      %v108 = vsub.s32 2147483647, %v106
      %v109 = vsel %vm107, %v108, %v106
      %v110 = vadd.s32 %v68, 2048
      %vm111 = vcmp.lt.s32.totalorder %v110, 2304
      %v112 = vsel %vm111, %v109, 2147483648
      %113 = vst [vmem:[%s105] sm:$0xff] %v112
      %v114 = vlaneseq
      %v115 = vand.u32 %v114, 127
      %v116 = vlaneseq
      %v117 = vshrl.u32 %v116, 7
      %v118 = vshrl.u32 %v117, 1
      %v119 = vand.u32 %v117, 1
      %v120 = vmul.u32 %v118, 128
      %v121 = vadd.s32 %v115, %v120
      %124 = vst [vmem:[#allocation17] sm:$0xff] %v121
      %v125 = vadd.s32 %v121, 512
      %s126 = scalar_lea.vmem [#allocation17], 8
      %127 = vst [vmem:[%s126] sm:$0xff] %v125
      %v128 = vadd.s32 %v121, 1024
      %s129 = scalar_lea.vmem [#allocation17], 16
      %130 = vst [vmem:[%s129] sm:$0xff] %v128
      %v131 = vadd.s32 %v121, 1536
      %s132 = scalar_lea.vmem [#allocation17], 24
      %133 = vst [vmem:[%s132] sm:$0xff] %v131
      %v134 = vadd.s32 %v121, 2048
      %s135 = scalar_lea.vmem [#allocation17], 32
      %136 = vst [vmem:[%s135] sm:$0xff] %v134
      %137 = xla_tuple [#allocation16], [#allocation17]
      %138 = vst [vmem:[#allocation13] sm:$0xff] 2147483648
      %s139 = scalar_lea.vmem [#allocation13], 8
      %140 = vst [vmem:[%s139] sm:$0xff] 2147483648
      %s141 = scalar_lea.vmem [#allocation13], 16
      %142 = vst [vmem:[%s141] sm:$0xff] 2147483648
      %s143 = scalar_lea.vmem [#allocation13], 24
      %144 = vst [vmem:[%s143] sm:$0xff] 2147483648
      %145 = vst [vmem:[#allocation15] sm:$0xff] 2147483647
      %s146 = scalar_lea.vmem [#allocation15], 8
      %147 = vst [vmem:[%s146] sm:$0xff] 2147483647
      %s148 = scalar_lea.vmem [#allocation15], 16
      %149 = vst [vmem:[%s148] sm:$0xff] 2147483647
      %s150 = scalar_lea.vmem [#allocation15], 24
      %151 = vst [vmem:[%s150] sm:$0xff] 2147483647
      %152 = xla_tuple [#allocation13], [#allocation15]
      loop: start=0, step=1, limit=32
      $region33: #{custom-call} parent=2 // loop_pre_header
        _
      $region34: #{custom-call} parent=2 // loop_header
        %s154 = sphi 0, %s158
        %p155 = scmp.ge.s32.totalorder %s154, 32
      $region35: #{custom-call} parent=2 // loop_header_branch
        %157 = sbr.rel (%p155) target = $region39
      $region36: #{custom-call} parent=2 // loop_body
        %v159 = vld [vmem:[#allocation16] sm:$0xff]
        %v160 = vld [vmem:[#allocation17] sm:$0xff]
        %161 = xla_tuple %v159, %v160
        %s162 = scalar_lea.vmem [#allocation16], 8
        %v163 = vld [vmem:[%s162] sm:$0xff]
        %s164 = scalar_lea.vmem [#allocation17], 8
        %v165 = vld [vmem:[%s164] sm:$0xff]
        %166 = xla_tuple %v163, %v165
        %vm167 = vcmp.gt.s32.totalorder %v163, %v159
        %vm168 = vcmp.eq.s32.totalorder %v163, %v159
        %vm169 = vcmp.lt.s32.totalorder %v165, %v160
        %vm170 = vmand %vm168, %vm169
        %vm171 = vmor %vm167, %vm170
        %v172 = vsel %vm171, %v163, %v159
        %v173 = vsel %vm171, %v165, %v160
        %174 = xla_tuple %v172, %v173
        %s175 = scalar_lea.vmem [#allocation16], 16
        %v176 = vld [vmem:[%s175] sm:$0xff]
        %s177 = scalar_lea.vmem [#allocation17], 16
        %v178 = vld [vmem:[%s177] sm:$0xff]
        %179 = xla_tuple %v176, %v178
        %vm180 = vcmp.gt.s32.totalorder %v176, %v172
        %vm181 = vcmp.eq.s32.totalorder %v176, %v172
        %vm182 = vcmp.lt.s32.totalorder %v178, %v173
        %vm183 = vmand %vm181, %vm182
        %vm184 = vmor %vm180, %vm183
        %v185 = vsel %vm184, %v176, %v172
        %v186 = vsel %vm184, %v178, %v173
        %187 = xla_tuple %v185, %v186
        %s188 = scalar_lea.vmem [#allocation16], 24
        %v189 = vld [vmem:[%s188] sm:$0xff]
        %s190 = scalar_lea.vmem [#allocation17], 24
        %v191 = vld [vmem:[%s190] sm:$0xff]
        %192 = xla_tuple %v189, %v191
        %vm193 = vcmp.gt.s32.totalorder %v189, %v185
        %vm194 = vcmp.eq.s32.totalorder %v189, %v185
        %vm195 = vcmp.lt.s32.totalorder %v191, %v186
        %vm196 = vmand %vm194, %vm195
        %vm197 = vmor %vm193, %vm196
        %v198 = vsel %vm197, %v189, %v185
        %v199 = vsel %vm197, %v191, %v186
        %200 = xla_tuple %v198, %v199
        %s201 = scalar_lea.vmem [#allocation16], 32
        %v202 = vld [vmem:[%s201] sm:$0xff]
        %s203 = scalar_lea.vmem [#allocation17], 32
        %v204 = vld [vmem:[%s203] sm:$0xff]
        %205 = xla_tuple %v202, %v204
        %vm206 = vcmp.gt.s32.totalorder %v202, %v198
        %vm207 = vcmp.eq.s32.totalorder %v202, %v198
        %vm208 = vcmp.lt.s32.totalorder %v204, %v199
        %vm209 = vmand %vm207, %vm208
        %vm210 = vmor %vm206, %vm209
        %v211 = vsel %vm210, %v202, %v198
        %v212 = vsel %vm210, %v204, %v199
        %213 = xla_tuple %v211, %v212
        %v214 = vrot.slane %v211, 2
        %v215 = vrot.slane %v212, 2
        %216 = xla_tuple %v214, %v215
        %vm217 = vcmp.gt.s32.totalorder %v214, %v211
        %vm218 = vcmp.eq.s32.totalorder %v214, %v211
        %vm219 = vcmp.lt.s32.totalorder %v215, %v212
        %vm220 = vmand %vm218, %vm219
        %vm221 = vmor %vm217, %vm220
        %v222 = vsel %vm221, %v214, %v211
        %v223 = vsel %vm221, %v215, %v212
        %224 = xla_tuple %v222, %v223
        %v225 = vrot.slane %v222, 2
        %v226 = vrot.slane %v223, 2
        %227 = xla_tuple %v225, %v226
        %vm228 = vcmp.gt.s32.totalorder %v225, %v222
        %vm229 = vcmp.eq.s32.totalorder %v225, %v222
        %vm230 = vcmp.lt.s32.totalorder %v226, %v223
        %vm231 = vmand %vm229, %vm230
        %vm232 = vmor %vm228, %vm231
        %v233 = vsel %vm232, %v225, %v222
        %v234 = vsel %vm232, %v226, %v223
        %235 = xla_tuple %v233, %v234
        %v236 = vrot.slane %v233, 2
        %v237 = vrot.slane %v234, 2
        %238 = xla_tuple %v236, %v237
        %vm239 = vcmp.gt.s32.totalorder %v236, %v233
        %vm240 = vcmp.eq.s32.totalorder %v236, %v233
        %vm241 = vcmp.lt.s32.totalorder %v237, %v234
        %vm242 = vmand %vm240, %vm241
        %vm243 = vmor %vm239, %vm242
        %v244 = vsel %vm243, %v236, %v233
        %v245 = vsel %vm243, %v237, %v234
        %246 = xla_tuple %v244, %v245
        %247 = vxpose.xlu0.b32.start [1/16] %v244, 128
        %248 = vxpose.xlu0.b32.cont [2/16] %v244, 128
        %249 = vxpose.xlu0.b32.cont [3/16] %v244, 128
        %250 = vxpose.xlu0.b32.cont [4/16] %v244, 128
        %251 = vxpose.xlu0.b32.cont [5/16] %v244, 128
        %252 = vxpose.xlu0.b32.cont [6/16] %v244, 128
        %253 = vxpose.xlu0.b32.cont [7/16] %v244, 128
        %254 = vxpose.xlu0.b32.cont [8/16] %v244, 128
        %255 = vxpose.xlu0.b32.cont [9/16] %v244, 128
        %256 = vxpose.xlu0.b32.cont [10/16] %v244, 128
        %257 = vxpose.xlu0.b32.cont [11/16] %v244, 128
        %258 = vxpose.xlu0.b32.cont [12/16] %v244, 128
        %259 = vxpose.xlu0.b32.cont [13/16] %v244, 128
        %260 = vxpose.xlu0.b32.cont [14/16] %v244, 128
        %261 = vxpose.xlu0.b32.cont [15/16] %v244, 128
        %262 = vxpose.xlu0.b32.end [16/16] %v244, 128
        %v263 = vpop.trf.xlu0
        %v264 = vpop.trf.xlu0
        %v265 = vpop.trf.xlu0
        %v266 = vpop.trf.xlu0
        %v267 = vpop.trf.xlu0
        %v268 = vpop.trf.xlu0
        %v269 = vpop.trf.xlu0
        %v270 = vpop.trf.xlu0
        %v271 = vpop.trf.xlu0
        %v272 = vpop.trf.xlu0
        %v273 = vpop.trf.xlu0
        %v274 = vpop.trf.xlu0
        %v275 = vpop.trf.xlu0
        %v276 = vpop.trf.xlu0
        %v277 = vpop.trf.xlu0
        %v278 = vpop.trf.xlu0
        %279 = vxpose.xlu0.b32.start [1/16] %v245, 128
        %280 = vxpose.xlu0.b32.cont [2/16] %v245, 128
        %281 = vxpose.xlu0.b32.cont [3/16] %v245, 128
        %282 = vxpose.xlu0.b32.cont [4/16] %v245, 128
        %283 = vxpose.xlu0.b32.cont [5/16] %v245, 128
        %284 = vxpose.xlu0.b32.cont [6/16] %v245, 128
        %285 = vxpose.xlu0.b32.cont [7/16] %v245, 128
        %286 = vxpose.xlu0.b32.cont [8/16] %v245, 128
        %287 = vxpose.xlu0.b32.cont [9/16] %v245, 128
        %288 = vxpose.xlu0.b32.cont [10/16] %v245, 128
        %289 = vxpose.xlu0.b32.cont [11/16] %v245, 128
        %290 = vxpose.xlu0.b32.cont [12/16] %v245, 128
        %291 = vxpose.xlu0.b32.cont [13/16] %v245, 128
        %292 = vxpose.xlu0.b32.cont [14/16] %v245, 128
        %293 = vxpose.xlu0.b32.cont [15/16] %v245, 128
        %294 = vxpose.xlu0.b32.end [16/16] %v245, 128
        %v295 = vpop.trf.xlu0
        %v296 = vpop.trf.xlu0
        %v297 = vpop.trf.xlu0
        %v298 = vpop.trf.xlu0
        %v299 = vpop.trf.xlu0
        %v300 = vpop.trf.xlu0
        %v301 = vpop.trf.xlu0
        %v302 = vpop.trf.xlu0
        %v303 = vpop.trf.xlu0
        %v304 = vpop.trf.xlu0
        %v305 = vpop.trf.xlu0
        %v306 = vpop.trf.xlu0
        %v307 = vpop.trf.xlu0
        %v308 = vpop.trf.xlu0
        %v309 = vpop.trf.xlu0
        %v310 = vpop.trf.xlu0
        %311 = xla_tuple %v263, %v295
        %312 = xla_tuple %v264, %v296
        %vm313 = vcmp.gt.s32.totalorder %v264, %v263
        %vm314 = vcmp.eq.s32.totalorder %v264, %v263
        %vm315 = vcmp.lt.s32.totalorder %v296, %v295
        %vm316 = vmand %vm314, %vm315
        %vm317 = vmor %vm313, %vm316
        %v318 = vsel %vm317, %v264, %v263
        %v319 = vsel %vm317, %v296, %v295
        %320 = xla_tuple %v318, %v319
        %321 = xla_tuple %v265, %v297
        %vm322 = vcmp.gt.s32.totalorder %v265, %v318
        %vm323 = vcmp.eq.s32.totalorder %v265, %v318
        %vm324 = vcmp.lt.s32.totalorder %v297, %v319
        %vm325 = vmand %vm323, %vm324
        %vm326 = vmor %vm322, %vm325
        %v327 = vsel %vm326, %v265, %v318
        %v328 = vsel %vm326, %v297, %v319
        %329 = xla_tuple %v327, %v328
        %330 = xla_tuple %v266, %v298
        %vm331 = vcmp.gt.s32.totalorder %v266, %v327
        %vm332 = vcmp.eq.s32.totalorder %v266, %v327
        %vm333 = vcmp.lt.s32.totalorder %v298, %v328
        %vm334 = vmand %vm332, %vm333
        %vm335 = vmor %vm331, %vm334
        %v336 = vsel %vm335, %v266, %v327
        %v337 = vsel %vm335, %v298, %v328
        %338 = xla_tuple %v336, %v337
        %339 = xla_tuple %v267, %v299
        %vm340 = vcmp.gt.s32.totalorder %v267, %v336
        %vm341 = vcmp.eq.s32.totalorder %v267, %v336
        %vm342 = vcmp.lt.s32.totalorder %v299, %v337
        %vm343 = vmand %vm341, %vm342
        %vm344 = vmor %vm340, %vm343
        %v345 = vsel %vm344, %v267, %v336
        %v346 = vsel %vm344, %v299, %v337
        %347 = xla_tuple %v345, %v346
        %348 = xla_tuple %v268, %v300
        %vm349 = vcmp.gt.s32.totalorder %v268, %v345
        %vm350 = vcmp.eq.s32.totalorder %v268, %v345
        %vm351 = vcmp.lt.s32.totalorder %v300, %v346
        %vm352 = vmand %vm350, %vm351
        %vm353 = vmor %vm349, %vm352
        %v354 = vsel %vm353, %v268, %v345
        %v355 = vsel %vm353, %v300, %v346
        %356 = xla_tuple %v354, %v355
        %357 = xla_tuple %v269, %v301
        %vm358 = vcmp.gt.s32.totalorder %v269, %v354
        %vm359 = vcmp.eq.s32.totalorder %v269, %v354
        %vm360 = vcmp.lt.s32.totalorder %v301, %v355
        %vm361 = vmand %vm359, %vm360
        %vm362 = vmor %vm358, %vm361
        %v363 = vsel %vm362, %v269, %v354
        %v364 = vsel %vm362, %v301, %v355
        %365 = xla_tuple %v363, %v364
        %366 = xla_tuple %v270, %v302
        %vm367 = vcmp.gt.s32.totalorder %v270, %v363
        %vm368 = vcmp.eq.s32.totalorder %v270, %v363
        %vm369 = vcmp.lt.s32.totalorder %v302, %v364
        %vm370 = vmand %vm368, %vm369
        %vm371 = vmor %vm367, %vm370
        %v372 = vsel %vm371, %v270, %v363
        %v373 = vsel %vm371, %v302, %v364
        %374 = xla_tuple %v372, %v373
        %375 = xla_tuple %v271, %v303
        %vm376 = vcmp.gt.s32.totalorder %v271, %v372
        %vm377 = vcmp.eq.s32.totalorder %v271, %v372
        %vm378 = vcmp.lt.s32.totalorder %v303, %v373
        %vm379 = vmand %vm377, %vm378
        %vm380 = vmor %vm376, %vm379
        %v381 = vsel %vm380, %v271, %v372
        %v382 = vsel %vm380, %v303, %v373
        %383 = xla_tuple %v381, %v382
        %384 = xla_tuple %v272, %v304
        %vm385 = vcmp.gt.s32.totalorder %v272, %v381
        %vm386 = vcmp.eq.s32.totalorder %v272, %v381
        %vm387 = vcmp.lt.s32.totalorder %v304, %v382
        %vm388 = vmand %vm386, %vm387
        %vm389 = vmor %vm385, %vm388
        %v390 = vsel %vm389, %v272, %v381
        %v391 = vsel %vm389, %v304, %v382
        %392 = xla_tuple %v390, %v391
        %393 = xla_tuple %v273, %v305
        %vm394 = vcmp.gt.s32.totalorder %v273, %v390
        %vm395 = vcmp.eq.s32.totalorder %v273, %v390
        %vm396 = vcmp.lt.s32.totalorder %v305, %v391
        %vm397 = vmand %vm395, %vm396
        %vm398 = vmor %vm394, %vm397
        %v399 = vsel %vm398, %v273, %v390
        %v400 = vsel %vm398, %v305, %v391
        %401 = xla_tuple %v399, %v400
        %402 = xla_tuple %v274, %v306
        %vm403 = vcmp.gt.s32.totalorder %v274, %v399
        %vm404 = vcmp.eq.s32.totalorder %v274, %v399
        %vm405 = vcmp.lt.s32.totalorder %v306, %v400
        %vm406 = vmand %vm404, %vm405
        %vm407 = vmor %vm403, %vm406
        %v408 = vsel %vm407, %v274, %v399
        %v409 = vsel %vm407, %v306, %v400
        %410 = xla_tuple %v408, %v409
        %411 = xla_tuple %v275, %v307
        %vm412 = vcmp.gt.s32.totalorder %v275, %v408
        %vm413 = vcmp.eq.s32.totalorder %v275, %v408
        %vm414 = vcmp.lt.s32.totalorder %v307, %v409
        %vm415 = vmand %vm413, %vm414
        %vm416 = vmor %vm412, %vm415
        %v417 = vsel %vm416, %v275, %v408
        %v418 = vsel %vm416, %v307, %v409
        %419 = xla_tuple %v417, %v418
        %420 = xla_tuple %v276, %v308
        %vm421 = vcmp.gt.s32.totalorder %v276, %v417
        %vm422 = vcmp.eq.s32.totalorder %v276, %v417
        %vm423 = vcmp.lt.s32.totalorder %v308, %v418
        %vm424 = vmand %vm422, %vm423
        %vm425 = vmor %vm421, %vm424
        %v426 = vsel %vm425, %v276, %v417
        %v427 = vsel %vm425, %v308, %v418
        %428 = xla_tuple %v426, %v427
        %429 = xla_tuple %v277, %v309
        %vm430 = vcmp.gt.s32.totalorder %v277, %v426
        %vm431 = vcmp.eq.s32.totalorder %v277, %v426
        %vm432 = vcmp.lt.s32.totalorder %v309, %v427
        %vm433 = vmand %vm431, %vm432
        %vm434 = vmor %vm430, %vm433
        %v435 = vsel %vm434, %v277, %v426
        %v436 = vsel %vm434, %v309, %v427
        %437 = xla_tuple %v435, %v436
        %438 = xla_tuple %v278, %v310
        %vm439 = vcmp.gt.s32.totalorder %v278, %v435
        %vm440 = vcmp.eq.s32.totalorder %v278, %v435
        %vm441 = vcmp.lt.s32.totalorder %v310, %v436
        %vm442 = vmand %vm440, %vm441
        %vm443 = vmor %vm439, %vm442
        %v444 = vsel %vm443, %v278, %v435
        %v445 = vsel %vm443, %v310, %v436
        %446 = xla_tuple %v444, %v445
        %v447 = vrot.slane %v444, 1
        %v448 = vrot.slane %v445, 1
        %449 = xla_tuple %v447, %v448
        %vm450 = vcmp.gt.s32.totalorder %v447, %v444
        %vm451 = vcmp.eq.s32.totalorder %v447, %v444
        %vm452 = vcmp.lt.s32.totalorder %v448, %v445
        %vm453 = vmand %vm451, %vm452
        %vm454 = vmor %vm450, %vm453
        %v455 = vsel %vm454, %v447, %v444
        %v456 = vsel %vm454, %v448, %v445
        %457 = xla_tuple %v455, %v456
        %v458 = vrot.slane %v455, 1
        %v459 = vrot.slane %v456, 1
        %460 = xla_tuple %v458, %v459
        %vm461 = vcmp.gt.s32.totalorder %v458, %v455
        %vm462 = vcmp.eq.s32.totalorder %v458, %v455
        %vm463 = vcmp.lt.s32.totalorder %v459, %v456
        %vm464 = vmand %vm462, %vm463
        %vm465 = vmor %vm461, %vm464
        %v466 = vsel %vm465, %v458, %v455
        %v467 = vsel %vm465, %v459, %v456
        %468 = xla_tuple %v466, %v467
        %v469 = vrot.slane %v466, 1
        %v470 = vrot.slane %v467, 1
        %471 = xla_tuple %v469, %v470
        %vm472 = vcmp.gt.s32.totalorder %v469, %v466
        %vm473 = vcmp.eq.s32.totalorder %v469, %v466
        %vm474 = vcmp.lt.s32.totalorder %v470, %v467
        %vm475 = vmand %vm473, %vm474
        %vm476 = vmor %vm472, %vm475
        %v477 = vsel %vm476, %v469, %v466
        %v478 = vsel %vm476, %v470, %v467
        %479 = xla_tuple %v477, %v478
        %v480 = vrot.slane %v477, 1
        %v481 = vrot.slane %v478, 1
        %482 = xla_tuple %v480, %v481
        %vm483 = vcmp.gt.s32.totalorder %v480, %v477
        %vm484 = vcmp.eq.s32.totalorder %v480, %v477
        %vm485 = vcmp.lt.s32.totalorder %v481, %v478
        %vm486 = vmand %vm484, %vm485
        %vm487 = vmor %vm483, %vm486
        %v488 = vsel %vm487, %v480, %v477
        %v489 = vsel %vm487, %v481, %v478
        %490 = xla_tuple %v488, %v489
        %v491 = vrot.slane %v488, 1
        %v492 = vrot.slane %v489, 1
        %493 = xla_tuple %v491, %v492
        %vm494 = vcmp.gt.s32.totalorder %v491, %v488
        %vm495 = vcmp.eq.s32.totalorder %v491, %v488
        %vm496 = vcmp.lt.s32.totalorder %v492, %v489
        %vm497 = vmand %vm495, %vm496
        %vm498 = vmor %vm494, %vm497
        %v499 = vsel %vm498, %v491, %v488
        %v500 = vsel %vm498, %v492, %v489
        %501 = xla_tuple %v499, %v500
        %v502 = vrot.slane %v499, 1
        %v503 = vrot.slane %v500, 1
        %504 = xla_tuple %v502, %v503
        %vm505 = vcmp.gt.s32.totalorder %v502, %v499
        %vm506 = vcmp.eq.s32.totalorder %v502, %v499
        %vm507 = vcmp.lt.s32.totalorder %v503, %v500
        %vm508 = vmand %vm506, %vm507
        %vm509 = vmor %vm505, %vm508
        %v510 = vsel %vm509, %v502, %v499
        %v511 = vsel %vm509, %v503, %v500
        %512 = xla_tuple %v510, %v511
        %v513 = vrot.slane %v510, 1
        %v514 = vrot.slane %v511, 1
        %515 = xla_tuple %v513, %v514
        %vm516 = vcmp.gt.s32.totalorder %v513, %v510
        %vm517 = vcmp.eq.s32.totalorder %v513, %v510
        %vm518 = vcmp.lt.s32.totalorder %v514, %v511
        %vm519 = vmand %vm517, %vm518
        %vm520 = vmor %vm516, %vm519
        %v521 = vsel %vm520, %v513, %v510
        %v522 = vsel %vm520, %v514, %v511
        %523 = xla_tuple %v521, %v522
        %s524 = scalar_lea.vmem [#allocation13], %s154
        %525 = vst [vmem:[%s524] sm:$0x1] %v521
        %s526 = scalar_lea.vmem [#allocation15], %s154
        %527 = vst [vmem:[%s526] sm:$0x1] %v522
        %528 = xla_tuple %525, %527
        %529 = vxpose.xlu0.b32.start [1/16] %v522, 128
        %530 = vxpose.xlu0.b32.cont [2/16] 0.0, 128
        %531 = vxpose.xlu0.b32.cont [3/16] 0.0, 128
        %532 = vxpose.xlu0.b32.cont [4/16] 0.0, 128
        %533 = vxpose.xlu0.b32.cont [5/16] 0.0, 128
        %534 = vxpose.xlu0.b32.cont [6/16] 0.0, 128
        %535 = vxpose.xlu0.b32.cont [7/16] 0.0, 128
        %536 = vxpose.xlu0.b32.cont [8/16] 0.0, 128
        %537 = vxpose.xlu0.b32.cont [9/16] 0.0, 128
        %538 = vxpose.xlu0.b32.cont [10/16] 0.0, 128
        %539 = vxpose.xlu0.b32.cont [11/16] 0.0, 128
        %540 = vxpose.xlu0.b32.cont [12/16] 0.0, 128
        %541 = vxpose.xlu0.b32.cont [13/16] 0.0, 128
        %542 = vxpose.xlu0.b32.cont [14/16] 0.0, 128
        %543 = vxpose.xlu0.b32.cont [15/16] 0.0, 128
        %544 = vxpose.xlu0.b32.end [16/16] 0.0, 128
        %v545 = vpop.trf.xlu0
        %v546 = vpop.trf.xlu0
        %v547 = vpop.trf.xlu0
        %v548 = vpop.trf.xlu0
        %v549 = vpop.trf.xlu0
        %v550 = vpop.trf.xlu0
        %v551 = vpop.trf.xlu0
        %v552 = vpop.trf.xlu0
        %v553 = vpop.trf.xlu0
        %v554 = vpop.trf.xlu0
        %v555 = vpop.trf.xlu0
        %v556 = vpop.trf.xlu0
        %v557 = vpop.trf.xlu0
        %v558 = vpop.trf.xlu0
        %v559 = vpop.trf.xlu0
        %v560 = vpop.trf.xlu0
        %s561 = vtos %v545
        %s562 = sshrl.u32 %s561, 9
        %p563 = scmp.lt.s32.totalorder %s561, 0
        %s564 = ssub.s32 0, %s561
        %s565 = scalar_select %p563, %s564, %s561
        %s566 = sand.u32 %s565, 511
        %s567 = ssub.s32 0, %s566
        %s568 = scalar_select %p563, %s567, %s566
        %s569 = sshrl.u32 %s568, 7
        %s570 = smul.u32 %s569, 256
        %s571 = sand.u32 %s568, 127
        %s572 = sadd.s32 %s570, %s571
        %v573 = vlaneseq
        %v574 = vstv %s572
        %vm576 = vcmp.eq.s32.totalorder %v573, %v574
        %s577 = smul.addr %s562, 8
        %s578 = scalar_lea.vmem [#allocation16], %s577
        %579 = vst.msk [vmem:[%s578] sm:$0xff] %vm576, 2147483648
        %s580 = smul.addr %s562, 8
        %s581 = scalar_lea.vmem [#allocation17], %s580
        %582 = vst.msk [vmem:[%s581] sm:$0xff] %vm576, 2147483647
        %583 = xla_tuple %579, %582
        %v584 = vrot.slane %v545, 1
        %s585 = vtos %v584
        %s586 = sshrl.u32 %s585, 9
        %p587 = scmp.lt.s32.totalorder %s585, 0
        %s588 = ssub.s32 0, %s585
        %s589 = scalar_select %p587, %s588, %s585
        %s590 = sand.u32 %s589, 511
        %s591 = ssub.s32 0, %s590
        %s592 = scalar_select %p587, %s591, %s590
        %s593 = sshrl.u32 %s592, 7
        %s594 = smul.u32 %s593, 256
        %s595 = sand.u32 %s592, 127
        %s596 = sadd.s32 %s594, %s595
        %v597 = vlaneseq
        %v598 = vstv %s596
        %v599 = vadd.s32 %v598, 128
        %vm600 = vcmp.eq.s32.totalorder %v597, %v599
        %s601 = smul.addr %s586, 8
        %s602 = scalar_lea.vmem [#allocation16], %s601
        %603 = vst.msk [vmem:[%s602] sm:$0xff] %vm600, 2147483648
        %s604 = smul.addr %s586, 8
        %s605 = scalar_lea.vmem [#allocation17], %s604
        %606 = vst.msk [vmem:[%s605] sm:$0xff] %vm600, 2147483647
        %607 = xla_tuple %603, %606
        %v608 = vrot.slane %v584, 1
      $region37: #{custom-call} parent=2 // loop_footer
        %s158 = sadd.s32 1, %s154
      $region38: #{custom-call} parent=2 // loop_footer_branch
        %153 = sbr.rel target = $region34
      $region39: #{custom-call} parent=2 // loop_exit
        _
      %s609 = scalar_lea.vmem [#allocation13], 24
      %s610 = scalar_lea.vmem [#allocation13], 7
      %v611 = vld [vmem:[%s610] ss:$-1 sm:$0xff]
      %s612 = scalar_lea.vmem %s609, 7 [#allocation13]
      %v613 = vld [vmem:[%s612] ss:$-1 sm:$0xff]
      %614 = vst [vmem:[#allocation13] sm:$0xff] %v613
      %615 = vst [vmem:[%s609] sm:$0xff] %v611
      %s616 = scalar_lea.vmem [#allocation15], 24
      %s617 = scalar_lea.vmem [#allocation15], 7
      %v618 = vld [vmem:[%s617] ss:$-1 sm:$0xff]
      %s619 = scalar_lea.vmem %s616, 7 [#allocation15]
      %v620 = vld [vmem:[%s619] ss:$-1 sm:$0xff]
      %621 = vst [vmem:[#allocation15] sm:$0xff] %v620
      %622 = vst [vmem:[%s616] sm:$0xff] %v618
      %623 = xla_tuple %615, %622
      %s624 = scalar_lea.vmem [#allocation13], 8
      %s625 = scalar_lea.vmem [#allocation13], 16
      %s626 = scalar_lea.vmem %s624, 7 [#allocation13]
      %v627 = vld [vmem:[%s626] ss:$-1 sm:$0xff]
      %s628 = scalar_lea.vmem %s625, 7 [#allocation13]
      %v629 = vld [vmem:[%s628] ss:$-1 sm:$0xff]
      %630 = vst [vmem:[%s624] sm:$0xff] %v629
      %631 = vst [vmem:[%s625] sm:$0xff] %v627
      %s632 = scalar_lea.vmem [#allocation15], 8
      %s633 = scalar_lea.vmem [#allocation15], 16
      %s634 = scalar_lea.vmem %s632, 7 [#allocation15]
      %v635 = vld [vmem:[%s634] ss:$-1 sm:$0xff]
      %s636 = scalar_lea.vmem %s633, 7 [#allocation15]
      %v637 = vld [vmem:[%s636] ss:$-1 sm:$0xff]
      %638 = vst [vmem:[%s632] sm:$0xff] %v637
      %639 = vst [vmem:[%s633] sm:$0xff] %v635
      %640 = xla_tuple %631, %639
      %v641 = vld [vmem:[#allocation12] sm:$0xff]
      %v642 = vld [vmem:[#allocation14] sm:$0xff]
      %643 = xla_tuple %v641, %v642
      %v644 = vld [vmem:[#allocation13] sm:$0xff]
      %v645 = vld [vmem:[#allocation15] sm:$0xff]
      %646 = xla_tuple %v644, %v645
      %vm647 = vcmp.gt.s32.totalorder %v641, %v644
      %vm648 = vcmp.eq.s32.totalorder %v641, %v644
      %vm649 = vcmp.lt.s32.totalorder %v642, %v645
      %vm650 = vmand %vm648, %vm649
      %vm651 = vmor %vm647, %vm650
      %v652 = vsel %vm651, %v641, %v644
      %653 = vst [vmem:[#allocation12] sm:$0xff] %v652
      %v654 = vsel %vm651, %v644, %v641
      %655 = vst [vmem:[#allocation13] sm:$0xff] %v654
      %v656 = vsel %vm651, %v642, %v645
      %657 = vst [vmem:[#allocation14] sm:$0xff] %v656
      %v658 = vsel %vm651, %v645, %v642
      %659 = vst [vmem:[#allocation15] sm:$0xff] %v658
      %660 = xla_tuple %655, %659
      %s661 = scalar_lea.vmem [#allocation12], 8
      %v662 = vld [vmem:[%s661] sm:$0xff]
      %s663 = scalar_lea.vmem [#allocation14], 8
      %v664 = vld [vmem:[%s663] sm:$0xff]
      %665 = xla_tuple %v662, %v664
      %s666 = scalar_lea.vmem [#allocation13], 8
      %v667 = vld [vmem:[%s666] sm:$0xff]
      %s668 = scalar_lea.vmem [#allocation15], 8
      %v669 = vld [vmem:[%s668] sm:$0xff]
      %670 = xla_tuple %v667, %v669
      %vm671 = vcmp.gt.s32.totalorder %v662, %v667
      %vm672 = vcmp.eq.s32.totalorder %v662, %v667
      %vm673 = vcmp.lt.s32.totalorder %v664, %v669
      %vm674 = vmand %vm672, %vm673
      %vm675 = vmor %vm671, %vm674
      %s676 = scalar_lea.vmem [#allocation12], 8
      %v677 = vsel %vm675, %v662, %v667
      %678 = vst [vmem:[%s676] sm:$0xff] %v677
      %s679 = scalar_lea.vmem [#allocation13], 8
      %v680 = vsel %vm675, %v667, %v662
      %681 = vst [vmem:[%s679] sm:$0xff] %v680
      %s682 = scalar_lea.vmem [#allocation14], 8
      %v683 = vsel %vm675, %v664, %v669
      %684 = vst [vmem:[%s682] sm:$0xff] %v683
      %s685 = scalar_lea.vmem [#allocation15], 8
      %v686 = vsel %vm675, %v669, %v664
      %687 = vst [vmem:[%s685] sm:$0xff] %v686
      %688 = xla_tuple %681, %687
      %s689 = scalar_lea.vmem [#allocation12], 16
      %v690 = vld [vmem:[%s689] sm:$0xff]
      %s691 = scalar_lea.vmem [#allocation14], 16
      %v692 = vld [vmem:[%s691] sm:$0xff]
      %693 = xla_tuple %v690, %v692
      %s694 = scalar_lea.vmem [#allocation13], 16
      %v695 = vld [vmem:[%s694] sm:$0xff]
      %s696 = scalar_lea.vmem [#allocation15], 16
      %v697 = vld [vmem:[%s696] sm:$0xff]
      %698 = xla_tuple %v695, %v697
      %vm699 = vcmp.gt.s32.totalorder %v690, %v695
      %vm700 = vcmp.eq.s32.totalorder %v690, %v695
      %vm701 = vcmp.lt.s32.totalorder %v692, %v697
      %vm702 = vmand %vm700, %vm701
      %vm703 = vmor %vm699, %vm702
      %s704 = scalar_lea.vmem [#allocation12], 16
      %v705 = vsel %vm703, %v690, %v695
      %706 = vst [vmem:[%s704] sm:$0xff] %v705
      %s707 = scalar_lea.vmem [#allocation13], 16
      %v708 = vsel %vm703, %v695, %v690
      %709 = vst [vmem:[%s707] sm:$0xff] %v708
      %s710 = scalar_lea.vmem [#allocation14], 16
      %v711 = vsel %vm703, %v692, %v697
      %712 = vst [vmem:[%s710] sm:$0xff] %v711
      %s713 = scalar_lea.vmem [#allocation15], 16
      %v714 = vsel %vm703, %v697, %v692
      %715 = vst [vmem:[%s713] sm:$0xff] %v714
      %716 = xla_tuple %709, %715
      %s717 = scalar_lea.vmem [#allocation12], 24
      %v718 = vld [vmem:[%s717] sm:$0xff]
      %s719 = scalar_lea.vmem [#allocation14], 24
      %v720 = vld [vmem:[%s719] sm:$0xff]
      %721 = xla_tuple %v718, %v720
      %s722 = scalar_lea.vmem [#allocation13], 24
      %v723 = vld [vmem:[%s722] sm:$0xff]
      %s724 = scalar_lea.vmem [#allocation15], 24
      %v725 = vld [vmem:[%s724] sm:$0xff]
      %726 = xla_tuple %v723, %v725
      %vm727 = vcmp.gt.s32.totalorder %v718, %v723
      %vm728 = vcmp.eq.s32.totalorder %v718, %v723
      %vm729 = vcmp.lt.s32.totalorder %v720, %v725
      %vm730 = vmand %vm728, %vm729
      %vm731 = vmor %vm727, %vm730
      %s732 = scalar_lea.vmem [#allocation12], 24
      %v733 = vsel %vm731, %v718, %v723
      %734 = vst [vmem:[%s732] sm:$0xff] %v733
      %s735 = scalar_lea.vmem [#allocation13], 24
      %v736 = vsel %vm731, %v723, %v718
      %737 = vst [vmem:[%s735] sm:$0xff] %v736
      %s738 = scalar_lea.vmem [#allocation14], 24
      %v739 = vsel %vm731, %v720, %v725
      %740 = vst [vmem:[%s738] sm:$0xff] %v739
      %s741 = scalar_lea.vmem [#allocation15], 24
      %v742 = vsel %vm731, %v725, %v720
      %743 = vst [vmem:[%s741] sm:$0xff] %v742
      %744 = xla_tuple %737, %743
      %s745 = scalar_lea.vmem [#allocation12], 16
      %s746 = scalar_lea.vmem [#allocation14], 16
      %747 = xla_tuple %s745, %s746
      %v748 = vld [vmem:[#allocation12] sm:$0xff]
      %v749 = vld [vmem:[#allocation14] sm:$0xff]
      %750 = xla_tuple %v748, %v749
      %v751 = vld [vmem:[%s745] sm:$0xff]
      %v752 = vld [vmem:[%s746] sm:$0xff]
      %753 = xla_tuple %v751, %v752
      %vm754 = vcmp.gt.s32.totalorder %v748, %v751
      %vm755 = vcmp.eq.s32.totalorder %v748, %v751
      %vm756 = vcmp.lt.s32.totalorder %v749, %v752
      %vm757 = vmand %vm755, %vm756
      %vm758 = vmor %vm754, %vm757
      %v759 = vsel %vm758, %v748, %v751
      %760 = vst [vmem:[#allocation12] sm:$0xff] %v759
      %v761 = vsel %vm758, %v751, %v748
      %762 = vst [vmem:[%s745] sm:$0xff] %v761
      %v763 = vsel %vm758, %v749, %v752
      %764 = vst [vmem:[#allocation14] sm:$0xff] %v763
      %v765 = vsel %vm758, %v752, %v749
      %766 = vst [vmem:[%s746] sm:$0xff] %v765
      %767 = xla_tuple %762, %766
      %s768 = scalar_lea.vmem [#allocation12], 8
      %v769 = vld [vmem:[%s768] sm:$0xff]
      %s770 = scalar_lea.vmem [#allocation14], 8
      %v771 = vld [vmem:[%s770] sm:$0xff]
      %772 = xla_tuple %v769, %v771
      %s773 = scalar_lea.vmem %s745, 8 [#allocation12]
      %v774 = vld [vmem:[%s773] sm:$0xff]
      %s775 = scalar_lea.vmem %s746, 8 [#allocation14]
      %v776 = vld [vmem:[%s775] sm:$0xff]
      %777 = xla_tuple %v774, %v776
      %vm778 = vcmp.gt.s32.totalorder %v769, %v774
      %vm779 = vcmp.eq.s32.totalorder %v769, %v774
      %vm780 = vcmp.lt.s32.totalorder %v771, %v776
      %vm781 = vmand %vm779, %vm780
      %vm782 = vmor %vm778, %vm781
      %s783 = scalar_lea.vmem [#allocation12], 8
      %v784 = vsel %vm782, %v769, %v774
      %785 = vst [vmem:[%s783] sm:$0xff] %v784
      %s786 = scalar_lea.vmem %s745, 8 [#allocation12]
      %v787 = vsel %vm782, %v774, %v769
      %788 = vst [vmem:[%s786] sm:$0xff] %v787
      %s789 = scalar_lea.vmem [#allocation14], 8
      %v790 = vsel %vm782, %v771, %v776
      %791 = vst [vmem:[%s789] sm:$0xff] %v790
      %s792 = scalar_lea.vmem %s746, 8 [#allocation14]
      %v793 = vsel %vm782, %v776, %v771
      %794 = vst [vmem:[%s792] sm:$0xff] %v793
      %795 = xla_tuple %788, %794
      %s796 = scalar_lea.vmem [#allocation12], 8
      %s797 = scalar_lea.vmem [#allocation14], 8
      %798 = xla_tuple %s796, %s797
      %v799 = vld [vmem:[#allocation12] sm:$0xff]
      %v800 = vld [vmem:[#allocation14] sm:$0xff]
      %801 = xla_tuple %v799, %v800
      %v802 = vld [vmem:[%s796] sm:$0xff]
      %v803 = vld [vmem:[%s797] sm:$0xff]
      %804 = xla_tuple %v802, %v803
      %vm805 = vcmp.gt.s32.totalorder %v799, %v802
      %vm806 = vcmp.eq.s32.totalorder %v799, %v802
      %vm807 = vcmp.lt.s32.totalorder %v800, %v803
      %vm808 = vmand %vm806, %vm807
      %vm809 = vmor %vm805, %vm808
      %v810 = vsel %vm809, %v799, %v802
      %811 = vst [vmem:[#allocation12] sm:$0xff] %v810
      %v812 = vsel %vm809, %v802, %v799
      %813 = vst [vmem:[%s796] sm:$0xff] %v812
      %v814 = vsel %vm809, %v800, %v803
      %815 = vst [vmem:[#allocation14] sm:$0xff] %v814
      %v816 = vsel %vm809, %v803, %v800
      %817 = vst [vmem:[%s797] sm:$0xff] %v816
      %818 = xla_tuple %813, %817
      %819 = xla_tuple [#allocation12], [#allocation14]
      %v820 = vld [vmem:[#allocation12] sm:$0xff]
      %v821 = vld [vmem:[#allocation14] sm:$0xff]
      %822 = xla_tuple %v820, %v821
      %v824 = vunpack.c.l.s4 839939668
      %v825 = vunpack.c.0.s8 %v824
      %v826 = vlaneseq
      %v827 = vshrl.u32 %v826, 7
      %v828 = vsub.s32 %v825, %v827
      %v829 = vrot.slane %v820, %v828
      %v831 = vunpack.c.l.s4 839939668
      %v832 = vunpack.c.0.s8 %v831
      %v833 = vlaneseq
      %v834 = vshrl.u32 %v833, 7
      %v835 = vsub.s32 %v832, %v834
      %v836 = vrot.slane %v821, %v835
      %837 = xla_tuple %v829, %v836
      %vm838 = vcmp.gt.s32.totalorder %v820, %v829
      %vm839 = vcmp.eq.s32.totalorder %v820, %v829
      %vm840 = vcmp.lt.s32.totalorder %v821, %v836
      %vm841 = vmand %vm839, %vm840
      %vm842 = vmor %vm838, %vm841
      %v843 = vlaneseq
      %v844 = vshrl.u32 %v843, 7
      %v845 = vand.u32 %v844, 4
      %vm846 = vcmp.ne.s32.totalorder %v845, 0
      %vm847 = vmxor %vm842, %vm846
      %v848 = vsel %vm847, %v820, %v829
      %v849 = vsel %vm847, %v821, %v836
      %850 = xla_tuple %v848, %v849
      %v852 = vunpack.c.l.s4 1417023538
      %v853 = vunpack.c.0.s8 %v852
      %v854 = vlaneseq
      %v855 = vshrl.u32 %v854, 7
      %v856 = vsub.s32 %v853, %v855
      %v857 = vrot.slane %v848, %v856
      %v859 = vunpack.c.l.s4 1417023538
      %v860 = vunpack.c.0.s8 %v859
      %v861 = vlaneseq
      %v862 = vshrl.u32 %v861, 7
      %v863 = vsub.s32 %v860, %v862
      %v864 = vrot.slane %v849, %v863
      %865 = xla_tuple %v857, %v864
      %vm866 = vcmp.gt.s32.totalorder %v848, %v857
      %vm867 = vcmp.eq.s32.totalorder %v848, %v857
      %vm868 = vcmp.lt.s32.totalorder %v849, %v864
      %vm869 = vmand %vm867, %vm868
      %vm870 = vmor %vm866, %vm869
      %v871 = vlaneseq
      %v872 = vshrl.u32 %v871, 7
      %v873 = vand.u32 %v872, 2
      %vm874 = vcmp.ne.s32.totalorder %v873, 0
      %vm875 = vmxor %vm870, %vm874
      %v876 = vsel %vm875, %v848, %v857
      %v877 = vsel %vm875, %v849, %v864
      %878 = xla_tuple %v876, %v877
      %v880 = vunpack.c.l.s4 1732584193
      %v881 = vunpack.c.0.s8 %v880
      %v882 = vlaneseq
      %v883 = vshrl.u32 %v882, 7
      %v884 = vsub.s32 %v881, %v883
      %v885 = vrot.slane %v876, %v884
      %v887 = vunpack.c.l.s4 1732584193
      %v888 = vunpack.c.0.s8 %v887
      %v889 = vlaneseq
      %v890 = vshrl.u32 %v889, 7
      %v891 = vsub.s32 %v888, %v890
      %v892 = vrot.slane %v877, %v891
      %893 = xla_tuple %v885, %v892
      %vm894 = vcmp.gt.s32.totalorder %v876, %v885
      %vm895 = vcmp.eq.s32.totalorder %v876, %v885
      %vm896 = vcmp.lt.s32.totalorder %v877, %v892
      %vm897 = vmand %vm895, %vm896
      %vm898 = vmor %vm894, %vm897
      %v899 = vlaneseq
      %v900 = vshrl.u32 %v899, 7
      %v901 = vand.u32 %v900, 1
      %vm902 = vcmp.ne.s32.totalorder %v901, 0
      %vm903 = vmxor %vm898, %vm902
      %v904 = vsel %vm903, %v876, %v885
      %v905 = vsel %vm903, %v877, %v892
      %906 = xla_tuple %v904, %v905
      %907 = vst [vmem:[#allocation12] sm:$0xff] %v904
      %908 = vst [vmem:[#allocation14] sm:$0xff] %v905
      %909 = xla_tuple %907, %908
      %v910 = vld [vmem:[#allocation12] sm:$0xff]
      %v911 = vld [vmem:[#allocation14] sm:$0xff]
      %912 = xla_tuple %v910, %v911
      %v914 = vunpack.c.l.s4 839939668
      %v915 = vunpack.c.0.s8 %v914
      %v916 = vlaneseq
      %v917 = vshrl.u32 %v916, 7
      %v918 = vsub.s32 %v915, %v917
      %v919 = vrot.slane %v910, %v918
      %v921 = vunpack.c.l.s4 839939668
      %v922 = vunpack.c.0.s8 %v921
      %v923 = vlaneseq
      %v924 = vshrl.u32 %v923, 7
      %v925 = vsub.s32 %v922, %v924
      %v926 = vrot.slane %v911, %v925
      %927 = xla_tuple %v919, %v926
      %vm928 = vcmp.gt.s32.totalorder %v910, %v919
      %vm929 = vcmp.eq.s32.totalorder %v910, %v919
      %vm930 = vcmp.lt.s32.totalorder %v911, %v926
      %vm931 = vmand %vm929, %vm930
      %vm932 = vmor %vm928, %vm931
      %v933 = vlaneseq
      %v934 = vshrl.u32 %v933, 7
      %v935 = vand.u32 %v934, 4
      %vm936 = vcmp.ne.s32.totalorder %v935, 0
      %vm937 = vmxor %vm932, %vm936
      %v938 = vsel %vm937, %v910, %v919
      %v939 = vsel %vm937, %v911, %v926
      %940 = xla_tuple %v938, %v939
      %v942 = vunpack.c.l.s4 1417023538
      %v943 = vunpack.c.0.s8 %v942
      %v944 = vlaneseq
      %v945 = vshrl.u32 %v944, 7
      %v946 = vsub.s32 %v943, %v945
      %v947 = vrot.slane %v938, %v946
      %v949 = vunpack.c.l.s4 1417023538
      %v950 = vunpack.c.0.s8 %v949
      %v951 = vlaneseq
      %v952 = vshrl.u32 %v951, 7
      %v953 = vsub.s32 %v950, %v952
      %v954 = vrot.slane %v939, %v953
      %955 = xla_tuple %v947, %v954
      %vm956 = vcmp.gt.s32.totalorder %v938, %v947
      %vm957 = vcmp.eq.s32.totalorder %v938, %v947
      %vm958 = vcmp.lt.s32.totalorder %v939, %v954
      %vm959 = vmand %vm957, %vm958
      %vm960 = vmor %vm956, %vm959
      %v961 = vlaneseq
      %v962 = vshrl.u32 %v961, 7
      %v963 = vand.u32 %v962, 2
      %vm964 = vcmp.ne.s32.totalorder %v963, 0
      %vm965 = vmxor %vm960, %vm964
      %v966 = vsel %vm965, %v938, %v947
      %v967 = vsel %vm965, %v939, %v954
      %968 = xla_tuple %v966, %v967
      %v970 = vunpack.c.l.s4 1732584193
      %v971 = vunpack.c.0.s8 %v970
      %v972 = vlaneseq
      %v973 = vshrl.u32 %v972, 7
      %v974 = vsub.s32 %v971, %v973
      %v975 = vrot.slane %v966, %v974
      %v977 = vunpack.c.l.s4 1732584193
      %v978 = vunpack.c.0.s8 %v977
      %v979 = vlaneseq
      %v980 = vshrl.u32 %v979, 7
      %v981 = vsub.s32 %v978, %v980
      %v982 = vrot.slane %v967, %v981
      %983 = xla_tuple %v975, %v982
      %vm984 = vcmp.gt.s32.totalorder %v966, %v975
      %vm985 = vcmp.eq.s32.totalorder %v966, %v975
      %vm986 = vcmp.lt.s32.totalorder %v967, %v982
      %vm987 = vmand %vm985, %vm986
      %vm988 = vmor %vm984, %vm987
      %v989 = vlaneseq
      %v990 = vshrl.u32 %v989, 7
      %v991 = vand.u32 %v990, 1
      %vm992 = vcmp.ne.s32.totalorder %v991, 0
      %vm993 = vmxor %vm988, %vm992
      %v994 = vsel %vm993, %v966, %v975
      %v995 = vsel %vm993, %v967, %v982
      %996 = xla_tuple %v994, %v995
      %997 = vst [vmem:[#allocation12] sm:$0xff] %v994
      %998 = vst [vmem:[#allocation14] sm:$0xff] %v995
      %999 = xla_tuple %997, %998
      %1000 = xla_tuple %s796, %s797
      %v1001 = vld [vmem:[%s796] sm:$0xff]
      %v1002 = vld [vmem:[%s797] sm:$0xff]
      %1003 = xla_tuple %v1001, %v1002
      %v1005 = vunpack.c.l.s4 839939668
      %v1006 = vunpack.c.0.s8 %v1005
      %v1007 = vlaneseq
      %v1008 = vshrl.u32 %v1007, 7
      %v1009 = vsub.s32 %v1006, %v1008
      %v1010 = vrot.slane %v1001, %v1009
      %v1012 = vunpack.c.l.s4 839939668
      %v1013 = vunpack.c.0.s8 %v1012
      %v1014 = vlaneseq
      %v1015 = vshrl.u32 %v1014, 7
      %v1016 = vsub.s32 %v1013, %v1015
      %v1017 = vrot.slane %v1002, %v1016
      %1018 = xla_tuple %v1010, %v1017
      %vm1019 = vcmp.gt.s32.totalorder %v1001, %v1010
      %vm1020 = vcmp.eq.s32.totalorder %v1001, %v1010
      %vm1021 = vcmp.lt.s32.totalorder %v1002, %v1017
      %vm1022 = vmand %vm1020, %vm1021
      %vm1023 = vmor %vm1019, %vm1022
      %v1024 = vlaneseq
      %v1025 = vshrl.u32 %v1024, 7
      %v1026 = vand.u32 %v1025, 4
      %vm1027 = vcmp.ne.s32.totalorder %v1026, 0
      %vm1028 = vmxor %vm1023, %vm1027
      %v1029 = vsel %vm1028, %v1001, %v1010
      %v1030 = vsel %vm1028, %v1002, %v1017
      %1031 = xla_tuple %v1029, %v1030
      %v1033 = vunpack.c.l.s4 1417023538
      %v1034 = vunpack.c.0.s8 %v1033
      %v1035 = vlaneseq
      %v1036 = vshrl.u32 %v1035, 7
      %v1037 = vsub.s32 %v1034, %v1036
      %v1038 = vrot.slane %v1029, %v1037
      %v1040 = vunpack.c.l.s4 1417023538
      %v1041 = vunpack.c.0.s8 %v1040
      %v1042 = vlaneseq
      %v1043 = vshrl.u32 %v1042, 7
      %v1044 = vsub.s32 %v1041, %v1043
      %v1045 = vrot.slane %v1030, %v1044
      %1046 = xla_tuple %v1038, %v1045
      %vm1047 = vcmp.gt.s32.totalorder %v1029, %v1038
      %vm1048 = vcmp.eq.s32.totalorder %v1029, %v1038
      %vm1049 = vcmp.lt.s32.totalorder %v1030, %v1045
      %vm1050 = vmand %vm1048, %vm1049
      %vm1051 = vmor %vm1047, %vm1050
      %v1052 = vlaneseq
      %v1053 = vshrl.u32 %v1052, 7
      %v1054 = vand.u32 %v1053, 2
      %vm1055 = vcmp.ne.s32.totalorder %v1054, 0
      %vm1056 = vmxor %vm1051, %vm1055
      %v1057 = vsel %vm1056, %v1029, %v1038
      %v1058 = vsel %vm1056, %v1030, %v1045
      %1059 = xla_tuple %v1057, %v1058
      %v1061 = vunpack.c.l.s4 1732584193
      %v1062 = vunpack.c.0.s8 %v1061
      %v1063 = vlaneseq
      %v1064 = vshrl.u32 %v1063, 7
      %v1065 = vsub.s32 %v1062, %v1064
      %v1066 = vrot.slane %v1057, %v1065
      %v1068 = vunpack.c.l.s4 1732584193
      %v1069 = vunpack.c.0.s8 %v1068
      %v1070 = vlaneseq
      %v1071 = vshrl.u32 %v1070, 7
      %v1072 = vsub.s32 %v1069, %v1071
      %v1073 = vrot.slane %v1058, %v1072
      %1074 = xla_tuple %v1066, %v1073
      %vm1075 = vcmp.gt.s32.totalorder %v1057, %v1066
      %vm1076 = vcmp.eq.s32.totalorder %v1057, %v1066
      %vm1077 = vcmp.lt.s32.totalorder %v1058, %v1073
      %vm1078 = vmand %vm1076, %vm1077
      %vm1079 = vmor %vm1075, %vm1078
      %v1080 = vlaneseq
      %v1081 = vshrl.u32 %v1080, 7
      %v1082 = vand.u32 %v1081, 1
      %vm1083 = vcmp.ne.s32.totalorder %v1082, 0
      %vm1084 = vmxor %vm1079, %vm1083
      %v1085 = vsel %vm1084, %v1057, %v1066
      %v1086 = vsel %vm1084, %v1058, %v1073
      %1087 = xla_tuple %v1085, %v1086
      %1088 = vst [vmem:[%s796] sm:$0xff] %v1085
      %1089 = vst [vmem:[%s797] sm:$0xff] %v1086
      %1090 = xla_tuple %1088, %1089
      %v1091 = vld [vmem:[%s796] sm:$0xff]
      %v1092 = vld [vmem:[%s797] sm:$0xff]
      %1093 = xla_tuple %v1091, %v1092
      %v1095 = vunpack.c.l.s4 839939668
      %v1096 = vunpack.c.0.s8 %v1095
      %v1097 = vlaneseq
      %v1098 = vshrl.u32 %v1097, 7
      %v1099 = vsub.s32 %v1096, %v1098
      %v1100 = vrot.slane %v1091, %v1099
      %v1102 = vunpack.c.l.s4 839939668
      %v1103 = vunpack.c.0.s8 %v1102
      %v1104 = vlaneseq
      %v1105 = vshrl.u32 %v1104, 7
      %v1106 = vsub.s32 %v1103, %v1105
      %v1107 = vrot.slane %v1092, %v1106
      %1108 = xla_tuple %v1100, %v1107
      %vm1109 = vcmp.gt.s32.totalorder %v1091, %v1100
      %vm1110 = vcmp.eq.s32.totalorder %v1091, %v1100
      %vm1111 = vcmp.lt.s32.totalorder %v1092, %v1107
      %vm1112 = vmand %vm1110, %vm1111
      %vm1113 = vmor %vm1109, %vm1112
      %v1114 = vlaneseq
      %v1115 = vshrl.u32 %v1114, 7
      %v1116 = vand.u32 %v1115, 4
      %vm1117 = vcmp.ne.s32.totalorder %v1116, 0
      %vm1118 = vmxor %vm1113, %vm1117
      %v1119 = vsel %vm1118, %v1091, %v1100
      %v1120 = vsel %vm1118, %v1092, %v1107
      %1121 = xla_tuple %v1119, %v1120
      %v1123 = vunpack.c.l.s4 1417023538
      %v1124 = vunpack.c.0.s8 %v1123
      %v1125 = vlaneseq
      %v1126 = vshrl.u32 %v1125, 7
      %v1127 = vsub.s32 %v1124, %v1126
      %v1128 = vrot.slane %v1119, %v1127
      %v1130 = vunpack.c.l.s4 1417023538
      %v1131 = vunpack.c.0.s8 %v1130
      %v1132 = vlaneseq
      %v1133 = vshrl.u32 %v1132, 7
      %v1134 = vsub.s32 %v1131, %v1133
      %v1135 = vrot.slane %v1120, %v1134
      %1136 = xla_tuple %v1128, %v1135
      %vm1137 = vcmp.gt.s32.totalorder %v1119, %v1128
      %vm1138 = vcmp.eq.s32.totalorder %v1119, %v1128
      %vm1139 = vcmp.lt.s32.totalorder %v1120, %v1135
      %vm1140 = vmand %vm1138, %vm1139
      %vm1141 = vmor %vm1137, %vm1140
      %v1142 = vlaneseq
      %v1143 = vshrl.u32 %v1142, 7
      %v1144 = vand.u32 %v1143, 2
      %vm1145 = vcmp.ne.s32.totalorder %v1144, 0
      %vm1146 = vmxor %vm1141, %vm1145
      %v1147 = vsel %vm1146, %v1119, %v1128
      %v1148 = vsel %vm1146, %v1120, %v1135
      %1149 = xla_tuple %v1147, %v1148
      %v1151 = vunpack.c.l.s4 1732584193
      %v1152 = vunpack.c.0.s8 %v1151
      %v1153 = vlaneseq
      %v1154 = vshrl.u32 %v1153, 7
      %v1155 = vsub.s32 %v1152, %v1154
      %v1156 = vrot.slane %v1147, %v1155
      %v1158 = vunpack.c.l.s4 1732584193
      %v1159 = vunpack.c.0.s8 %v1158
      %v1160 = vlaneseq
      %v1161 = vshrl.u32 %v1160, 7
      %v1162 = vsub.s32 %v1159, %v1161
      %v1163 = vrot.slane %v1148, %v1162
      %1164 = xla_tuple %v1156, %v1163
      %vm1165 = vcmp.gt.s32.totalorder %v1147, %v1156
      %vm1166 = vcmp.eq.s32.totalorder %v1147, %v1156
      %vm1167 = vcmp.lt.s32.totalorder %v1148, %v1163
      %vm1168 = vmand %vm1166, %vm1167
      %vm1169 = vmor %vm1165, %vm1168
      %v1170 = vlaneseq
      %v1171 = vshrl.u32 %v1170, 7
      %v1172 = vand.u32 %v1171, 1
      %vm1173 = vcmp.ne.s32.totalorder %v1172, 0
      %vm1174 = vmxor %vm1169, %vm1173
      %v1175 = vsel %vm1174, %v1147, %v1156
      %v1176 = vsel %vm1174, %v1148, %v1163
      %1177 = xla_tuple %v1175, %v1176
      %1178 = vst [vmem:[%s796] sm:$0xff] %v1175
      %1179 = vst [vmem:[%s797] sm:$0xff] %v1176
      %1180 = xla_tuple %1178, %1179
      %s1181 = scalar_lea.vmem %s745, 8 [#allocation12]
      %s1182 = scalar_lea.vmem %s746, 8 [#allocation14]
      %1183 = xla_tuple %s1181, %s1182
      %v1184 = vld [vmem:[%s745] sm:$0xff]
      %v1185 = vld [vmem:[%s746] sm:$0xff]
      %1186 = xla_tuple %v1184, %v1185
      %v1187 = vld [vmem:[%s1181] sm:$0xff]
      %v1188 = vld [vmem:[%s1182] sm:$0xff]
      %1189 = xla_tuple %v1187, %v1188
      %vm1190 = vcmp.gt.s32.totalorder %v1184, %v1187
      %vm1191 = vcmp.eq.s32.totalorder %v1184, %v1187
      %vm1192 = vcmp.lt.s32.totalorder %v1185, %v1188
      %vm1193 = vmand %vm1191, %vm1192
      %vm1194 = vmor %vm1190, %vm1193
      %v1195 = vsel %vm1194, %v1184, %v1187
      %1196 = vst [vmem:[%s745] sm:$0xff] %v1195
      %v1197 = vsel %vm1194, %v1187, %v1184
      %1198 = vst [vmem:[%s1181] sm:$0xff] %v1197
      %v1199 = vsel %vm1194, %v1185, %v1188
      %1200 = vst [vmem:[%s746] sm:$0xff] %v1199
      %v1201 = vsel %vm1194, %v1188, %v1185
      %1202 = vst [vmem:[%s1182] sm:$0xff] %v1201
      %1203 = xla_tuple %1198, %1202
      %1204 = xla_tuple %s745, %s746
      %v1205 = vld [vmem:[%s745] sm:$0xff]
      %v1206 = vld [vmem:[%s746] sm:$0xff]
      %1207 = xla_tuple %v1205, %v1206
      %v1209 = vunpack.c.l.s4 839939668
      %v1210 = vunpack.c.0.s8 %v1209
      %v1211 = vlaneseq
      %v1212 = vshrl.u32 %v1211, 7
      %v1213 = vsub.s32 %v1210, %v1212
      %v1214 = vrot.slane %v1205, %v1213
      %v1216 = vunpack.c.l.s4 839939668
      %v1217 = vunpack.c.0.s8 %v1216
      %v1218 = vlaneseq
      %v1219 = vshrl.u32 %v1218, 7
      %v1220 = vsub.s32 %v1217, %v1219
      %v1221 = vrot.slane %v1206, %v1220
      %1222 = xla_tuple %v1214, %v1221
      %vm1223 = vcmp.gt.s32.totalorder %v1205, %v1214
      %vm1224 = vcmp.eq.s32.totalorder %v1205, %v1214
      %vm1225 = vcmp.lt.s32.totalorder %v1206, %v1221
      %vm1226 = vmand %vm1224, %vm1225
      %vm1227 = vmor %vm1223, %vm1226
      %v1228 = vlaneseq
      %v1229 = vshrl.u32 %v1228, 7
      %v1230 = vand.u32 %v1229, 4
      %vm1231 = vcmp.ne.s32.totalorder %v1230, 0
      %vm1232 = vmxor %vm1227, %vm1231
      %v1233 = vsel %vm1232, %v1205, %v1214
      %v1234 = vsel %vm1232, %v1206, %v1221
      %1235 = xla_tuple %v1233, %v1234
      %v1237 = vunpack.c.l.s4 1417023538
      %v1238 = vunpack.c.0.s8 %v1237
      %v1239 = vlaneseq
      %v1240 = vshrl.u32 %v1239, 7
      %v1241 = vsub.s32 %v1238, %v1240
      %v1242 = vrot.slane %v1233, %v1241
      %v1244 = vunpack.c.l.s4 1417023538
      %v1245 = vunpack.c.0.s8 %v1244
      %v1246 = vlaneseq
      %v1247 = vshrl.u32 %v1246, 7
      %v1248 = vsub.s32 %v1245, %v1247
      %v1249 = vrot.slane %v1234, %v1248
      %1250 = xla_tuple %v1242, %v1249
      %vm1251 = vcmp.gt.s32.totalorder %v1233, %v1242
      %vm1252 = vcmp.eq.s32.totalorder %v1233, %v1242
      %vm1253 = vcmp.lt.s32.totalorder %v1234, %v1249
      %vm1254 = vmand %vm1252, %vm1253
      %vm1255 = vmor %vm1251, %vm1254
      %v1256 = vlaneseq
      %v1257 = vshrl.u32 %v1256, 7
      %v1258 = vand.u32 %v1257, 2
      %vm1259 = vcmp.ne.s32.totalorder %v1258, 0
      %vm1260 = vmxor %vm1255, %vm1259
      %v1261 = vsel %vm1260, %v1233, %v1242
      %v1262 = vsel %vm1260, %v1234, %v1249
      %1263 = xla_tuple %v1261, %v1262
      %v1265 = vunpack.c.l.s4 1732584193
      %v1266 = vunpack.c.0.s8 %v1265
      %v1267 = vlaneseq
      %v1268 = vshrl.u32 %v1267, 7
      %v1269 = vsub.s32 %v1266, %v1268
      %v1270 = vrot.slane %v1261, %v1269
      %v1272 = vunpack.c.l.s4 1732584193
      %v1273 = vunpack.c.0.s8 %v1272
      %v1274 = vlaneseq
      %v1275 = vshrl.u32 %v1274, 7
      %v1276 = vsub.s32 %v1273, %v1275
      %v1277 = vrot.slane %v1262, %v1276
      %1278 = xla_tuple %v1270, %v1277
      %vm1279 = vcmp.gt.s32.totalorder %v1261, %v1270
      %vm1280 = vcmp.eq.s32.totalorder %v1261, %v1270
      %vm1281 = vcmp.lt.s32.totalorder %v1262, %v1277
      %vm1282 = vmand %vm1280, %vm1281
      %vm1283 = vmor %vm1279, %vm1282
      %v1284 = vlaneseq
      %v1285 = vshrl.u32 %v1284, 7
      %v1286 = vand.u32 %v1285, 1
      %vm1287 = vcmp.ne.s32.totalorder %v1286, 0
      %vm1288 = vmxor %vm1283, %vm1287
      %v1289 = vsel %vm1288, %v1261, %v1270
      %v1290 = vsel %vm1288, %v1262, %v1277
      %1291 = xla_tuple %v1289, %v1290
      %1292 = vst [vmem:[%s745] sm:$0xff] %v1289
      %1293 = vst [vmem:[%s746] sm:$0xff] %v1290
      %1294 = xla_tuple %1292, %1293
      %v1295 = vld [vmem:[%s745] sm:$0xff]
      %v1296 = vld [vmem:[%s746] sm:$0xff]
      %1297 = xla_tuple %v1295, %v1296
      %v1299 = vunpack.c.l.s4 839939668
      %v1300 = vunpack.c.0.s8 %v1299
      %v1301 = vlaneseq
      %v1302 = vshrl.u32 %v1301, 7
      %v1303 = vsub.s32 %v1300, %v1302
      %v1304 = vrot.slane %v1295, %v1303
      %v1306 = vunpack.c.l.s4 839939668
      %v1307 = vunpack.c.0.s8 %v1306
      %v1308 = vlaneseq
      %v1309 = vshrl.u32 %v1308, 7
      %v1310 = vsub.s32 %v1307, %v1309
      %v1311 = vrot.slane %v1296, %v1310
      %1312 = xla_tuple %v1304, %v1311
      %vm1313 = vcmp.gt.s32.totalorder %v1295, %v1304
      %vm1314 = vcmp.eq.s32.totalorder %v1295, %v1304
      %vm1315 = vcmp.lt.s32.totalorder %v1296, %v1311
      %vm1316 = vmand %vm1314, %vm1315
      %vm1317 = vmor %vm1313, %vm1316
      %v1318 = vlaneseq
      %v1319 = vshrl.u32 %v1318, 7
      %v1320 = vand.u32 %v1319, 4
      %vm1321 = vcmp.ne.s32.totalorder %v1320, 0
      %vm1322 = vmxor %vm1317, %vm1321
      %v1323 = vsel %vm1322, %v1295, %v1304
      %v1324 = vsel %vm1322, %v1296, %v1311
      %1325 = xla_tuple %v1323, %v1324
      %v1327 = vunpack.c.l.s4 1417023538
      %v1328 = vunpack.c.0.s8 %v1327
      %v1329 = vlaneseq
      %v1330 = vshrl.u32 %v1329, 7
      %v1331 = vsub.s32 %v1328, %v1330
      %v1332 = vrot.slane %v1323, %v1331
      %v1334 = vunpack.c.l.s4 1417023538
      %v1335 = vunpack.c.0.s8 %v1334
      %v1336 = vlaneseq
      %v1337 = vshrl.u32 %v1336, 7
      %v1338 = vsub.s32 %v1335, %v1337
      %v1339 = vrot.slane %v1324, %v1338
      %1340 = xla_tuple %v1332, %v1339
      %vm1341 = vcmp.gt.s32.totalorder %v1323, %v1332
      %vm1342 = vcmp.eq.s32.totalorder %v1323, %v1332
      %vm1343 = vcmp.lt.s32.totalorder %v1324, %v1339
      %vm1344 = vmand %vm1342, %vm1343
      %vm1345 = vmor %vm1341, %vm1344
      %v1346 = vlaneseq
      %v1347 = vshrl.u32 %v1346, 7
      %v1348 = vand.u32 %v1347, 2
      %vm1349 = vcmp.ne.s32.totalorder %v1348, 0
      %vm1350 = vmxor %vm1345, %vm1349
      %v1351 = vsel %vm1350, %v1323, %v1332
      %v1352 = vsel %vm1350, %v1324, %v1339
      %1353 = xla_tuple %v1351, %v1352
      %v1355 = vunpack.c.l.s4 1732584193
      %v1356 = vunpack.c.0.s8 %v1355
      %v1357 = vlaneseq
      %v1358 = vshrl.u32 %v1357, 7
      %v1359 = vsub.s32 %v1356, %v1358
      %v1360 = vrot.slane %v1351, %v1359
      %v1362 = vunpack.c.l.s4 1732584193
      %v1363 = vunpack.c.0.s8 %v1362
      %v1364 = vlaneseq
      %v1365 = vshrl.u32 %v1364, 7
      %v1366 = vsub.s32 %v1363, %v1365
      %v1367 = vrot.slane %v1352, %v1366
      %1368 = xla_tuple %v1360, %v1367
      %vm1369 = vcmp.gt.s32.totalorder %v1351, %v1360
      %vm1370 = vcmp.eq.s32.totalorder %v1351, %v1360
      %vm1371 = vcmp.lt.s32.totalorder %v1352, %v1367
      %vm1372 = vmand %vm1370, %vm1371
      %vm1373 = vmor %vm1369, %vm1372
      %v1374 = vlaneseq
      %v1375 = vshrl.u32 %v1374, 7
      %v1376 = vand.u32 %v1375, 1
      %vm1377 = vcmp.ne.s32.totalorder %v1376, 0
      %vm1378 = vmxor %vm1373, %vm1377
      %v1379 = vsel %vm1378, %v1351, %v1360
      %v1380 = vsel %vm1378, %v1352, %v1367
      %1381 = xla_tuple %v1379, %v1380
      %1382 = vst [vmem:[%s745] sm:$0xff] %v1379
      %1383 = vst [vmem:[%s746] sm:$0xff] %v1380
      %1384 = xla_tuple %1382, %1383
      %1385 = xla_tuple %s1181, %s1182
      %v1386 = vld [vmem:[%s1181] sm:$0xff]
      %v1387 = vld [vmem:[%s1182] sm:$0xff]
      %1388 = xla_tuple %v1386, %v1387
      %v1390 = vunpack.c.l.s4 839939668
      %v1391 = vunpack.c.0.s8 %v1390
      %v1392 = vlaneseq
      %v1393 = vshrl.u32 %v1392, 7
      %v1394 = vsub.s32 %v1391, %v1393
      %v1395 = vrot.slane %v1386, %v1394
      %v1397 = vunpack.c.l.s4 839939668
      %v1398 = vunpack.c.0.s8 %v1397
      %v1399 = vlaneseq
      %v1400 = vshrl.u32 %v1399, 7
      %v1401 = vsub.s32 %v1398, %v1400
      %v1402 = vrot.slane %v1387, %v1401
      %1403 = xla_tuple %v1395, %v1402
      %vm1404 = vcmp.gt.s32.totalorder %v1386, %v1395
      %vm1405 = vcmp.eq.s32.totalorder %v1386, %v1395
      %vm1406 = vcmp.lt.s32.totalorder %v1387, %v1402
      %vm1407 = vmand %vm1405, %vm1406
      %vm1408 = vmor %vm1404, %vm1407
      %v1409 = vlaneseq
      %v1410 = vshrl.u32 %v1409, 7
      %v1411 = vand.u32 %v1410, 4
      %vm1412 = vcmp.ne.s32.totalorder %v1411, 0
      %vm1413 = vmxor %vm1408, %vm1412
      %v1414 = vsel %vm1413, %v1386, %v1395
      %v1415 = vsel %vm1413, %v1387, %v1402
      %1416 = xla_tuple %v1414, %v1415
      %v1418 = vunpack.c.l.s4 1417023538
      %v1419 = vunpack.c.0.s8 %v1418
      %v1420 = vlaneseq
      %v1421 = vshrl.u32 %v1420, 7
      %v1422 = vsub.s32 %v1419, %v1421
      %v1423 = vrot.slane %v1414, %v1422
      %v1425 = vunpack.c.l.s4 1417023538
      %v1426 = vunpack.c.0.s8 %v1425
      %v1427 = vlaneseq
      %v1428 = vshrl.u32 %v1427, 7
      %v1429 = vsub.s32 %v1426, %v1428
      %v1430 = vrot.slane %v1415, %v1429
      %1431 = xla_tuple %v1423, %v1430
      %vm1432 = vcmp.gt.s32.totalorder %v1414, %v1423
      %vm1433 = vcmp.eq.s32.totalorder %v1414, %v1423
      %vm1434 = vcmp.lt.s32.totalorder %v1415, %v1430
      %vm1435 = vmand %vm1433, %vm1434
      %vm1436 = vmor %vm1432, %vm1435
      %v1437 = vlaneseq
      %v1438 = vshrl.u32 %v1437, 7
      %v1439 = vand.u32 %v1438, 2
      %vm1440 = vcmp.ne.s32.totalorder %v1439, 0
      %vm1441 = vmxor %vm1436, %vm1440
      %v1442 = vsel %vm1441, %v1414, %v1423
      %v1443 = vsel %vm1441, %v1415, %v1430
      %1444 = xla_tuple %v1442, %v1443
      %v1446 = vunpack.c.l.s4 1732584193
      %v1447 = vunpack.c.0.s8 %v1446
      %v1448 = vlaneseq
      %v1449 = vshrl.u32 %v1448, 7
      %v1450 = vsub.s32 %v1447, %v1449
      %v1451 = vrot.slane %v1442, %v1450
      %v1453 = vunpack.c.l.s4 1732584193
      %v1454 = vunpack.c.0.s8 %v1453
      %v1455 = vlaneseq
      %v1456 = vshrl.u32 %v1455, 7
      %v1457 = vsub.s32 %v1454, %v1456
      %v1458 = vrot.slane %v1443, %v1457
      %1459 = xla_tuple %v1451, %v1458
      %vm1460 = vcmp.gt.s32.totalorder %v1442, %v1451
      %vm1461 = vcmp.eq.s32.totalorder %v1442, %v1451
      %vm1462 = vcmp.lt.s32.totalorder %v1443, %v1458
      %vm1463 = vmand %vm1461, %vm1462
      %vm1464 = vmor %vm1460, %vm1463
      %v1465 = vlaneseq
      %v1466 = vshrl.u32 %v1465, 7
      %v1467 = vand.u32 %v1466, 1
      %vm1468 = vcmp.ne.s32.totalorder %v1467, 0
      %vm1469 = vmxor %vm1464, %vm1468
      %v1470 = vsel %vm1469, %v1442, %v1451
      %v1471 = vsel %vm1469, %v1443, %v1458
      %1472 = xla_tuple %v1470, %v1471
      %1473 = vst [vmem:[%s1181] sm:$0xff] %v1470
      %1474 = vst [vmem:[%s1182] sm:$0xff] %v1471
      %1475 = xla_tuple %1473, %1474
      %v1476 = vld [vmem:[%s1181] sm:$0xff]
      %v1477 = vld [vmem:[%s1182] sm:$0xff]
      %1478 = xla_tuple %v1476, %v1477
      %v1480 = vunpack.c.l.s4 839939668
      %v1481 = vunpack.c.0.s8 %v1480
      %v1482 = vlaneseq
      %v1483 = vshrl.u32 %v1482, 7
      %v1484 = vsub.s32 %v1481, %v1483
      %v1485 = vrot.slane %v1476, %v1484
      %v1487 = vunpack.c.l.s4 839939668
      %v1488 = vunpack.c.0.s8 %v1487
      %v1489 = vlaneseq
      %v1490 = vshrl.u32 %v1489, 7
      %v1491 = vsub.s32 %v1488, %v1490
      %v1492 = vrot.slane %v1477, %v1491
      %1493 = xla_tuple %v1485, %v1492
      %vm1494 = vcmp.gt.s32.totalorder %v1476, %v1485
      %vm1495 = vcmp.eq.s32.totalorder %v1476, %v1485
      %vm1496 = vcmp.lt.s32.totalorder %v1477, %v1492
      %vm1497 = vmand %vm1495, %vm1496
      %vm1498 = vmor %vm1494, %vm1497
      %v1499 = vlaneseq
      %v1500 = vshrl.u32 %v1499, 7
      %v1501 = vand.u32 %v1500, 4
      %vm1502 = vcmp.ne.s32.totalorder %v1501, 0
      %vm1503 = vmxor %vm1498, %vm1502
      %v1504 = vsel %vm1503, %v1476, %v1485
      %v1505 = vsel %vm1503, %v1477, %v1492
      %1506 = xla_tuple %v1504, %v1505
      %v1508 = vunpack.c.l.s4 1417023538
      %v1509 = vunpack.c.0.s8 %v1508
      %v1510 = vlaneseq
      %v1511 = vshrl.u32 %v1510, 7
      %v1512 = vsub.s32 %v1509, %v1511
      %v1513 = vrot.slane %v1504, %v1512
      %v1515 = vunpack.c.l.s4 1417023538
      %v1516 = vunpack.c.0.s8 %v1515
      %v1517 = vlaneseq
      %v1518 = vshrl.u32 %v1517, 7
      %v1519 = vsub.s32 %v1516, %v1518
      %v1520 = vrot.slane %v1505, %v1519
      %1521 = xla_tuple %v1513, %v1520
      %vm1522 = vcmp.gt.s32.totalorder %v1504, %v1513
      %vm1523 = vcmp.eq.s32.totalorder %v1504, %v1513
      %vm1524 = vcmp.lt.s32.totalorder %v1505, %v1520
      %vm1525 = vmand %vm1523, %vm1524
      %vm1526 = vmor %vm1522, %vm1525
      %v1527 = vlaneseq
      %v1528 = vshrl.u32 %v1527, 7
      %v1529 = vand.u32 %v1528, 2
      %vm1530 = vcmp.ne.s32.totalorder %v1529, 0
      %vm1531 = vmxor %vm1526, %vm1530
      %v1532 = vsel %vm1531, %v1504, %v1513
      %v1533 = vsel %vm1531, %v1505, %v1520
      %1534 = xla_tuple %v1532, %v1533
      %v1536 = vunpack.c.l.s4 1732584193
      %v1537 = vunpack.c.0.s8 %v1536
      %v1538 = vlaneseq
      %v1539 = vshrl.u32 %v1538, 7
      %v1540 = vsub.s32 %v1537, %v1539
      %v1541 = vrot.slane %v1532, %v1540
      %v1543 = vunpack.c.l.s4 1732584193
      %v1544 = vunpack.c.0.s8 %v1543
      %v1545 = vlaneseq
      %v1546 = vshrl.u32 %v1545, 7
      %v1547 = vsub.s32 %v1544, %v1546
      %v1548 = vrot.slane %v1533, %v1547
      %1549 = xla_tuple %v1541, %v1548
      %vm1550 = vcmp.gt.s32.totalorder %v1532, %v1541
      %vm1551 = vcmp.eq.s32.totalorder %v1532, %v1541
      %vm1552 = vcmp.lt.s32.totalorder %v1533, %v1548
      %vm1553 = vmand %vm1551, %vm1552
      %vm1554 = vmor %vm1550, %vm1553
      %v1555 = vlaneseq
      %v1556 = vshrl.u32 %v1555, 7
      %v1557 = vand.u32 %v1556, 1
      %vm1558 = vcmp.ne.s32.totalorder %v1557, 0
      %vm1559 = vmxor %vm1554, %vm1558
      %v1560 = vsel %vm1559, %v1532, %v1541
      %v1561 = vsel %vm1559, %v1533, %v1548
      %1562 = xla_tuple %v1560, %v1561
      %1563 = vst [vmem:[%s1181] sm:$0xff] %v1560
      %1564 = vst [vmem:[%s1182] sm:$0xff] %v1561
      %1565 = xla_tuple %1563, %1564
      %s1566 = scalar_lea.vmem [#allocation13], 16
      %s1567 = scalar_lea.vmem [#allocation15], 16
      %1568 = xla_tuple %s1566, %s1567
      %v1569 = vld [vmem:[#allocation13] sm:$0xff]
      %v1570 = vld [vmem:[#allocation15] sm:$0xff]
      %1571 = xla_tuple %v1569, %v1570
      %v1572 = vld [vmem:[%s1566] sm:$0xff]
      %v1573 = vld [vmem:[%s1567] sm:$0xff]
      %1574 = xla_tuple %v1572, %v1573
      %vm1575 = vcmp.gt.s32.totalorder %v1569, %v1572
      %vm1576 = vcmp.eq.s32.totalorder %v1569, %v1572
      %vm1577 = vcmp.lt.s32.totalorder %v1570, %v1573
      %vm1578 = vmand %vm1576, %vm1577
      %vm1579 = vmor %vm1575, %vm1578
      %v1580 = vsel %vm1579, %v1569, %v1572
      %1581 = vst [vmem:[#allocation13] sm:$0xff] %v1580
      %v1582 = vsel %vm1579, %v1572, %v1569
      %1583 = vst [vmem:[%s1566] sm:$0xff] %v1582
      %v1584 = vsel %vm1579, %v1570, %v1573
      %1585 = vst [vmem:[#allocation15] sm:$0xff] %v1584
      %v1586 = vsel %vm1579, %v1573, %v1570
      %1587 = vst [vmem:[%s1567] sm:$0xff] %v1586
      %1588 = xla_tuple %1583, %1587
      %s1589 = scalar_lea.vmem [#allocation13], 8
      %v1590 = vld [vmem:[%s1589] sm:$0xff]
      %s1591 = scalar_lea.vmem [#allocation15], 8
      %v1592 = vld [vmem:[%s1591] sm:$0xff]
      %1593 = xla_tuple %v1590, %v1592
      %s1594 = scalar_lea.vmem %s1566, 8 [#allocation13]
      %v1595 = vld [vmem:[%s1594] sm:$0xff]
      %s1596 = scalar_lea.vmem %s1567, 8 [#allocation15]
      %v1597 = vld [vmem:[%s1596] sm:$0xff]
      %1598 = xla_tuple %v1595, %v1597
      %vm1599 = vcmp.gt.s32.totalorder %v1590, %v1595
      %vm1600 = vcmp.eq.s32.totalorder %v1590, %v1595
      %vm1601 = vcmp.lt.s32.totalorder %v1592, %v1597
      %vm1602 = vmand %vm1600, %vm1601
      %vm1603 = vmor %vm1599, %vm1602
      %s1604 = scalar_lea.vmem [#allocation13], 8
      %v1605 = vsel %vm1603, %v1590, %v1595
      %1606 = vst [vmem:[%s1604] sm:$0xff] %v1605
      %s1607 = scalar_lea.vmem %s1566, 8 [#allocation13]
      %v1608 = vsel %vm1603, %v1595, %v1590
      %1609 = vst [vmem:[%s1607] sm:$0xff] %v1608
      %s1610 = scalar_lea.vmem [#allocation15], 8
      %v1611 = vsel %vm1603, %v1592, %v1597
      %1612 = vst [vmem:[%s1610] sm:$0xff] %v1611
      %s1613 = scalar_lea.vmem %s1567, 8 [#allocation15]
      %v1614 = vsel %vm1603, %v1597, %v1592
      %1615 = vst [vmem:[%s1613] sm:$0xff] %v1614
      %1616 = xla_tuple %1609, %1615
      %s1617 = scalar_lea.vmem [#allocation13], 8
      %s1618 = scalar_lea.vmem [#allocation15], 8
      %1619 = xla_tuple %s1617, %s1618
      %v1620 = vld [vmem:[#allocation13] sm:$0xff]
      %v1621 = vld [vmem:[#allocation15] sm:$0xff]
      %1622 = xla_tuple %v1620, %v1621
      %v1623 = vld [vmem:[%s1617] sm:$0xff]
      %v1624 = vld [vmem:[%s1618] sm:$0xff]
      %1625 = xla_tuple %v1623, %v1624
      %vm1626 = vcmp.gt.s32.totalorder %v1620, %v1623
      %vm1627 = vcmp.eq.s32.totalorder %v1620, %v1623
      %vm1628 = vcmp.lt.s32.totalorder %v1621, %v1624
      %vm1629 = vmand %vm1627, %vm1628
      %vm1630 = vmor %vm1626, %vm1629
      %v1631 = vsel %vm1630, %v1620, %v1623
      %1632 = vst [vmem:[#allocation13] sm:$0xff] %v1631
      %v1633 = vsel %vm1630, %v1623, %v1620
      %1634 = vst [vmem:[%s1617] sm:$0xff] %v1633
      %v1635 = vsel %vm1630, %v1621, %v1624
      %1636 = vst [vmem:[#allocation15] sm:$0xff] %v1635
      %v1637 = vsel %vm1630, %v1624, %v1621
      %1638 = vst [vmem:[%s1618] sm:$0xff] %v1637
      %1639 = xla_tuple %1634, %1638
      %1640 = xla_tuple [#allocation13], [#allocation15]
      %v1641 = vld [vmem:[#allocation13] sm:$0xff]
      %v1642 = vld [vmem:[#allocation15] sm:$0xff]
      %1643 = xla_tuple %v1641, %v1642
      %v1645 = vunpack.c.l.s4 839939668
      %v1646 = vunpack.c.0.s8 %v1645
      %v1647 = vlaneseq
      %v1648 = vshrl.u32 %v1647, 7
      %v1649 = vsub.s32 %v1646, %v1648
      %v1650 = vrot.slane %v1641, %v1649
      %v1652 = vunpack.c.l.s4 839939668
      %v1653 = vunpack.c.0.s8 %v1652
      %v1654 = vlaneseq
      %v1655 = vshrl.u32 %v1654, 7
      %v1656 = vsub.s32 %v1653, %v1655
      %v1657 = vrot.slane %v1642, %v1656
      %1658 = xla_tuple %v1650, %v1657
      %vm1659 = vcmp.gt.s32.totalorder %v1641, %v1650
      %vm1660 = vcmp.eq.s32.totalorder %v1641, %v1650
      %vm1661 = vcmp.lt.s32.totalorder %v1642, %v1657
      %vm1662 = vmand %vm1660, %vm1661
      %vm1663 = vmor %vm1659, %vm1662
      %v1664 = vlaneseq
      %v1665 = vshrl.u32 %v1664, 7
      %v1666 = vand.u32 %v1665, 4
      %vm1667 = vcmp.ne.s32.totalorder %v1666, 0
      %vm1668 = vmxor %vm1663, %vm1667
      %v1669 = vsel %vm1668, %v1641, %v1650
      %v1670 = vsel %vm1668, %v1642, %v1657
      %1671 = xla_tuple %v1669, %v1670
      %v1673 = vunpack.c.l.s4 1417023538
      %v1674 = vunpack.c.0.s8 %v1673
      %v1675 = vlaneseq
      %v1676 = vshrl.u32 %v1675, 7
      %v1677 = vsub.s32 %v1674, %v1676
      %v1678 = vrot.slane %v1669, %v1677
      %v1680 = vunpack.c.l.s4 1417023538
      %v1681 = vunpack.c.0.s8 %v1680
      %v1682 = vlaneseq
      %v1683 = vshrl.u32 %v1682, 7
      %v1684 = vsub.s32 %v1681, %v1683
      %v1685 = vrot.slane %v1670, %v1684
      %1686 = xla_tuple %v1678, %v1685
      %vm1687 = vcmp.gt.s32.totalorder %v1669, %v1678
      %vm1688 = vcmp.eq.s32.totalorder %v1669, %v1678
      %vm1689 = vcmp.lt.s32.totalorder %v1670, %v1685
      %vm1690 = vmand %vm1688, %vm1689
      %vm1691 = vmor %vm1687, %vm1690
      %v1692 = vlaneseq
      %v1693 = vshrl.u32 %v1692, 7
      %v1694 = vand.u32 %v1693, 2
      %vm1695 = vcmp.ne.s32.totalorder %v1694, 0
      %vm1696 = vmxor %vm1691, %vm1695
      %v1697 = vsel %vm1696, %v1669, %v1678
      %v1698 = vsel %vm1696, %v1670, %v1685
      %1699 = xla_tuple %v1697, %v1698
      %v1701 = vunpack.c.l.s4 1732584193
      %v1702 = vunpack.c.0.s8 %v1701
      %v1703 = vlaneseq
      %v1704 = vshrl.u32 %v1703, 7
      %v1705 = vsub.s32 %v1702, %v1704
      %v1706 = vrot.slane %v1697, %v1705
      %v1708 = vunpack.c.l.s4 1732584193
      %v1709 = vunpack.c.0.s8 %v1708
      %v1710 = vlaneseq
      %v1711 = vshrl.u32 %v1710, 7
      %v1712 = vsub.s32 %v1709, %v1711
      %v1713 = vrot.slane %v1698, %v1712
      %1714 = xla_tuple %v1706, %v1713
      %vm1715 = vcmp.gt.s32.totalorder %v1697, %v1706
      %vm1716 = vcmp.eq.s32.totalorder %v1697, %v1706
      %vm1717 = vcmp.lt.s32.totalorder %v1698, %v1713
      %vm1718 = vmand %vm1716, %vm1717
      %vm1719 = vmor %vm1715, %vm1718
      %v1720 = vlaneseq
      %v1721 = vshrl.u32 %v1720, 7
      %v1722 = vand.u32 %v1721, 1
      %vm1723 = vcmp.ne.s32.totalorder %v1722, 0
      %vm1724 = vmxor %vm1719, %vm1723
      %v1725 = vsel %vm1724, %v1697, %v1706
      %v1726 = vsel %vm1724, %v1698, %v1713
      %1727 = xla_tuple %v1725, %v1726
      %1728 = vst [vmem:[#allocation13] sm:$0xff] %v1725
      %1729 = vst [vmem:[#allocation15] sm:$0xff] %v1726
      %1730 = xla_tuple %1728, %1729
      %v1731 = vld [vmem:[#allocation13] sm:$0xff]
      %v1732 = vld [vmem:[#allocation15] sm:$0xff]
      %1733 = xla_tuple %v1731, %v1732
      %v1735 = vunpack.c.l.s4 839939668
      %v1736 = vunpack.c.0.s8 %v1735
      %v1737 = vlaneseq
      %v1738 = vshrl.u32 %v1737, 7
      %v1739 = vsub.s32 %v1736, %v1738
      %v1740 = vrot.slane %v1731, %v1739
      %v1742 = vunpack.c.l.s4 839939668
      %v1743 = vunpack.c.0.s8 %v1742
      %v1744 = vlaneseq
      %v1745 = vshrl.u32 %v1744, 7
      %v1746 = vsub.s32 %v1743, %v1745
      %v1747 = vrot.slane %v1732, %v1746
      %1748 = xla_tuple %v1740, %v1747
      %vm1749 = vcmp.gt.s32.totalorder %v1731, %v1740
      %vm1750 = vcmp.eq.s32.totalorder %v1731, %v1740
      %vm1751 = vcmp.lt.s32.totalorder %v1732, %v1747
      %vm1752 = vmand %vm1750, %vm1751
      %vm1753 = vmor %vm1749, %vm1752
      %v1754 = vlaneseq
      %v1755 = vshrl.u32 %v1754, 7
      %v1756 = vand.u32 %v1755, 4
      %vm1757 = vcmp.ne.s32.totalorder %v1756, 0
      %vm1758 = vmxor %vm1753, %vm1757
      %v1759 = vsel %vm1758, %v1731, %v1740
      %v1760 = vsel %vm1758, %v1732, %v1747
      %1761 = xla_tuple %v1759, %v1760
      %v1763 = vunpack.c.l.s4 1417023538
      %v1764 = vunpack.c.0.s8 %v1763
      %v1765 = vlaneseq
      %v1766 = vshrl.u32 %v1765, 7
      %v1767 = vsub.s32 %v1764, %v1766
      %v1768 = vrot.slane %v1759, %v1767
      %v1770 = vunpack.c.l.s4 1417023538
      %v1771 = vunpack.c.0.s8 %v1770
      %v1772 = vlaneseq
      %v1773 = vshrl.u32 %v1772, 7
      %v1774 = vsub.s32 %v1771, %v1773
      %v1775 = vrot.slane %v1760, %v1774
      %1776 = xla_tuple %v1768, %v1775
      %vm1777 = vcmp.gt.s32.totalorder %v1759, %v1768
      %vm1778 = vcmp.eq.s32.totalorder %v1759, %v1768
      %vm1779 = vcmp.lt.s32.totalorder %v1760, %v1775
      %vm1780 = vmand %vm1778, %vm1779
      %vm1781 = vmor %vm1777, %vm1780
      %v1782 = vlaneseq
      %v1783 = vshrl.u32 %v1782, 7
      %v1784 = vand.u32 %v1783, 2
      %vm1785 = vcmp.ne.s32.totalorder %v1784, 0
      %vm1786 = vmxor %vm1781, %vm1785
      %v1787 = vsel %vm1786, %v1759, %v1768
      %v1788 = vsel %vm1786, %v1760, %v1775
      %1789 = xla_tuple %v1787, %v1788
      %v1791 = vunpack.c.l.s4 1732584193
      %v1792 = vunpack.c.0.s8 %v1791
      %v1793 = vlaneseq
      %v1794 = vshrl.u32 %v1793, 7
      %v1795 = vsub.s32 %v1792, %v1794
      %v1796 = vrot.slane %v1787, %v1795
      %v1798 = vunpack.c.l.s4 1732584193
      %v1799 = vunpack.c.0.s8 %v1798
      %v1800 = vlaneseq
      %v1801 = vshrl.u32 %v1800, 7
      %v1802 = vsub.s32 %v1799, %v1801
      %v1803 = vrot.slane %v1788, %v1802
      %1804 = xla_tuple %v1796, %v1803
      %vm1805 = vcmp.gt.s32.totalorder %v1787, %v1796
      %vm1806 = vcmp.eq.s32.totalorder %v1787, %v1796
      %vm1807 = vcmp.lt.s32.totalorder %v1788, %v1803
      %vm1808 = vmand %vm1806, %vm1807
      %vm1809 = vmor %vm1805, %vm1808
      %v1810 = vlaneseq
      %v1811 = vshrl.u32 %v1810, 7
      %v1812 = vand.u32 %v1811, 1
      %vm1813 = vcmp.ne.s32.totalorder %v1812, 0
      %vm1814 = vmxor %vm1809, %vm1813
      %v1815 = vsel %vm1814, %v1787, %v1796
      %v1816 = vsel %vm1814, %v1788, %v1803
      %1817 = xla_tuple %v1815, %v1816
      %1818 = vst [vmem:[#allocation13] sm:$0xff] %v1815
      %1819 = vst [vmem:[#allocation15] sm:$0xff] %v1816
      %1820 = xla_tuple %1818, %1819
      %1821 = xla_tuple %s1617, %s1618
      %v1822 = vld [vmem:[%s1617] sm:$0xff]
      %v1823 = vld [vmem:[%s1618] sm:$0xff]
      %1824 = xla_tuple %v1822, %v1823
      %v1826 = vunpack.c.l.s4 839939668
      %v1827 = vunpack.c.0.s8 %v1826
      %v1828 = vlaneseq
      %v1829 = vshrl.u32 %v1828, 7
      %v1830 = vsub.s32 %v1827, %v1829
      %v1831 = vrot.slane %v1822, %v1830
      %v1833 = vunpack.c.l.s4 839939668
      %v1834 = vunpack.c.0.s8 %v1833
      %v1835 = vlaneseq
      %v1836 = vshrl.u32 %v1835, 7
      %v1837 = vsub.s32 %v1834, %v1836
      %v1838 = vrot.slane %v1823, %v1837
      %1839 = xla_tuple %v1831, %v1838
      %vm1840 = vcmp.gt.s32.totalorder %v1822, %v1831
      %vm1841 = vcmp.eq.s32.totalorder %v1822, %v1831
      %vm1842 = vcmp.lt.s32.totalorder %v1823, %v1838
      %vm1843 = vmand %vm1841, %vm1842
      %vm1844 = vmor %vm1840, %vm1843
      %v1845 = vlaneseq
      %v1846 = vshrl.u32 %v1845, 7
      %v1847 = vand.u32 %v1846, 4
      %vm1848 = vcmp.ne.s32.totalorder %v1847, 0
      %vm1849 = vmxor %vm1844, %vm1848
      %v1850 = vsel %vm1849, %v1822, %v1831
      %v1851 = vsel %vm1849, %v1823, %v1838
      %1852 = xla_tuple %v1850, %v1851
      %v1854 = vunpack.c.l.s4 1417023538
      %v1855 = vunpack.c.0.s8 %v1854
      %v1856 = vlaneseq
      %v1857 = vshrl.u32 %v1856, 7
      %v1858 = vsub.s32 %v1855, %v1857
      %v1859 = vrot.slane %v1850, %v1858
      %v1861 = vunpack.c.l.s4 1417023538
      %v1862 = vunpack.c.0.s8 %v1861
      %v1863 = vlaneseq
      %v1864 = vshrl.u32 %v1863, 7
      %v1865 = vsub.s32 %v1862, %v1864
      %v1866 = vrot.slane %v1851, %v1865
      %1867 = xla_tuple %v1859, %v1866
      %vm1868 = vcmp.gt.s32.totalorder %v1850, %v1859
      %vm1869 = vcmp.eq.s32.totalorder %v1850, %v1859
      %vm1870 = vcmp.lt.s32.totalorder %v1851, %v1866
      %vm1871 = vmand %vm1869, %vm1870
      %vm1872 = vmor %vm1868, %vm1871
      %v1873 = vlaneseq
      %v1874 = vshrl.u32 %v1873, 7
      %v1875 = vand.u32 %v1874, 2
      %vm1876 = vcmp.ne.s32.totalorder %v1875, 0
      %vm1877 = vmxor %vm1872, %vm1876
      %v1878 = vsel %vm1877, %v1850, %v1859
      %v1879 = vsel %vm1877, %v1851, %v1866
      %1880 = xla_tuple %v1878, %v1879
      %v1882 = vunpack.c.l.s4 1732584193
      %v1883 = vunpack.c.0.s8 %v1882
      %v1884 = vlaneseq
      %v1885 = vshrl.u32 %v1884, 7
      %v1886 = vsub.s32 %v1883, %v1885
      %v1887 = vrot.slane %v1878, %v1886
      %v1889 = vunpack.c.l.s4 1732584193
      %v1890 = vunpack.c.0.s8 %v1889
      %v1891 = vlaneseq
      %v1892 = vshrl.u32 %v1891, 7
      %v1893 = vsub.s32 %v1890, %v1892
      %v1894 = vrot.slane %v1879, %v1893
      %1895 = xla_tuple %v1887, %v1894
      %vm1896 = vcmp.gt.s32.totalorder %v1878, %v1887
      %vm1897 = vcmp.eq.s32.totalorder %v1878, %v1887
      %vm1898 = vcmp.lt.s32.totalorder %v1879, %v1894
      %vm1899 = vmand %vm1897, %vm1898
      %vm1900 = vmor %vm1896, %vm1899
      %v1901 = vlaneseq
      %v1902 = vshrl.u32 %v1901, 7
      %v1903 = vand.u32 %v1902, 1
      %vm1904 = vcmp.ne.s32.totalorder %v1903, 0
      %vm1905 = vmxor %vm1900, %vm1904
      %v1906 = vsel %vm1905, %v1878, %v1887
      %v1907 = vsel %vm1905, %v1879, %v1894
      %1908 = xla_tuple %v1906, %v1907
      %1909 = vst [vmem:[%s1617] sm:$0xff] %v1906
      %1910 = vst [vmem:[%s1618] sm:$0xff] %v1907
      %1911 = xla_tuple %1909, %1910
      %v1912 = vld [vmem:[%s1617] sm:$0xff]
      %v1913 = vld [vmem:[%s1618] sm:$0xff]
      %1914 = xla_tuple %v1912, %v1913
      %v1916 = vunpack.c.l.s4 839939668
      %v1917 = vunpack.c.0.s8 %v1916
      %v1918 = vlaneseq
      %v1919 = vshrl.u32 %v1918, 7
      %v1920 = vsub.s32 %v1917, %v1919
      %v1921 = vrot.slane %v1912, %v1920
      %v1923 = vunpack.c.l.s4 839939668
      %v1924 = vunpack.c.0.s8 %v1923
      %v1925 = vlaneseq
      %v1926 = vshrl.u32 %v1925, 7
      %v1927 = vsub.s32 %v1924, %v1926
      %v1928 = vrot.slane %v1913, %v1927
      %1929 = xla_tuple %v1921, %v1928
      %vm1930 = vcmp.gt.s32.totalorder %v1912, %v1921
      %vm1931 = vcmp.eq.s32.totalorder %v1912, %v1921
      %vm1932 = vcmp.lt.s32.totalorder %v1913, %v1928
      %vm1933 = vmand %vm1931, %vm1932
      %vm1934 = vmor %vm1930, %vm1933
      %v1935 = vlaneseq
      %v1936 = vshrl.u32 %v1935, 7
      %v1937 = vand.u32 %v1936, 4
      %vm1938 = vcmp.ne.s32.totalorder %v1937, 0
      %vm1939 = vmxor %vm1934, %vm1938
      %v1940 = vsel %vm1939, %v1912, %v1921
      %v1941 = vsel %vm1939, %v1913, %v1928
      %1942 = xla_tuple %v1940, %v1941
      %v1944 = vunpack.c.l.s4 1417023538
      %v1945 = vunpack.c.0.s8 %v1944
      %v1946 = vlaneseq
      %v1947 = vshrl.u32 %v1946, 7
      %v1948 = vsub.s32 %v1945, %v1947
      %v1949 = vrot.slane %v1940, %v1948
      %v1951 = vunpack.c.l.s4 1417023538
      %v1952 = vunpack.c.0.s8 %v1951
      %v1953 = vlaneseq
      %v1954 = vshrl.u32 %v1953, 7
      %v1955 = vsub.s32 %v1952, %v1954
      %v1956 = vrot.slane %v1941, %v1955
      %1957 = xla_tuple %v1949, %v1956
      %vm1958 = vcmp.gt.s32.totalorder %v1940, %v1949
      %vm1959 = vcmp.eq.s32.totalorder %v1940, %v1949
      %vm1960 = vcmp.lt.s32.totalorder %v1941, %v1956
      %vm1961 = vmand %vm1959, %vm1960
      %vm1962 = vmor %vm1958, %vm1961
      %v1963 = vlaneseq
      %v1964 = vshrl.u32 %v1963, 7
      %v1965 = vand.u32 %v1964, 2
      %vm1966 = vcmp.ne.s32.totalorder %v1965, 0
      %vm1967 = vmxor %vm1962, %vm1966
      %v1968 = vsel %vm1967, %v1940, %v1949
      %v1969 = vsel %vm1967, %v1941, %v1956
      %1970 = xla_tuple %v1968, %v1969
      %v1972 = vunpack.c.l.s4 1732584193
      %v1973 = vunpack.c.0.s8 %v1972
      %v1974 = vlaneseq
      %v1975 = vshrl.u32 %v1974, 7
      %v1976 = vsub.s32 %v1973, %v1975
      %v1977 = vrot.slane %v1968, %v1976
      %v1979 = vunpack.c.l.s4 1732584193
      %v1980 = vunpack.c.0.s8 %v1979
      %v1981 = vlaneseq
      %v1982 = vshrl.u32 %v1981, 7
      %v1983 = vsub.s32 %v1980, %v1982
      %v1984 = vrot.slane %v1969, %v1983
      %1985 = xla_tuple %v1977, %v1984
      %vm1986 = vcmp.gt.s32.totalorder %v1968, %v1977
      %vm1987 = vcmp.eq.s32.totalorder %v1968, %v1977
      %vm1988 = vcmp.lt.s32.totalorder %v1969, %v1984
      %vm1989 = vmand %vm1987, %vm1988
      %vm1990 = vmor %vm1986, %vm1989
      %v1991 = vlaneseq
      %v1992 = vshrl.u32 %v1991, 7
      %v1993 = vand.u32 %v1992, 1
      %vm1994 = vcmp.ne.s32.totalorder %v1993, 0
      %vm1995 = vmxor %vm1990, %vm1994
      %v1996 = vsel %vm1995, %v1968, %v1977
      %v1997 = vsel %vm1995, %v1969, %v1984
      %1998 = xla_tuple %v1996, %v1997
      %1999 = vst [vmem:[%s1617] sm:$0xff] %v1996
      %2000 = vst [vmem:[%s1618] sm:$0xff] %v1997
      %2001 = xla_tuple %1999, %2000
      %s2002 = scalar_lea.vmem %s1566, 8 [#allocation13]
      %s2003 = scalar_lea.vmem %s1567, 8 [#allocation15]
      %2004 = xla_tuple %s2002, %s2003
      %v2005 = vld [vmem:[%s1566] sm:$0xff]
      %v2006 = vld [vmem:[%s1567] sm:$0xff]
      %2007 = xla_tuple %v2005, %v2006
      %v2008 = vld [vmem:[%s2002] sm:$0xff]
      %v2009 = vld [vmem:[%s2003] sm:$0xff]
      %2010 = xla_tuple %v2008, %v2009
      %vm2011 = vcmp.gt.s32.totalorder %v2005, %v2008
      %vm2012 = vcmp.eq.s32.totalorder %v2005, %v2008
      %vm2013 = vcmp.lt.s32.totalorder %v2006, %v2009
      %vm2014 = vmand %vm2012, %vm2013
      %vm2015 = vmor %vm2011, %vm2014
      %v2016 = vsel %vm2015, %v2005, %v2008
      %2017 = vst [vmem:[%s1566] sm:$0xff] %v2016
      %v2018 = vsel %vm2015, %v2008, %v2005
      %2019 = vst [vmem:[%s2002] sm:$0xff] %v2018
      %v2020 = vsel %vm2015, %v2006, %v2009
      %2021 = vst [vmem:[%s1567] sm:$0xff] %v2020
      %v2022 = vsel %vm2015, %v2009, %v2006
      %2023 = vst [vmem:[%s2003] sm:$0xff] %v2022
      %2024 = xla_tuple %2019, %2023
      %2025 = xla_tuple %s1566, %s1567
      %v2026 = vld [vmem:[%s1566] sm:$0xff]
      %v2027 = vld [vmem:[%s1567] sm:$0xff]
      %2028 = xla_tuple %v2026, %v2027
      %v2030 = vunpack.c.l.s4 839939668
      %v2031 = vunpack.c.0.s8 %v2030
      %v2032 = vlaneseq
      %v2033 = vshrl.u32 %v2032, 7
      %v2034 = vsub.s32 %v2031, %v2033
      %v2035 = vrot.slane %v2026, %v2034
      %v2037 = vunpack.c.l.s4 839939668
      %v2038 = vunpack.c.0.s8 %v2037
      %v2039 = vlaneseq
      %v2040 = vshrl.u32 %v2039, 7
      %v2041 = vsub.s32 %v2038, %v2040
      %v2042 = vrot.slane %v2027, %v2041
      %2043 = xla_tuple %v2035, %v2042
      %vm2044 = vcmp.gt.s32.totalorder %v2026, %v2035
      %vm2045 = vcmp.eq.s32.totalorder %v2026, %v2035
      %vm2046 = vcmp.lt.s32.totalorder %v2027, %v2042
      %vm2047 = vmand %vm2045, %vm2046
      %vm2048 = vmor %vm2044, %vm2047
      %v2049 = vlaneseq
      %v2050 = vshrl.u32 %v2049, 7
      %v2051 = vand.u32 %v2050, 4
      %vm2052 = vcmp.ne.s32.totalorder %v2051, 0
      %vm2053 = vmxor %vm2048, %vm2052
      %v2054 = vsel %vm2053, %v2026, %v2035
      %v2055 = vsel %vm2053, %v2027, %v2042
      %2056 = xla_tuple %v2054, %v2055
      %v2058 = vunpack.c.l.s4 1417023538
      %v2059 = vunpack.c.0.s8 %v2058
      %v2060 = vlaneseq
      %v2061 = vshrl.u32 %v2060, 7
      %v2062 = vsub.s32 %v2059, %v2061
      %v2063 = vrot.slane %v2054, %v2062
      %v2065 = vunpack.c.l.s4 1417023538
      %v2066 = vunpack.c.0.s8 %v2065
      %v2067 = vlaneseq
      %v2068 = vshrl.u32 %v2067, 7
      %v2069 = vsub.s32 %v2066, %v2068
      %v2070 = vrot.slane %v2055, %v2069
      %2071 = xla_tuple %v2063, %v2070
      %vm2072 = vcmp.gt.s32.totalorder %v2054, %v2063
      %vm2073 = vcmp.eq.s32.totalorder %v2054, %v2063
      %vm2074 = vcmp.lt.s32.totalorder %v2055, %v2070
      %vm2075 = vmand %vm2073, %vm2074
      %vm2076 = vmor %vm2072, %vm2075
      %v2077 = vlaneseq
      %v2078 = vshrl.u32 %v2077, 7
      %v2079 = vand.u32 %v2078, 2
      %vm2080 = vcmp.ne.s32.totalorder %v2079, 0
      %vm2081 = vmxor %vm2076, %vm2080
      %v2082 = vsel %vm2081, %v2054, %v2063
      %v2083 = vsel %vm2081, %v2055, %v2070
      %2084 = xla_tuple %v2082, %v2083
      %v2086 = vunpack.c.l.s4 1732584193
      %v2087 = vunpack.c.0.s8 %v2086
      %v2088 = vlaneseq
      %v2089 = vshrl.u32 %v2088, 7
      %v2090 = vsub.s32 %v2087, %v2089
      %v2091 = vrot.slane %v2082, %v2090
      %v2093 = vunpack.c.l.s4 1732584193
      %v2094 = vunpack.c.0.s8 %v2093
      %v2095 = vlaneseq
      %v2096 = vshrl.u32 %v2095, 7
      %v2097 = vsub.s32 %v2094, %v2096
      %v2098 = vrot.slane %v2083, %v2097
      %2099 = xla_tuple %v2091, %v2098
      %vm2100 = vcmp.gt.s32.totalorder %v2082, %v2091
      %vm2101 = vcmp.eq.s32.totalorder %v2082, %v2091
      %vm2102 = vcmp.lt.s32.totalorder %v2083, %v2098
      %vm2103 = vmand %vm2101, %vm2102
      %vm2104 = vmor %vm2100, %vm2103
      %v2105 = vlaneseq
      %v2106 = vshrl.u32 %v2105, 7
      %v2107 = vand.u32 %v2106, 1
      %vm2108 = vcmp.ne.s32.totalorder %v2107, 0
      %vm2109 = vmxor %vm2104, %vm2108
      %v2110 = vsel %vm2109, %v2082, %v2091
      %v2111 = vsel %vm2109, %v2083, %v2098
      %2112 = xla_tuple %v2110, %v2111
      %2113 = vst [vmem:[%s1566] sm:$0xff] %v2110
      %2114 = vst [vmem:[%s1567] sm:$0xff] %v2111
      %2115 = xla_tuple %2113, %2114
      %v2116 = vld [vmem:[%s1566] sm:$0xff]
      %v2117 = vld [vmem:[%s1567] sm:$0xff]
      %2118 = xla_tuple %v2116, %v2117
      %v2120 = vunpack.c.l.s4 839939668
      %v2121 = vunpack.c.0.s8 %v2120
      %v2122 = vlaneseq
      %v2123 = vshrl.u32 %v2122, 7
      %v2124 = vsub.s32 %v2121, %v2123
      %v2125 = vrot.slane %v2116, %v2124
      %v2127 = vunpack.c.l.s4 839939668
      %v2128 = vunpack.c.0.s8 %v2127
      %v2129 = vlaneseq
      %v2130 = vshrl.u32 %v2129, 7
      %v2131 = vsub.s32 %v2128, %v2130
      %v2132 = vrot.slane %v2117, %v2131
      %2133 = xla_tuple %v2125, %v2132
      %vm2134 = vcmp.gt.s32.totalorder %v2116, %v2125
      %vm2135 = vcmp.eq.s32.totalorder %v2116, %v2125
      %vm2136 = vcmp.lt.s32.totalorder %v2117, %v2132
      %vm2137 = vmand %vm2135, %vm2136
      %vm2138 = vmor %vm2134, %vm2137
      %v2139 = vlaneseq
      %v2140 = vshrl.u32 %v2139, 7
      %v2141 = vand.u32 %v2140, 4
      %vm2142 = vcmp.ne.s32.totalorder %v2141, 0
      %vm2143 = vmxor %vm2138, %vm2142
      %v2144 = vsel %vm2143, %v2116, %v2125
      %v2145 = vsel %vm2143, %v2117, %v2132
      %2146 = xla_tuple %v2144, %v2145
      %v2148 = vunpack.c.l.s4 1417023538
      %v2149 = vunpack.c.0.s8 %v2148
      %v2150 = vlaneseq
      %v2151 = vshrl.u32 %v2150, 7
      %v2152 = vsub.s32 %v2149, %v2151
      %v2153 = vrot.slane %v2144, %v2152
      %v2155 = vunpack.c.l.s4 1417023538
      %v2156 = vunpack.c.0.s8 %v2155
      %v2157 = vlaneseq
      %v2158 = vshrl.u32 %v2157, 7
      %v2159 = vsub.s32 %v2156, %v2158
      %v2160 = vrot.slane %v2145, %v2159
      %2161 = xla_tuple %v2153, %v2160
      %vm2162 = vcmp.gt.s32.totalorder %v2144, %v2153
      %vm2163 = vcmp.eq.s32.totalorder %v2144, %v2153
      %vm2164 = vcmp.lt.s32.totalorder %v2145, %v2160
      %vm2165 = vmand %vm2163, %vm2164
      %vm2166 = vmor %vm2162, %vm2165
      %v2167 = vlaneseq
      %v2168 = vshrl.u32 %v2167, 7
      %v2169 = vand.u32 %v2168, 2
      %vm2170 = vcmp.ne.s32.totalorder %v2169, 0
      %vm2171 = vmxor %vm2166, %vm2170
      %v2172 = vsel %vm2171, %v2144, %v2153
      %v2173 = vsel %vm2171, %v2145, %v2160
      %2174 = xla_tuple %v2172, %v2173
      %v2176 = vunpack.c.l.s4 1732584193
      %v2177 = vunpack.c.0.s8 %v2176
      %v2178 = vlaneseq
      %v2179 = vshrl.u32 %v2178, 7
      %v2180 = vsub.s32 %v2177, %v2179
      %v2181 = vrot.slane %v2172, %v2180
      %v2183 = vunpack.c.l.s4 1732584193
      %v2184 = vunpack.c.0.s8 %v2183
      %v2185 = vlaneseq
      %v2186 = vshrl.u32 %v2185, 7
      %v2187 = vsub.s32 %v2184, %v2186
      %v2188 = vrot.slane %v2173, %v2187
      %2189 = xla_tuple %v2181, %v2188
      %vm2190 = vcmp.gt.s32.totalorder %v2172, %v2181
      %vm2191 = vcmp.eq.s32.totalorder %v2172, %v2181
      %vm2192 = vcmp.lt.s32.totalorder %v2173, %v2188
      %vm2193 = vmand %vm2191, %vm2192
      %vm2194 = vmor %vm2190, %vm2193
      %v2195 = vlaneseq
      %v2196 = vshrl.u32 %v2195, 7
      %v2197 = vand.u32 %v2196, 1
      %vm2198 = vcmp.ne.s32.totalorder %v2197, 0
      %vm2199 = vmxor %vm2194, %vm2198
      %v2200 = vsel %vm2199, %v2172, %v2181
      %v2201 = vsel %vm2199, %v2173, %v2188
      %2202 = xla_tuple %v2200, %v2201
      %2203 = vst [vmem:[%s1566] sm:$0xff] %v2200
      %2204 = vst [vmem:[%s1567] sm:$0xff] %v2201
      %2205 = xla_tuple %2203, %2204
      %2206 = xla_tuple %s2002, %s2003
      %v2207 = vld [vmem:[%s2002] sm:$0xff]
      %v2208 = vld [vmem:[%s2003] sm:$0xff]
      %2209 = xla_tuple %v2207, %v2208
      %v2211 = vunpack.c.l.s4 839939668
      %v2212 = vunpack.c.0.s8 %v2211
      %v2213 = vlaneseq
      %v2214 = vshrl.u32 %v2213, 7
      %v2215 = vsub.s32 %v2212, %v2214
      %v2216 = vrot.slane %v2207, %v2215
      %v2218 = vunpack.c.l.s4 839939668
      %v2219 = vunpack.c.0.s8 %v2218
      %v2220 = vlaneseq
      %v2221 = vshrl.u32 %v2220, 7
      %v2222 = vsub.s32 %v2219, %v2221
      %v2223 = vrot.slane %v2208, %v2222
      %2224 = xla_tuple %v2216, %v2223
      %vm2225 = vcmp.gt.s32.totalorder %v2207, %v2216
      %vm2226 = vcmp.eq.s32.totalorder %v2207, %v2216
      %vm2227 = vcmp.lt.s32.totalorder %v2208, %v2223
      %vm2228 = vmand %vm2226, %vm2227
      %vm2229 = vmor %vm2225, %vm2228
      %v2230 = vlaneseq
      %v2231 = vshrl.u32 %v2230, 7
      %v2232 = vand.u32 %v2231, 4
      %vm2233 = vcmp.ne.s32.totalorder %v2232, 0
      %vm2234 = vmxor %vm2229, %vm2233
      %v2235 = vsel %vm2234, %v2207, %v2216
      %v2236 = vsel %vm2234, %v2208, %v2223
      %2237 = xla_tuple %v2235, %v2236
      %v2239 = vunpack.c.l.s4 1417023538
      %v2240 = vunpack.c.0.s8 %v2239
      %v2241 = vlaneseq
      %v2242 = vshrl.u32 %v2241, 7
      %v2243 = vsub.s32 %v2240, %v2242
      %v2244 = vrot.slane %v2235, %v2243
      %v2246 = vunpack.c.l.s4 1417023538
      %v2247 = vunpack.c.0.s8 %v2246
      %v2248 = vlaneseq
      %v2249 = vshrl.u32 %v2248, 7
      %v2250 = vsub.s32 %v2247, %v2249
      %v2251 = vrot.slane %v2236, %v2250
      %2252 = xla_tuple %v2244, %v2251
      %vm2253 = vcmp.gt.s32.totalorder %v2235, %v2244
      %vm2254 = vcmp.eq.s32.totalorder %v2235, %v2244
      %vm2255 = vcmp.lt.s32.totalorder %v2236, %v2251
      %vm2256 = vmand %vm2254, %vm2255
      %vm2257 = vmor %vm2253, %vm2256
      %v2258 = vlaneseq
      %v2259 = vshrl.u32 %v2258, 7
      %v2260 = vand.u32 %v2259, 2
      %vm2261 = vcmp.ne.s32.totalorder %v2260, 0
      %vm2262 = vmxor %vm2257, %vm2261
      %v2263 = vsel %vm2262, %v2235, %v2244
      %v2264 = vsel %vm2262, %v2236, %v2251
      %2265 = xla_tuple %v2263, %v2264
      %v2267 = vunpack.c.l.s4 1732584193
      %v2268 = vunpack.c.0.s8 %v2267
      %v2269 = vlaneseq
      %v2270 = vshrl.u32 %v2269, 7
      %v2271 = vsub.s32 %v2268, %v2270
      %v2272 = vrot.slane %v2263, %v2271
      %v2274 = vunpack.c.l.s4 1732584193
      %v2275 = vunpack.c.0.s8 %v2274
      %v2276 = vlaneseq
      %v2277 = vshrl.u32 %v2276, 7
      %v2278 = vsub.s32 %v2275, %v2277
      %v2279 = vrot.slane %v2264, %v2278
      %2280 = xla_tuple %v2272, %v2279
      %vm2281 = vcmp.gt.s32.totalorder %v2263, %v2272
      %vm2282 = vcmp.eq.s32.totalorder %v2263, %v2272
      %vm2283 = vcmp.lt.s32.totalorder %v2264, %v2279
      %vm2284 = vmand %vm2282, %vm2283
      %vm2285 = vmor %vm2281, %vm2284
      %v2286 = vlaneseq
      %v2287 = vshrl.u32 %v2286, 7
      %v2288 = vand.u32 %v2287, 1
      %vm2289 = vcmp.ne.s32.totalorder %v2288, 0
      %vm2290 = vmxor %vm2285, %vm2289
      %v2291 = vsel %vm2290, %v2263, %v2272
      %v2292 = vsel %vm2290, %v2264, %v2279
      %2293 = xla_tuple %v2291, %v2292
      %2294 = vst [vmem:[%s2002] sm:$0xff] %v2291
      %2295 = vst [vmem:[%s2003] sm:$0xff] %v2292
      %2296 = xla_tuple %2294, %2295
      %v2297 = vld [vmem:[%s2002] sm:$0xff]
      %v2298 = vld [vmem:[%s2003] sm:$0xff]
      %2299 = xla_tuple %v2297, %v2298
      %v2301 = vunpack.c.l.s4 839939668
      %v2302 = vunpack.c.0.s8 %v2301
      %v2303 = vlaneseq
      %v2304 = vshrl.u32 %v2303, 7
      %v2305 = vsub.s32 %v2302, %v2304
      %v2306 = vrot.slane %v2297, %v2305
      %v2308 = vunpack.c.l.s4 839939668
      %v2309 = vunpack.c.0.s8 %v2308
      %v2310 = vlaneseq
      %v2311 = vshrl.u32 %v2310, 7
      %v2312 = vsub.s32 %v2309, %v2311
      %v2313 = vrot.slane %v2298, %v2312
      %2314 = xla_tuple %v2306, %v2313
      %vm2315 = vcmp.gt.s32.totalorder %v2297, %v2306
      %vm2316 = vcmp.eq.s32.totalorder %v2297, %v2306
      %vm2317 = vcmp.lt.s32.totalorder %v2298, %v2313
      %vm2318 = vmand %vm2316, %vm2317
      %vm2319 = vmor %vm2315, %vm2318
      %v2320 = vlaneseq
      %v2321 = vshrl.u32 %v2320, 7
      %v2322 = vand.u32 %v2321, 4
      %vm2323 = vcmp.ne.s32.totalorder %v2322, 0
      %vm2324 = vmxor %vm2319, %vm2323
      %v2325 = vsel %vm2324, %v2297, %v2306
      %v2326 = vsel %vm2324, %v2298, %v2313
      %2327 = xla_tuple %v2325, %v2326
      %v2329 = vunpack.c.l.s4 1417023538
      %v2330 = vunpack.c.0.s8 %v2329
      %v2331 = vlaneseq
      %v2332 = vshrl.u32 %v2331, 7
      %v2333 = vsub.s32 %v2330, %v2332
      %v2334 = vrot.slane %v2325, %v2333
      %v2336 = vunpack.c.l.s4 1417023538
      %v2337 = vunpack.c.0.s8 %v2336
      %v2338 = vlaneseq
      %v2339 = vshrl.u32 %v2338, 7
      %v2340 = vsub.s32 %v2337, %v2339
      %v2341 = vrot.slane %v2326, %v2340
      %2342 = xla_tuple %v2334, %v2341
      %vm2343 = vcmp.gt.s32.totalorder %v2325, %v2334
      %vm2344 = vcmp.eq.s32.totalorder %v2325, %v2334
      %vm2345 = vcmp.lt.s32.totalorder %v2326, %v2341
      %vm2346 = vmand %vm2344, %vm2345
      %vm2347 = vmor %vm2343, %vm2346
      %v2348 = vlaneseq
      %v2349 = vshrl.u32 %v2348, 7
      %v2350 = vand.u32 %v2349, 2
      %vm2351 = vcmp.ne.s32.totalorder %v2350, 0
      %vm2352 = vmxor %vm2347, %vm2351
      %v2353 = vsel %vm2352, %v2325, %v2334
      %v2354 = vsel %vm2352, %v2326, %v2341
      %2355 = xla_tuple %v2353, %v2354
      %v2357 = vunpack.c.l.s4 1732584193
      %v2358 = vunpack.c.0.s8 %v2357
      %v2359 = vlaneseq
      %v2360 = vshrl.u32 %v2359, 7
      %v2361 = vsub.s32 %v2358, %v2360
      %v2362 = vrot.slane %v2353, %v2361
      %v2364 = vunpack.c.l.s4 1732584193
      %v2365 = vunpack.c.0.s8 %v2364
      %v2366 = vlaneseq
      %v2367 = vshrl.u32 %v2366, 7
      %v2368 = vsub.s32 %v2365, %v2367
      %v2369 = vrot.slane %v2354, %v2368
      %2370 = xla_tuple %v2362, %v2369
      %vm2371 = vcmp.gt.s32.totalorder %v2353, %v2362
      %vm2372 = vcmp.eq.s32.totalorder %v2353, %v2362
      %vm2373 = vcmp.lt.s32.totalorder %v2354, %v2369
      %vm2374 = vmand %vm2372, %vm2373
      %vm2375 = vmor %vm2371, %vm2374
      %v2376 = vlaneseq
      %v2377 = vshrl.u32 %v2376, 7
      %v2378 = vand.u32 %v2377, 1
      %vm2379 = vcmp.ne.s32.totalorder %v2378, 0
      %vm2380 = vmxor %vm2375, %vm2379
      %v2381 = vsel %vm2380, %v2353, %v2362
      %v2382 = vsel %vm2380, %v2354, %v2369
      %2383 = xla_tuple %v2381, %v2382
      %2384 = vst [vmem:[%s2002] sm:$0xff] %v2381
      %2385 = vst [vmem:[%s2003] sm:$0xff] %v2382
      %2386 = xla_tuple %2384, %2385
    %v2387 = vld [vmem:[#allocation12] sm:$0xff]
    %vm2388 = vcmp.lt.s32.totalorder %v2387, 0
    %v2389 = vsub.s32 2147483647, %v2387
    %v2390 = vsel %vm2388, %v2389, %v2387
    %2391 = vst [vmem:[#allocation12] sm:$0xff] %v2390
    %s2392 = scalar_lea.vmem [#allocation12], 8
    %v2393 = vld [vmem:[%s2392] sm:$0xff]
    %vm2394 = vcmp.lt.s32.totalorder %v2393, 0
    %v2395 = vsub.s32 2147483647, %v2393
    %v2396 = vsel %vm2394, %v2395, %v2393
    %2397 = vst [vmem:[%s2392] sm:$0xff] %v2396
    %s2398 = scalar_lea.vmem [#allocation12], 16
    %v2399 = vld [vmem:[%s2398] sm:$0xff]
    %vm2400 = vcmp.lt.s32.totalorder %v2399, 0
    %v2401 = vsub.s32 2147483647, %v2399
    %v2402 = vsel %vm2400, %v2401, %v2399
    %2403 = vst [vmem:[%s2398] sm:$0xff] %v2402
    %s2404 = scalar_lea.vmem [#allocation12], 24
    %v2405 = vld [vmem:[%s2404] sm:$0xff]
    %vm2406 = vcmp.lt.s32.totalorder %v2405, 0
    %v2407 = vsub.s32 2147483647, %v2405
    %v2408 = vsel %vm2406, %v2407, %v2405
    %2409 = vst [vmem:[%s2404] sm:$0xff] %v2408
    %v2410 = vld [vmem:[#allocation12] sm:$0xff]
    %s2411 = scalar_lea.vmem [#allocation12], 8
    %v2412 = vld [vmem:[%s2411] sm:$0xff]
    %s2413 = scalar_lea.vmem [#allocation12], 16
    %v2414 = vld [vmem:[%s2413] sm:$0xff]
    %s2415 = scalar_lea.vmem [#allocation12], 24
    %v2416 = vld [vmem:[%s2415] sm:$0xff]
    %2417 = vxpose.xlu0.b32.start [1/4] (short) %v2410, 128
    %2418 = vxpose.xlu0.b32.cont [2/4] (short) %v2412, 128
    %2419 = vxpose.xlu0.b32.cont [3/4] (short) %v2414, 128
    %2420 = vxpose.xlu0.b32.end [4/4] (short) %v2416, 128
    %v2421 = vpop.trf.xlu0
    %v2422 = vpop.trf.xlu0
    %v2423 = vpop.trf.xlu0
    %v2424 = vpop.trf.xlu0
    %v2425 = vpop.trf.xlu0
    %v2426 = vpop.trf.xlu0
    %v2427 = vpop.trf.xlu0
    %v2428 = vpop.trf.xlu0
    %v2429 = vpop.trf.xlu0
    %v2430 = vpop.trf.xlu0
    %v2431 = vpop.trf.xlu0
    %v2432 = vpop.trf.xlu0
    %v2433 = vpop.trf.xlu0
    %v2434 = vpop.trf.xlu0
    %v2435 = vpop.trf.xlu0
    %v2436 = vpop.trf.xlu0
    %2437 = vst [vmem:[#allocation7] sm:$0xff] %v2421
    %v2438 = vld [vmem:[#allocation14] sm:$0xff]
    %s2439 = scalar_lea.vmem [#allocation14], 8
    %v2440 = vld [vmem:[%s2439] sm:$0xff]
    %s2441 = scalar_lea.vmem [#allocation14], 16
    %v2442 = vld [vmem:[%s2441] sm:$0xff]
    %s2443 = scalar_lea.vmem [#allocation14], 24
    %v2444 = vld [vmem:[%s2443] sm:$0xff]
    %2445 = vxpose.xlu0.b32.start [1/4] (short) %v2438, 128
    %2446 = vxpose.xlu0.b32.cont [2/4] (short) %v2440, 128
    %2447 = vxpose.xlu0.b32.cont [3/4] (short) %v2442, 128
    %2448 = vxpose.xlu0.b32.end [4/4] (short) %v2444, 128
    %v2449 = vpop.trf.xlu0
    %v2450 = vpop.trf.xlu0
    %v2451 = vpop.trf.xlu0
    %v2452 = vpop.trf.xlu0
    %v2453 = vpop.trf.xlu0
    %v2454 = vpop.trf.xlu0
    %v2455 = vpop.trf.xlu0
    %v2456 = vpop.trf.xlu0
    %v2457 = vpop.trf.xlu0
    %v2458 = vpop.trf.xlu0
    %v2459 = vpop.trf.xlu0
    %v2460 = vpop.trf.xlu0
    %v2461 = vpop.trf.xlu0
    %v2462 = vpop.trf.xlu0
    %v2463 = vpop.trf.xlu0
    %v2464 = vpop.trf.xlu0
    %2465 = vst [vmem:[#allocation10] sm:$0xff] %v2449
    %s2467 = sshllo.u32 0, 2
    %v2469 = vld [vmem:[#allocation7] sm:%s2467]
    %s2470 = sshllo.u32 0, 2
    %2471 = vst [vmem:[#allocation8] sm:%s2470] %v2469
    %s2473 = sshllo.u32 0, 2
    %v2475 = vld [vmem:[#allocation10] sm:%s2473]
    %s2476 = sshllo.u32 0, 2
    %2477 = vst [vmem:[#allocation11] sm:%s2476] %v2475
    %s2479 = ssub.s32 32, 32
    %2480 = vsyncadd [#allocation9], %s2479
    %s2482 = sshll.u32 [#allocation8], 4
    %s2483 = int_to_ptr.vmem [resolvable:$true] %s2482
    %2485 = dma.vmem_to_hbm [thread:$0]  %s2483, 32, %s1, [#allocation9]
    // Predicated region
    $region40: #{custom-call} parent=1 // pred_check
      _
    $region41: #{custom-call} parent=1 // pred_check_branch
      %2487 = sbr.rel (0) target = $region43
    $region42: #{custom-call} parent=1 // pred_region
      // Predicated region
      $region44: #{custom-call} parent=42 // pred_check
        _
      $region45: #{custom-call} parent=42 // pred_check_branch
        %2489 = sbr.rel target = $region47
      $region46: #{custom-call} parent=42 // pred_region
        // Predicated region
        $region59: #{custom-call} parent=46 // pred_check
          _
        $region60: #{custom-call} parent=46 // pred_check_branch
          %2504 = sbr.rel (0) target = $region62
        $region61: #{custom-call} parent=46 // pred_region
          loop: start=0, step=1, limit=1
          $region63: #{custom-call} parent=61 // loop_pre_header
            _
          $region64: #{custom-call} parent=61 // loop_header
            %s2507 = sphi 0, %s2511
            %p2508 = scmp.ge.s32.totalorder %s2507, 1
            %s2512 = sphi [#allocation11], [#allocation11]
            %s2513 = sphi %s2, %s2
          $region65: #{custom-call} parent=61 // loop_header_branch
            %2510 = sbr.rel (%p2508) target = $region69
          $region66: #{custom-call} parent=61 // loop_body
            %v2514 = vld [vmem:[%s2512] sm:$0x3]
            %2515 = vst [vmem:[%s2513] sm:$0x3] %v2514
          $region67: #{custom-call} parent=61 // loop_footer
            %s2511 = sadd.s32 1, %s2507
          $region68: #{custom-call} parent=61 // loop_footer_branch
            %2506 = sbr.rel target = $region64
          $region69: #{custom-call} parent=61 // loop_exit
            _
        $region62: #{custom-call} parent=46 // pred_fallthru
          _
      $region47: #{custom-call} parent=42 // pred_fallthru
        _
      // Predicated region
      $region48: #{custom-call} parent=42 // pred_check
        _
      $region49: #{custom-call} parent=42 // pred_check_branch
        %2491 = sbr.rel (0) target = $region51
      $region50: #{custom-call} parent=42 // pred_region
        loop: start=0, step=1, limit=1
        $region52: #{custom-call} parent=50 // loop_pre_header
          _
        $region53: #{custom-call} parent=50 // loop_header
          %s2494 = sphi 0, %s2498
          %p2495 = scmp.ge.s32.totalorder %s2494, 1
          %s2499 = sphi [#allocation11], [#allocation11]
          %s2500 = sphi %s2, %s2
        $region54: #{custom-call} parent=50 // loop_header_branch
          %2497 = sbr.rel (%p2495) target = $region58
        $region55: #{custom-call} parent=50 // loop_body
          %v2501 = vld [vmem:[%s2499] sm:$0x3]
          %2502 = vst [vmem:[%s2500] sm:$0x3] %v2501
        $region56: #{custom-call} parent=50 // loop_footer
          %s2498 = sadd.s32 1, %s2494
        $region57: #{custom-call} parent=50 // loop_footer_branch
          %2493 = sbr.rel target = $region53
        $region58: #{custom-call} parent=50 // loop_exit
          _
      $region51: #{custom-call} parent=42 // pred_fallthru
        _
    $region43: #{custom-call} parent=1 // pred_fallthru
      _
    %2516 = vnop
    %2517 = dma.done [#allocation9], 32
    %2518 = vsyncpa [#allocation9], 1

// kernel: rpn_forward.1
$region0: #{rpn_forward.1}
  #allocation0 [shape = 'u32[]', space=smem, size = 0x4, offset = 0x4, fixed_abs, tag = 'smem constant byte address 0x4 - core index']
  #allocation1 [shape = 'u32[144,128]{1,0:T(1,128)}', space=vmem, size = 0x12000, scoped, tag = 'internal scratch']
  %s0 = inlined_call_operand.vmem [shape: f32[512,36], index: 0, kind: input, shape index: {}]
  %s1 = inlined_call_operand.vmem [shape: f32[36,32], index: 1, kind: input, shape index: {}]
  %s2 = inlined_call_operand.vmem [shape: f32[1,32], index: 2, kind: input, shape index: {}]
  %s3 = inlined_call_operand.vmem [shape: f32[32,128], index: 3, kind: input, shape index: {}]
  %s4 = inlined_call_operand.vmem [shape: f32[1,128], index: 4, kind: input, shape index: {}]
  %s5 = inlined_call_operand.vmem [shape: f32[256,36], index: 5, kind: input, shape index: {}]
  %s6 = inlined_call_operand.vmem [shape: f32[512,128], index: 6, kind: output, shape index: {}]
  %s7 = sld [smem:[#allocation0]]
  $region57: #{rpn_forward.1} parent=0
    _
  %s9 = ssub.s32 1, %s7
  %s10 = scalar_select 0, %s9, %s7
  loop: start=0, step=1, limit=4
  $region2: #{rpn_forward.1} parent=0 // loop_pre_header
    _
  $region3: #{rpn_forward.1} parent=0 // loop_header
    %s12 = sphi 0, %s16
    %p13 = scmp.ge.s32.totalorder %s12, 4
    %s22 = sphi 0, %s24
    %s25 = sphi 0, %s22
    %s26 = sphi 0, %s25
    %s42 = sphi 0, %s26
    %s46 = sphi 0, %s46
    %s48 = sphi 0, %s46
    %s49 = sphi 0, %s48
    %s63 = sphi 0, %s49
    %s67 = sphi 0, %s67
    %s69 = sphi 0, %s67
    %s70 = sphi 0, %s69
    %s84 = sphi 0, %s70
    %s88 = sphi 0, %s88
    %s90 = sphi 0, %s88
    %s91 = sphi 0, %s90
    %s105 = sphi 0, %s91
    %s109 = sphi 0, %s109
    %s111 = sphi 0, %s109
    %s112 = sphi 0, %s111
    %s126 = sphi 0, %s112
    %s130 = sphi 0, %s130
    %s132 = sphi 0, %s130
    %s133 = sphi 0, %s132
    %s147 = sphi 0, %s133
    %s153 = sphi 0, %s155
    %s156 = sphi 0, %s153
    %s157 = sphi 0, %s156
    %s173 = sphi 0, %s157
  $region4: #{rpn_forward.1} parent=0 // loop_header_branch
    %15 = sbr.rel (%p13) target = $region8
  $region5: #{rpn_forward.1} parent=0 // loop_body
    %s17 = ssub.s32 %s12, 1
    %s18 = ssub.s32 %s12, 2
    %s19 = sadd.s32 %s12, 1
    %s20 = ssub.s32 %s12, %s19
    %p21 = scmp.eq.s32.totalorder %s20, 0
    %s23 = sadd.s32 %s22, 1
    %s24 = scalar_select %p21, %s22, %s23
    %p27 = pneg %p21
    %p28 = scmp.eq.s32.totalorder %s12, 1
    %p29 = por %p27, %p28
    %p30 = scmp.ne.s32.totalorder %s22, %s25
    %p31 = scmp.eq.s32.totalorder %s12, 0
    %p32 = por %p30, %p31
    %p33 = scmp.ne.s32.totalorder %s22, %s25
    %p34 = scmp.eq.s32.totalorder %s17, 1
    %p35 = por %p33, %p34
    %p36 = scmp.ne.s32.totalorder %s25, %s26
    %p37 = scmp.eq.s32.totalorder %s17, 0
    %p38 = por %p36, %p37
    %p39 = scmp.ne.s32.totalorder %s25, %s26
    %p40 = scmp.eq.s32.totalorder %s18, 1
    %p41 = por %p39, %p40
    %p43 = scmp.ne.s32.totalorder %s26, %s42
    %p44 = scmp.eq.s32.totalorder %s18, 0
    %p45 = por %p43, %p44
    %s47 = sadd.s32 %s46, 1
    %p50 = scmp.eq.s32.totalorder %s12, 1
    %p51 = scmp.ne.s32.totalorder %s46, %s48
    %p52 = scmp.eq.s32.totalorder %s12, 0
    %p53 = por %p51, %p52
    %p54 = scmp.ne.s32.totalorder %s46, %s48
    %p55 = scmp.eq.s32.totalorder %s17, 1
    %p56 = por %p54, %p55
    %p57 = scmp.ne.s32.totalorder %s48, %s49
    %p58 = scmp.eq.s32.totalorder %s17, 0
    %p59 = por %p57, %p58
    %p60 = scmp.ne.s32.totalorder %s48, %s49
    %p61 = scmp.eq.s32.totalorder %s18, 1
    %p62 = por %p60, %p61
    %p64 = scmp.ne.s32.totalorder %s49, %s63
    %p65 = scmp.eq.s32.totalorder %s18, 0
    %p66 = por %p64, %p65
    %s68 = sadd.s32 %s67, 1
    %p71 = scmp.eq.s32.totalorder %s12, 1
    %p72 = scmp.ne.s32.totalorder %s67, %s69
    %p73 = scmp.eq.s32.totalorder %s12, 0
    %p74 = por %p72, %p73
    %p75 = scmp.ne.s32.totalorder %s67, %s69
    %p76 = scmp.eq.s32.totalorder %s17, 1
    %p77 = por %p75, %p76
    %p78 = scmp.ne.s32.totalorder %s69, %s70
    %p79 = scmp.eq.s32.totalorder %s17, 0
    %p80 = por %p78, %p79
    %p81 = scmp.ne.s32.totalorder %s69, %s70
    %p82 = scmp.eq.s32.totalorder %s18, 1
    %p83 = por %p81, %p82
    %p85 = scmp.ne.s32.totalorder %s70, %s84
    %p86 = scmp.eq.s32.totalorder %s18, 0
    %p87 = por %p85, %p86
    %s89 = sadd.s32 %s88, 1
    %p92 = scmp.eq.s32.totalorder %s12, 1
    %p93 = scmp.ne.s32.totalorder %s88, %s90
    %p94 = scmp.eq.s32.totalorder %s12, 0
    %p95 = por %p93, %p94
    %p96 = scmp.ne.s32.totalorder %s88, %s90
    %p97 = scmp.eq.s32.totalorder %s17, 1
    %p98 = por %p96, %p97
    %p99 = scmp.ne.s32.totalorder %s90, %s91
    %p100 = scmp.eq.s32.totalorder %s17, 0
    %p101 = por %p99, %p100
    %p102 = scmp.ne.s32.totalorder %s90, %s91
    %p103 = scmp.eq.s32.totalorder %s18, 1
    %p104 = por %p102, %p103
    %p106 = scmp.ne.s32.totalorder %s91, %s105
    %p107 = scmp.eq.s32.totalorder %s18, 0
    %p108 = por %p106, %p107
    %s110 = sadd.s32 %s109, 1
    %p113 = scmp.eq.s32.totalorder %s12, 1
    %p114 = scmp.ne.s32.totalorder %s109, %s111
    %p115 = scmp.eq.s32.totalorder %s12, 0
    %p116 = por %p114, %p115
    %p117 = scmp.ne.s32.totalorder %s109, %s111
    %p118 = scmp.eq.s32.totalorder %s17, 1
    %p119 = por %p117, %p118
    %p120 = scmp.ne.s32.totalorder %s111, %s112
    %p121 = scmp.eq.s32.totalorder %s17, 0
    %p122 = por %p120, %p121
    %p123 = scmp.ne.s32.totalorder %s111, %s112
    %p124 = scmp.eq.s32.totalorder %s18, 1
    %p125 = por %p123, %p124
    %p127 = scmp.ne.s32.totalorder %s112, %s126
    %p128 = scmp.eq.s32.totalorder %s18, 0
    %p129 = por %p127, %p128
    %s131 = sadd.s32 %s130, 1
    %p134 = scmp.eq.s32.totalorder %s12, 1
    %p135 = scmp.ne.s32.totalorder %s130, %s132
    %p136 = scmp.eq.s32.totalorder %s12, 0
    %p137 = por %p135, %p136
    %p138 = scmp.ne.s32.totalorder %s130, %s132
    %p139 = scmp.eq.s32.totalorder %s17, 1
    %p140 = por %p138, %p139
    %p141 = scmp.ne.s32.totalorder %s132, %s133
    %p142 = scmp.eq.s32.totalorder %s17, 0
    %p143 = por %p141, %p142
    %p144 = scmp.ne.s32.totalorder %s132, %s133
    %p145 = scmp.eq.s32.totalorder %s18, 1
    %p146 = por %p144, %p145
    %p148 = scmp.ne.s32.totalorder %s133, %s147
    %p149 = scmp.eq.s32.totalorder %s18, 0
    %p150 = por %p148, %p149
    %s151 = ssub.s32 %s12, %s19
    %p152 = scmp.eq.s32.totalorder %s151, 0
    %s154 = sadd.s32 %s153, 1
    %s155 = scalar_select %p152, %s153, %s154
    %p158 = pneg %p152
    %p159 = scmp.eq.s32.totalorder %s12, 1
    %p160 = por %p158, %p159
    %p161 = scmp.ne.s32.totalorder %s153, %s156
    %p162 = scmp.eq.s32.totalorder %s12, 0
    %p163 = por %p161, %p162
    %p164 = scmp.ne.s32.totalorder %s153, %s156
    %p165 = scmp.eq.s32.totalorder %s17, 1
    %p166 = por %p164, %p165
    %p167 = scmp.ne.s32.totalorder %s156, %s157
    %p168 = scmp.eq.s32.totalorder %s17, 0
    %p169 = por %p167, %p168
    %p170 = scmp.ne.s32.totalorder %s156, %s157
    %p171 = scmp.eq.s32.totalorder %s18, 1
    %p172 = por %p170, %p171
    %p174 = scmp.ne.s32.totalorder %s157, %s173
    %p175 = scmp.eq.s32.totalorder %s18, 0
    %p176 = por %p174, %p175
    %p177 = scmp.le.s32.totalorder 1, %s12
    %p178 = scmp.lt.s32.totalorder %s12, 3
    %p179 = pnand %p177, %p178
    %p180 = pneg %p179
    // Predicated region
    $region9: #{rpn_forward.1} parent=5 // pred_check
      _
    $region10: #{rpn_forward.1} parent=5 // pred_check_branch
      %182 = sbr.rel (%p179) target = $region12
    $region11: #{rpn_forward.1} parent=5 // pred_region
      %s183 = ssub.s32 %s12, 1
      // Predicated region
      $region13: #{rpn_forward.1} parent=11 // pred_check
        %p184 = pneg %p59
      $region14: #{rpn_forward.1} parent=11 // pred_check_branch
        %186 = sbr.rel (%p184) target = $region16
      $region15: #{rpn_forward.1} parent=11 // pred_region
        _
      $region16: #{rpn_forward.1} parent=11 // pred_fallthru
        _
      // Predicated region
      $region17: #{rpn_forward.1} parent=11 // pred_check
        %p187 = pneg %p80
      $region18: #{rpn_forward.1} parent=11 // pred_check_branch
        %189 = sbr.rel (%p187) target = $region20
      $region19: #{rpn_forward.1} parent=11 // pred_region
        _
      $region20: #{rpn_forward.1} parent=11 // pred_fallthru
        _
      // Predicated region
      $region21: #{rpn_forward.1} parent=11 // pred_check
        %p190 = pneg %p101
      $region22: #{rpn_forward.1} parent=11 // pred_check_branch
        %192 = sbr.rel (%p190) target = $region24
      $region23: #{rpn_forward.1} parent=11 // pred_region
        _
      $region24: #{rpn_forward.1} parent=11 // pred_fallthru
        _
      // Predicated region
      $region25: #{rpn_forward.1} parent=11 // pred_check
        %p193 = pneg %p122
      $region26: #{rpn_forward.1} parent=11 // pred_check_branch
        %195 = sbr.rel (%p193) target = $region28
      $region27: #{rpn_forward.1} parent=11 // pred_region
        _
      $region28: #{rpn_forward.1} parent=11 // pred_fallthru
        _
      // Predicated region
      $region29: #{rpn_forward.1} parent=11 // pred_check
        %p196 = pneg %p143
      $region30: #{rpn_forward.1} parent=11 // pred_check_branch
        %198 = sbr.rel (%p196) target = $region32
      $region31: #{rpn_forward.1} parent=11 // pred_region
        _
      $region32: #{rpn_forward.1} parent=11 // pred_fallthru
        _
    $region12: #{rpn_forward.1} parent=5 // pred_fallthru
      _
    %p199 = scmp.lt.s32.totalorder %s12, 2
    // Predicated region
    $region33: #{rpn_forward.1} parent=5 // pred_check
      %p200 = pneg %p199
    $region34: #{rpn_forward.1} parent=5 // pred_check_branch
      %202 = sbr.rel (%p200) target = $region36
    $region35: #{rpn_forward.1} parent=5 // pred_region
      // Predicated region
      $region37: #{rpn_forward.1} parent=35 // pred_check
        %p203 = pneg %p32
      $region38: #{rpn_forward.1} parent=35 // pred_check_branch
        %205 = sbr.rel (%p203) target = $region40
      $region39: #{rpn_forward.1} parent=35 // pred_region
        %s206 = smul.u32 32, %s12
        %p207 = scmp.lt.s32.totalorder %s206, 63
        %s208 = scalar_select %p207, %s206, 63
        %s209 = smul.addr %s208, 8
        %s210 = scalar_lea.vmem %s0, %s209
        %s211 = smul.u32 32, %s12
      $region40: #{rpn_forward.1} parent=35 // pred_fallthru
        _
    $region36: #{rpn_forward.1} parent=5 // pred_fallthru
      _
    %p212 = scmp.le.s32.totalorder 1, %s12
    %p213 = scmp.lt.s32.totalorder %s12, 3
    %p214 = pnand %p212, %p213
    %p215 = pneg %p214
    // Predicated region
    $region41: #{rpn_forward.1} parent=5 // pred_check
      _
    $region42: #{rpn_forward.1} parent=5 // pred_check_branch
      %217 = sbr.rel (%p214) target = $region44
    $region43: #{rpn_forward.1} parent=5 // pred_region
      %s218 = ssub.s32 %s12, 1
      %s219 = smul.u32 32, %s17
      %p220 = scmp.lt.s32.totalorder %s219, 63
      %s221 = scalar_select %p220, %s219, 63
      %s222 = smul.addr %s221, 8
      %s223 = scalar_lea.vmem %s0, %s222
      %p224 = pneg %p38
      %p225 = pneg %p35
      %p226 = pneg %p59
      %p227 = pneg %p56
      %p228 = pneg %p80
      %p229 = pneg %p77
      %p230 = pneg %p101
      %p231 = pneg %p98
      %p232 = pneg %p122
      %p233 = pneg %p119
      %p234 = pneg %p143
      %p235 = pneg %p140
      %p236 = pneg %p169
      %p237 = pneg %p166
      %s238 = smul.u32 32, %s17
      %p239 = scmp.lt.s32.totalorder %s238, 63
      %s240 = scalar_select %p239, %s238, 63
      %s241 = smul.addr %s240, 8
      %s242 = scalar_lea.vmem %s6, %s241
      %s243 = smul.u32 32, %s17
      %p244 = scmp.lt.s32.totalorder %s243, 63
      %s245 = scalar_select %p244, %s243, 63
      %s246 = smul.addr %s245, 8
      %s247 = scalar_lea.vmem %s0, %s246
      %s248 = smul.u32 32, %s17
      %s249 = smul.u32 32, %s17
      %p250 = scmp.lt.s32.totalorder %s249, 63
      %s251 = scalar_select %p250, %s249, 63
      %s252 = smul.addr %s251, 8
      %s253 = scalar_lea.vmem %s6, %s252
      %s254 = smul.u32 32, %s17
      %v255 = vld [vmem:[%s247] sm:$0xff]
      %v256 = vld [vmem:[%s247 + $0x8] sm:$0xff]
      %v257 = vld [vmem:[%s247 + $0x10] sm:$0xff]
      %v258 = vld [vmem:[%s247 + $0x18] sm:$0xff]
      %v259 = vld [vmem:[%s247 + $0x20] sm:$0xff]
      %v260 = vld [vmem:[%s247 + $0x28] sm:$0xff]
      %v261 = vld [vmem:[%s247 + $0x30] sm:$0xff]
      %v262 = vld [vmem:[%s247 + $0x38] sm:$0xff]
      %v263 = vld [vmem:[%s247 + $0x40] sm:$0xff]
      %v264 = vld [vmem:[%s247 + $0x48] sm:$0xff]
      %v265 = vld [vmem:[%s247 + $0x50] sm:$0xff]
      %v266 = vld [vmem:[%s247 + $0x58] sm:$0xff]
      %v267 = vld [vmem:[%s247 + $0x60] sm:$0xff]
      %v268 = vld [vmem:[%s247 + $0x68] sm:$0xff]
      %v269 = vld [vmem:[%s247 + $0x70] sm:$0xff]
      %v270 = vld [vmem:[%s247 + $0x78] sm:$0xff]
      %v271 = vld [vmem:[%s247 + $0x80] sm:$0xff]
      %v272 = vld [vmem:[%s247 + $0x88] sm:$0xff]
      %v273 = vld [vmem:[%s247 + $0x90] sm:$0xff]
      %v274 = vld [vmem:[%s247 + $0x98] sm:$0xff]
      %v275 = vld [vmem:[%s247 + $0xa0] sm:$0xff]
      %v276 = vld [vmem:[%s247 + $0xa8] sm:$0xff]
      %v277 = vld [vmem:[%s247 + $0xb0] sm:$0xff]
      %v278 = vld [vmem:[%s247 + $0xb8] sm:$0xff]
      %v279 = vld [vmem:[%s247 + $0xc0] sm:$0xff]
      %v280 = vld [vmem:[%s247 + $0xc8] sm:$0xff]
      %v281 = vld [vmem:[%s247 + $0xd0] sm:$0xff]
      %v282 = vld [vmem:[%s247 + $0xd8] sm:$0xff]
      %v283 = vld [vmem:[%s247 + $0xe0] sm:$0xff]
      %v284 = vld [vmem:[%s247 + $0xe8] sm:$0xff]
      %v285 = vld [vmem:[%s247 + $0xf0] sm:$0xff]
      %v286 = vld [vmem:[%s247 + $0xf8] sm:$0xff]
      %v287 = vld [vmem:[%s1] sm:$0xff]
      %v288 = vld [vmem:[%s1 + $0x8] sm:$0xff]
      %v289 = vld [vmem:[%s1 + $0x10] sm:$0xff]
      %v290 = vld [vmem:[%s1 + $0x18] sm:$0xff]
      %v291 = vld [vmem:[%s1 + $0x20] sm:$0xf]
      %v292 = vld [vmem:[%s2] sm:$0x1]
      %v294 = vlaneseq
      %v295 = vshrl.u32 %v294, 7
      %v296 = vsub.s32 0, %v295
      %v297 = vrot.slane %v292, %v296
      %vm299 = vcmask 293888
      %v301 = vsel %vm299, %v255, 0
      %v304 = vsel %vm299, %v256, 0
      %v307 = vsel %vm299, %v257, 0
      %v310 = vsel %vm299, %v258, 0
      %v313 = vsel %vm299, %v259, 0
      %v316 = vsel %vm299, %v260, 0
      %v319 = vsel %vm299, %v261, 0
      %v322 = vsel %vm299, %v262, 0
      %v325 = vsel %vm299, %v263, 0
      %v328 = vsel %vm299, %v264, 0
      %v331 = vsel %vm299, %v265, 0
      %v334 = vsel %vm299, %v266, 0
      %v337 = vsel %vm299, %v267, 0
      %v340 = vsel %vm299, %v268, 0
      %v343 = vsel %vm299, %v269, 0
      %v346 = vsel %vm299, %v270, 0
      %v349 = vsel %vm299, %v271, 0
      %v352 = vsel %vm299, %v272, 0
      %v355 = vsel %vm299, %v273, 0
      %v358 = vsel %vm299, %v274, 0
      %v361 = vsel %vm299, %v275, 0
      %v364 = vsel %vm299, %v276, 0
      %v367 = vsel %vm299, %v277, 0
      %v370 = vsel %vm299, %v278, 0
      %v373 = vsel %vm299, %v279, 0
      %v376 = vsel %vm299, %v280, 0
      %v379 = vsel %vm299, %v281, 0
      %v382 = vsel %vm299, %v282, 0
      %v385 = vsel %vm299, %v283, 0
      %v388 = vsel %vm299, %v284, 0
      %v391 = vsel %vm299, %v285, 0
      %v394 = vsel %vm299, %v286, 0
      %vm396 = vcmask 1043456
      %v398 = vsel %vm396, %v291, 0
      %400 = vmatprep.subr.mxu0 0.0
      %401 = vmatpush1.msra.mxu0 %v287
      %402 = vmatprep.subr.mxu0 0.0
      %403 = vmatpush1.msra.mxu0 %v288
      %404 = vmatprep.subr.mxu0 0.0
      %405 = vmatpush1.msra.mxu0 %v289
      %406 = vmatprep.subr.mxu0 0.0
      %407 = vmatpush1.msra.mxu0 %v290
      %408 = vmatprep.subr.mxu0 0.0
      %409 = vmatpush1.msra.mxu0 %v398
      %410 = vmatprep.subr.mxu0 0.0
      %411 = vmatpush1.msra.mxu0 0.0
      %412 = vmatprep.subr.mxu0 0.0
      %413 = vmatpush1.msra.mxu0 0.0
      %414 = vmatprep.subr.mxu0 0.0
      %415 = vmatpush1.msra.mxu0 0.0
      %416 = vmatprep.subr.mxu0 0.0
      %417 = vmatpush1.msra.mxu0 0.0
      %418 = vmatprep.subr.mxu0 0.0
      %419 = vmatpush1.msra.mxu0 0.0
      %420 = vmatprep.subr.mxu0 0.0
      %421 = vmatpush1.msra.mxu0 0.0
      %422 = vmatprep.subr.mxu0 0.0
      %423 = vmatpush1.msra.mxu0 0.0
      %424 = vmatprep.subr.mxu0 0.0
      %425 = vmatpush1.msra.mxu0 0.0
      %426 = vmatprep.subr.mxu0 0.0
      %427 = vmatpush1.msra.mxu0 0.0
      %428 = vmatprep.subr.mxu0 0.0
      %429 = vmatpush1.msra.mxu0 0.0
      %430 = vmatprep.subr.mxu0 0.0
      %431 = vmatpush1.msra.mxu0 0.0
      %432 = vmatprep.subr.mxu0 0.0
      %433 = vmatpush1.msra.mxu0 0.0
      %434 = vmatprep.subr.mxu0 0.0
      %435 = vmatpush1.msra.mxu0 0.0
      %436 = vmatprep.subr.mxu0 0.0
      %437 = vmatpush1.msra.mxu0 0.0
      %438 = vmatprep.subr.mxu0 0.0
      %439 = vmatpush1.msra.mxu0 0.0
      %440 = vmatprep.subr.mxu0 0.0
      %441 = vmatpush1.msra.mxu0 0.0
      %442 = vmatprep.subr.mxu0 0.0
      %443 = vmatpush1.msra.mxu0 0.0
      %444 = vmatprep.subr.mxu0 0.0
      %445 = vmatpush1.msra.mxu0 0.0
      %446 = vmatprep.subr.mxu0 0.0
      %447 = vmatpush1.msra.mxu0 0.0
      %448 = vmatprep.subr.mxu0 0.0
      %449 = vmatpush1.msra.mxu0 0.0
      %450 = vmatprep.subr.mxu0 0.0
      %451 = vmatpush1.msra.mxu0 0.0
      %452 = vmatprep.subr.mxu0 0.0
      %453 = vmatpush1.msra.mxu0 0.0
      %454 = vmatprep.subr.mxu0 0.0
      %455 = vmatpush1.msra.mxu0 0.0
      %456 = vmatprep.subr.mxu0 0.0
      %457 = vmatpush1.msra.mxu0 0.0
      %458 = vmatprep.subr.mxu0 0.0
      %459 = vmatpush1.msra.mxu0 0.0
      %460 = vmatprep.subr.mxu0 0.0
      %461 = vmatpush1.msra.mxu0 0.0
      %462 = vmatprep.subr.mxu0 0.0
      %463 = vmatpush1.msra.mxu0 0.0
      %464 = vmatprep.mubr.f32.mxu0 0.0
      %465 = vmatmul.mubr.f32.gmra.mrb[0].mxu0 %v301
      %v466 = vpop.f32.mrb[0].mxu0
      %v467 = vadd.f32 %v297, %v466
      %v468 = vpop.f32.mrb[0].mxu0
      %469 = vmatprep.mubr.f32.mxu0 0.0
      %470 = vmatmul.mubr.f32.gmra.mrb[0].mxu0 %v304
      %v471 = vpop.f32.mrb[0].mxu0
      %v472 = vadd.f32 %v297, %v471
      %v473 = vpop.f32.mrb[0].mxu0
      %474 = vmatprep.mubr.f32.mxu0 0.0
      %475 = vmatmul.mubr.f32.gmra.mrb[0].mxu0 %v307
      %v476 = vpop.f32.mrb[0].mxu0
      %v477 = vadd.f32 %v297, %v476
      %v478 = vpop.f32.mrb[0].mxu0
      %479 = vmatprep.mubr.f32.mxu0 0.0
      %480 = vmatmul.mubr.f32.gmra.mrb[0].mxu0 %v310
      %v481 = vpop.f32.mrb[0].mxu0
      %v482 = vadd.f32 %v297, %v481
      %v483 = vpop.f32.mrb[0].mxu0
      %484 = vmatprep.mubr.f32.mxu0 0.0
      %485 = vmatmul.mubr.f32.gmra.mrb[0].mxu0 %v313
      %v486 = vpop.f32.mrb[0].mxu0
      %v487 = vadd.f32 %v297, %v486
      %v488 = vpop.f32.mrb[0].mxu0
      %489 = vmatprep.mubr.f32.mxu0 0.0
      %490 = vmatmul.mubr.f32.gmra.mrb[0].mxu0 %v316
      %v491 = vpop.f32.mrb[0].mxu0
      %v492 = vadd.f32 %v297, %v491
      %v493 = vpop.f32.mrb[0].mxu0
      %494 = vmatprep.mubr.f32.mxu0 0.0
      %495 = vmatmul.mubr.f32.gmra.mrb[0].mxu0 %v319
      %v496 = vpop.f32.mrb[0].mxu0
      %v497 = vadd.f32 %v297, %v496
      %v498 = vpop.f32.mrb[0].mxu0
      %499 = vmatprep.mubr.f32.mxu0 0.0
      %500 = vmatmul.mubr.f32.gmra.mrb[0].mxu0 %v322
      %v501 = vpop.f32.mrb[0].mxu0
      %v502 = vadd.f32 %v297, %v501
      %v503 = vpop.f32.mrb[0].mxu0
      %504 = vmatprep.mubr.f32.mxu0 0.0
      %505 = vmatmul.mubr.f32.gmra.mrb[0].mxu0 %v325
      %v506 = vpop.f32.mrb[0].mxu0
      %v507 = vadd.f32 %v297, %v506
      %v508 = vpop.f32.mrb[0].mxu0
      %509 = vmatprep.mubr.f32.mxu0 0.0
      %510 = vmatmul.mubr.f32.gmra.mrb[0].mxu0 %v328
      %v511 = vpop.f32.mrb[0].mxu0
      %v512 = vadd.f32 %v297, %v511
      %v513 = vpop.f32.mrb[0].mxu0
      %514 = vmatprep.mubr.f32.mxu0 0.0
      %515 = vmatmul.mubr.f32.gmra.mrb[0].mxu0 %v331
      %v516 = vpop.f32.mrb[0].mxu0
      %v517 = vadd.f32 %v297, %v516
      %v518 = vpop.f32.mrb[0].mxu0
      %519 = vmatprep.mubr.f32.mxu0 0.0
      %520 = vmatmul.mubr.f32.gmra.mrb[0].mxu0 %v334
      %v521 = vpop.f32.mrb[0].mxu0
      %v522 = vadd.f32 %v297, %v521
      %v523 = vpop.f32.mrb[0].mxu0
      %524 = vmatprep.mubr.f32.mxu0 0.0
      %525 = vmatmul.mubr.f32.gmra.mrb[0].mxu0 %v337
      %v526 = vpop.f32.mrb[0].mxu0
      %v527 = vadd.f32 %v297, %v526
      %v528 = vpop.f32.mrb[0].mxu0
      %529 = vmatprep.mubr.f32.mxu0 0.0
      %530 = vmatmul.mubr.f32.gmra.mrb[0].mxu0 %v340
      %v531 = vpop.f32.mrb[0].mxu0
      %v532 = vadd.f32 %v297, %v531
      %v533 = vpop.f32.mrb[0].mxu0
      %534 = vmatprep.mubr.f32.mxu0 0.0
      %535 = vmatmul.mubr.f32.gmra.mrb[0].mxu0 %v343
      %v536 = vpop.f32.mrb[0].mxu0
      %v537 = vadd.f32 %v297, %v536
      %v538 = vpop.f32.mrb[0].mxu0
      %539 = vmatprep.mubr.f32.mxu0 0.0
      %540 = vmatmul.mubr.f32.gmra.mrb[0].mxu0 %v346
      %v541 = vpop.f32.mrb[0].mxu0
      %v542 = vadd.f32 %v297, %v541
      %v543 = vpop.f32.mrb[0].mxu0
      %544 = vmatprep.mubr.f32.mxu0 0.0
      %545 = vmatmul.mubr.f32.gmra.mrb[0].mxu0 %v349
      %v546 = vpop.f32.mrb[0].mxu0
      %v547 = vadd.f32 %v297, %v546
      %v548 = vpop.f32.mrb[0].mxu0
      %549 = vmatprep.mubr.f32.mxu0 0.0
      %550 = vmatmul.mubr.f32.gmra.mrb[0].mxu0 %v352
      %v551 = vpop.f32.mrb[0].mxu0
      %v552 = vadd.f32 %v297, %v551
      %v553 = vpop.f32.mrb[0].mxu0
      %554 = vmatprep.mubr.f32.mxu0 0.0
      %555 = vmatmul.mubr.f32.gmra.mrb[0].mxu0 %v355
      %v556 = vpop.f32.mrb[0].mxu0
      %v557 = vadd.f32 %v297, %v556
      %v558 = vpop.f32.mrb[0].mxu0
      %559 = vmatprep.mubr.f32.mxu0 0.0
      %560 = vmatmul.mubr.f32.gmra.mrb[0].mxu0 %v358
      %v561 = vpop.f32.mrb[0].mxu0
      %v562 = vadd.f32 %v297, %v561
      %v563 = vpop.f32.mrb[0].mxu0
      %564 = vmatprep.mubr.f32.mxu0 0.0
      %565 = vmatmul.mubr.f32.gmra.mrb[0].mxu0 %v361
      %v566 = vpop.f32.mrb[0].mxu0
      %v567 = vadd.f32 %v297, %v566
      %v568 = vpop.f32.mrb[0].mxu0
      %569 = vmatprep.mubr.f32.mxu0 0.0
      %570 = vmatmul.mubr.f32.gmra.mrb[0].mxu0 %v364
      %v571 = vpop.f32.mrb[0].mxu0
      %v572 = vadd.f32 %v297, %v571
      %v573 = vpop.f32.mrb[0].mxu0
      %574 = vmatprep.mubr.f32.mxu0 0.0
      %575 = vmatmul.mubr.f32.gmra.mrb[0].mxu0 %v367
      %v576 = vpop.f32.mrb[0].mxu0
      %v577 = vadd.f32 %v297, %v576
      %v578 = vpop.f32.mrb[0].mxu0
      %579 = vmatprep.mubr.f32.mxu0 0.0
      %580 = vmatmul.mubr.f32.gmra.mrb[0].mxu0 %v370
      %v581 = vpop.f32.mrb[0].mxu0
      %v582 = vadd.f32 %v297, %v581
      %v583 = vpop.f32.mrb[0].mxu0
      %584 = vmatprep.mubr.f32.mxu0 0.0
      %585 = vmatmul.mubr.f32.gmra.mrb[0].mxu0 %v373
      %v586 = vpop.f32.mrb[0].mxu0
      %v587 = vadd.f32 %v297, %v586
      %v588 = vpop.f32.mrb[0].mxu0
      %589 = vmatprep.mubr.f32.mxu0 0.0
      %590 = vmatmul.mubr.f32.gmra.mrb[0].mxu0 %v376
      %v591 = vpop.f32.mrb[0].mxu0
      %v592 = vadd.f32 %v297, %v591
      %v593 = vpop.f32.mrb[0].mxu0
      %594 = vmatprep.mubr.f32.mxu0 0.0
      %595 = vmatmul.mubr.f32.gmra.mrb[0].mxu0 %v379
      %v596 = vpop.f32.mrb[0].mxu0
      %v597 = vadd.f32 %v297, %v596
      %v598 = vpop.f32.mrb[0].mxu0
      %599 = vmatprep.mubr.f32.mxu0 0.0
      %600 = vmatmul.mubr.f32.gmra.mrb[0].mxu0 %v382
      %v601 = vpop.f32.mrb[0].mxu0
      %v602 = vadd.f32 %v297, %v601
      %v603 = vpop.f32.mrb[0].mxu0
      %604 = vmatprep.mubr.f32.mxu0 0.0
      %605 = vmatmul.mubr.f32.gmra.mrb[0].mxu0 %v385
      %v606 = vpop.f32.mrb[0].mxu0
      %v607 = vadd.f32 %v297, %v606
      %v608 = vpop.f32.mrb[0].mxu0
      %609 = vmatprep.mubr.f32.mxu0 0.0
      %610 = vmatmul.mubr.f32.gmra.mrb[0].mxu0 %v388
      %v611 = vpop.f32.mrb[0].mxu0
      %v612 = vadd.f32 %v297, %v611
      %v613 = vpop.f32.mrb[0].mxu0
      %614 = vmatprep.mubr.f32.mxu0 0.0
      %615 = vmatmul.mubr.f32.gmra.mrb[0].mxu0 %v391
      %v616 = vpop.f32.mrb[0].mxu0
      %v617 = vadd.f32 %v297, %v616
      %v618 = vpop.f32.mrb[0].mxu0
      %619 = vmatprep.mubr.f32.mxu0 0.0
      %620 = vmatmul.mubr.f32.gmra.mrb[0].mxu0 %v394
      %v621 = vpop.f32.mrb[0].mxu0
      %v622 = vadd.f32 %v297, %v621
      %v623 = vpop.f32.mrb[0].mxu0
      %624 = vdwg.mxu0
      %v625 = vmax.f32 %v467, 0.0
      %v626 = vmax.f32 %v472, 0.0
      %v627 = vmax.f32 %v477, 0.0
      %v628 = vmax.f32 %v482, 0.0
      %v629 = vmax.f32 %v487, 0.0
      %v630 = vmax.f32 %v492, 0.0
      %v631 = vmax.f32 %v497, 0.0
      %v632 = vmax.f32 %v502, 0.0
      %v633 = vmax.f32 %v507, 0.0
      %v634 = vmax.f32 %v512, 0.0
      %v635 = vmax.f32 %v517, 0.0
      %v636 = vmax.f32 %v522, 0.0
      %v637 = vmax.f32 %v527, 0.0
      %v638 = vmax.f32 %v532, 0.0
      %v639 = vmax.f32 %v537, 0.0
      %v640 = vmax.f32 %v542, 0.0
      %v641 = vmax.f32 %v547, 0.0
      %v642 = vmax.f32 %v552, 0.0
      %v643 = vmax.f32 %v557, 0.0
      %v644 = vmax.f32 %v562, 0.0
      %v645 = vmax.f32 %v567, 0.0
      %v646 = vmax.f32 %v572, 0.0
      %v647 = vmax.f32 %v577, 0.0
      %v648 = vmax.f32 %v582, 0.0
      %v649 = vmax.f32 %v587, 0.0
      %v650 = vmax.f32 %v592, 0.0
      %v651 = vmax.f32 %v597, 0.0
      %v652 = vmax.f32 %v602, 0.0
      %v653 = vmax.f32 %v607, 0.0
      %v654 = vmax.f32 %v612, 0.0
      %v655 = vmax.f32 %v617, 0.0
      %v656 = vmax.f32 %v622, 0.0
      %v657 = vld [vmem:[%s3] sm:$0xff]
      %v658 = vld [vmem:[%s3 + $0x8] sm:$0xff]
      %v659 = vld [vmem:[%s3 + $0x10] sm:$0xff]
      %v660 = vld [vmem:[%s3 + $0x18] sm:$0xff]
      %v661 = vld [vmem:[%s4] sm:$0x1]
      %v663 = vlaneseq
      %v664 = vshrl.u32 %v663, 7
      %v665 = vsub.s32 0, %v664
      %v666 = vrot.slane %v661, %v665
      %vm668 = vcmask 261120
      %v670 = vsel %vm668, %v625, 0
      %v673 = vsel %vm668, %v626, 0
      %v676 = vsel %vm668, %v627, 0
      %v679 = vsel %vm668, %v628, 0
      %v682 = vsel %vm668, %v629, 0
      %v685 = vsel %vm668, %v630, 0
      %v688 = vsel %vm668, %v631, 0
      %v691 = vsel %vm668, %v632, 0
      %v694 = vsel %vm668, %v633, 0
      %v697 = vsel %vm668, %v634, 0
      %v700 = vsel %vm668, %v635, 0
      %v703 = vsel %vm668, %v636, 0
      %v706 = vsel %vm668, %v637, 0
      %v709 = vsel %vm668, %v638, 0
      %v712 = vsel %vm668, %v639, 0
      %v715 = vsel %vm668, %v640, 0
      %v718 = vsel %vm668, %v641, 0
      %v721 = vsel %vm668, %v642, 0
      %v724 = vsel %vm668, %v643, 0
      %v727 = vsel %vm668, %v644, 0
      %v730 = vsel %vm668, %v645, 0
      %v733 = vsel %vm668, %v646, 0
      %v736 = vsel %vm668, %v647, 0
      %v739 = vsel %vm668, %v648, 0
      %v742 = vsel %vm668, %v649, 0
      %v745 = vsel %vm668, %v650, 0
      %v748 = vsel %vm668, %v651, 0
      %v751 = vsel %vm668, %v652, 0
      %v754 = vsel %vm668, %v653, 0
      %v757 = vsel %vm668, %v654, 0
      %v760 = vsel %vm668, %v655, 0
      %v763 = vsel %vm668, %v656, 0
      %765 = vmatprep.subr.mxu0 0.0
      %766 = vmatpush1.msra.mxu0 %v657
      %767 = vmatprep.subr.mxu0 0.0
      %768 = vmatpush1.msra.mxu0 %v658
      %769 = vmatprep.subr.mxu0 0.0
      %770 = vmatpush1.msra.mxu0 %v659
      %771 = vmatprep.subr.mxu0 0.0
      %772 = vmatpush1.msra.mxu0 %v660
      %773 = vmatprep.subr.mxu0 0.0
      %774 = vmatpush1.msra.mxu0 0.0
      %775 = vmatprep.subr.mxu0 0.0
      %776 = vmatpush1.msra.mxu0 0.0
      %777 = vmatprep.subr.mxu0 0.0
      %778 = vmatpush1.msra.mxu0 0.0
      %779 = vmatprep.subr.mxu0 0.0
      %780 = vmatpush1.msra.mxu0 0.0
      %781 = vmatprep.subr.mxu0 0.0
      %782 = vmatpush1.msra.mxu0 0.0
      %783 = vmatprep.subr.mxu0 0.0
      %784 = vmatpush1.msra.mxu0 0.0
      %785 = vmatprep.subr.mxu0 0.0
      %786 = vmatpush1.msra.mxu0 0.0
      %787 = vmatprep.subr.mxu0 0.0
      %788 = vmatpush1.msra.mxu0 0.0
      %789 = vmatprep.subr.mxu0 0.0
      %790 = vmatpush1.msra.mxu0 0.0
      %791 = vmatprep.subr.mxu0 0.0
      %792 = vmatpush1.msra.mxu0 0.0
      %793 = vmatprep.subr.mxu0 0.0
      %794 = vmatpush1.msra.mxu0 0.0
      %795 = vmatprep.subr.mxu0 0.0
      %796 = vmatpush1.msra.mxu0 0.0
      %797 = vmatprep.subr.mxu0 0.0
      %798 = vmatpush1.msra.mxu0 0.0
      %799 = vmatprep.subr.mxu0 0.0
      %800 = vmatpush1.msra.mxu0 0.0
      %801 = vmatprep.subr.mxu0 0.0
      %802 = vmatpush1.msra.mxu0 0.0
      %803 = vmatprep.subr.mxu0 0.0
      %804 = vmatpush1.msra.mxu0 0.0
      %805 = vmatprep.subr.mxu0 0.0
      %806 = vmatpush1.msra.mxu0 0.0
      %807 = vmatprep.subr.mxu0 0.0
      %808 = vmatpush1.msra.mxu0 0.0
      %809 = vmatprep.subr.mxu0 0.0
      %810 = vmatpush1.msra.mxu0 0.0
      %811 = vmatprep.subr.mxu0 0.0
      %812 = vmatpush1.msra.mxu0 0.0
      %813 = vmatprep.subr.mxu0 0.0
      %814 = vmatpush1.msra.mxu0 0.0
      %815 = vmatprep.subr.mxu0 0.0
      %816 = vmatpush1.msra.mxu0 0.0
      %817 = vmatprep.subr.mxu0 0.0
      %818 = vmatpush1.msra.mxu0 0.0
      %819 = vmatprep.subr.mxu0 0.0
      %820 = vmatpush1.msra.mxu0 0.0
      %821 = vmatprep.subr.mxu0 0.0
      %822 = vmatpush1.msra.mxu0 0.0
      %823 = vmatprep.subr.mxu0 0.0
      %824 = vmatpush1.msra.mxu0 0.0
      %825 = vmatprep.subr.mxu0 0.0
      %826 = vmatpush1.msra.mxu0 0.0
      %827 = vmatprep.subr.mxu0 0.0
      %828 = vmatpush1.msra.mxu0 0.0
      %829 = vmatprep.mubr.f32.mxu0 0.0
      %830 = vmatmul.mubr.f32.gmra.mrb[0].mxu0 %v670
      %v831 = vpop.f32.mrb[0].mxu0
      %v832 = vadd.f32 %v666, %v831
      %v833 = vpop.f32.mrb[0].mxu0
      %834 = vmatprep.mubr.f32.mxu0 0.0
      %835 = vmatmul.mubr.f32.gmra.mrb[0].mxu0 %v673
      %v836 = vpop.f32.mrb[0].mxu0
      %v837 = vadd.f32 %v666, %v836
      %v838 = vpop.f32.mrb[0].mxu0
      %839 = vmatprep.mubr.f32.mxu0 0.0
      %840 = vmatmul.mubr.f32.gmra.mrb[0].mxu0 %v676
      %v841 = vpop.f32.mrb[0].mxu0
      %v842 = vadd.f32 %v666, %v841
      %v843 = vpop.f32.mrb[0].mxu0
      %844 = vmatprep.mubr.f32.mxu0 0.0
      %845 = vmatmul.mubr.f32.gmra.mrb[0].mxu0 %v679
      %v846 = vpop.f32.mrb[0].mxu0
      %v847 = vadd.f32 %v666, %v846
      %v848 = vpop.f32.mrb[0].mxu0
      %849 = vmatprep.mubr.f32.mxu0 0.0
      %850 = vmatmul.mubr.f32.gmra.mrb[0].mxu0 %v682
      %v851 = vpop.f32.mrb[0].mxu0
      %v852 = vadd.f32 %v666, %v851
      %v853 = vpop.f32.mrb[0].mxu0
      %854 = vmatprep.mubr.f32.mxu0 0.0
      %855 = vmatmul.mubr.f32.gmra.mrb[0].mxu0 %v685
      %v856 = vpop.f32.mrb[0].mxu0
      %v857 = vadd.f32 %v666, %v856
      %v858 = vpop.f32.mrb[0].mxu0
      %859 = vmatprep.mubr.f32.mxu0 0.0
      %860 = vmatmul.mubr.f32.gmra.mrb[0].mxu0 %v688
      %v861 = vpop.f32.mrb[0].mxu0
      %v862 = vadd.f32 %v666, %v861
      %v863 = vpop.f32.mrb[0].mxu0
      %864 = vmatprep.mubr.f32.mxu0 0.0
      %865 = vmatmul.mubr.f32.gmra.mrb[0].mxu0 %v691
      %v866 = vpop.f32.mrb[0].mxu0
      %v867 = vadd.f32 %v666, %v866
      %v868 = vpop.f32.mrb[0].mxu0
      %869 = vmatprep.mubr.f32.mxu0 0.0
      %870 = vmatmul.mubr.f32.gmra.mrb[0].mxu0 %v694
      %v871 = vpop.f32.mrb[0].mxu0
      %v872 = vadd.f32 %v666, %v871
      %v873 = vpop.f32.mrb[0].mxu0
      %874 = vmatprep.mubr.f32.mxu0 0.0
      %875 = vmatmul.mubr.f32.gmra.mrb[0].mxu0 %v697
      %v876 = vpop.f32.mrb[0].mxu0
      %v877 = vadd.f32 %v666, %v876
      %v878 = vpop.f32.mrb[0].mxu0
      %879 = vmatprep.mubr.f32.mxu0 0.0
      %880 = vmatmul.mubr.f32.gmra.mrb[0].mxu0 %v700
      %v881 = vpop.f32.mrb[0].mxu0
      %v882 = vadd.f32 %v666, %v881
      %v883 = vpop.f32.mrb[0].mxu0
      %884 = vmatprep.mubr.f32.mxu0 0.0
      %885 = vmatmul.mubr.f32.gmra.mrb[0].mxu0 %v703
      %v886 = vpop.f32.mrb[0].mxu0
      %v887 = vadd.f32 %v666, %v886
      %v888 = vpop.f32.mrb[0].mxu0
      %889 = vmatprep.mubr.f32.mxu0 0.0
      %890 = vmatmul.mubr.f32.gmra.mrb[0].mxu0 %v706
      %v891 = vpop.f32.mrb[0].mxu0
      %v892 = vadd.f32 %v666, %v891
      %v893 = vpop.f32.mrb[0].mxu0
      %894 = vmatprep.mubr.f32.mxu0 0.0
      %895 = vmatmul.mubr.f32.gmra.mrb[0].mxu0 %v709
      %v896 = vpop.f32.mrb[0].mxu0
      %v897 = vadd.f32 %v666, %v896
      %v898 = vpop.f32.mrb[0].mxu0
      %899 = vmatprep.mubr.f32.mxu0 0.0
      %900 = vmatmul.mubr.f32.gmra.mrb[0].mxu0 %v712
      %v901 = vpop.f32.mrb[0].mxu0
      %v902 = vadd.f32 %v666, %v901
      %v903 = vpop.f32.mrb[0].mxu0
      %904 = vmatprep.mubr.f32.mxu0 0.0
      %905 = vmatmul.mubr.f32.gmra.mrb[0].mxu0 %v715
      %v906 = vpop.f32.mrb[0].mxu0
      %v907 = vadd.f32 %v666, %v906
      %v908 = vpop.f32.mrb[0].mxu0
      %909 = vmatprep.mubr.f32.mxu0 0.0
      %910 = vmatmul.mubr.f32.gmra.mrb[0].mxu0 %v718
      %v911 = vpop.f32.mrb[0].mxu0
      %v912 = vadd.f32 %v666, %v911
      %v913 = vpop.f32.mrb[0].mxu0
      %914 = vmatprep.mubr.f32.mxu0 0.0
      %915 = vmatmul.mubr.f32.gmra.mrb[0].mxu0 %v721
      %v916 = vpop.f32.mrb[0].mxu0
      %v917 = vadd.f32 %v666, %v916
      %v918 = vpop.f32.mrb[0].mxu0
      %919 = vmatprep.mubr.f32.mxu0 0.0
      %920 = vmatmul.mubr.f32.gmra.mrb[0].mxu0 %v724
      %v921 = vpop.f32.mrb[0].mxu0
      %v922 = vadd.f32 %v666, %v921
      %v923 = vpop.f32.mrb[0].mxu0
      %924 = vmatprep.mubr.f32.mxu0 0.0
      %925 = vmatmul.mubr.f32.gmra.mrb[0].mxu0 %v727
      %v926 = vpop.f32.mrb[0].mxu0
      %v927 = vadd.f32 %v666, %v926
      %v928 = vpop.f32.mrb[0].mxu0
      %929 = vmatprep.mubr.f32.mxu0 0.0
      %930 = vmatmul.mubr.f32.gmra.mrb[0].mxu0 %v730
      %v931 = vpop.f32.mrb[0].mxu0
      %v932 = vadd.f32 %v666, %v931
      %v933 = vpop.f32.mrb[0].mxu0
      %934 = vmatprep.mubr.f32.mxu0 0.0
      %935 = vmatmul.mubr.f32.gmra.mrb[0].mxu0 %v733
      %v936 = vpop.f32.mrb[0].mxu0
      %v937 = vadd.f32 %v666, %v936
      %v938 = vpop.f32.mrb[0].mxu0
      %939 = vmatprep.mubr.f32.mxu0 0.0
      %940 = vmatmul.mubr.f32.gmra.mrb[0].mxu0 %v736
      %v941 = vpop.f32.mrb[0].mxu0
      %v942 = vadd.f32 %v666, %v941
      %v943 = vpop.f32.mrb[0].mxu0
      %944 = vmatprep.mubr.f32.mxu0 0.0
      %945 = vmatmul.mubr.f32.gmra.mrb[0].mxu0 %v739
      %v946 = vpop.f32.mrb[0].mxu0
      %v947 = vadd.f32 %v666, %v946
      %v948 = vpop.f32.mrb[0].mxu0
      %949 = vmatprep.mubr.f32.mxu0 0.0
      %950 = vmatmul.mubr.f32.gmra.mrb[0].mxu0 %v742
      %v951 = vpop.f32.mrb[0].mxu0
      %v952 = vadd.f32 %v666, %v951
      %v953 = vpop.f32.mrb[0].mxu0
      %954 = vmatprep.mubr.f32.mxu0 0.0
      %955 = vmatmul.mubr.f32.gmra.mrb[0].mxu0 %v745
      %v956 = vpop.f32.mrb[0].mxu0
      %v957 = vadd.f32 %v666, %v956
      %v958 = vpop.f32.mrb[0].mxu0
      %959 = vmatprep.mubr.f32.mxu0 0.0
      %960 = vmatmul.mubr.f32.gmra.mrb[0].mxu0 %v748
      %v961 = vpop.f32.mrb[0].mxu0
      %v962 = vadd.f32 %v666, %v961
      %v963 = vpop.f32.mrb[0].mxu0
      %964 = vmatprep.mubr.f32.mxu0 0.0
      %965 = vmatmul.mubr.f32.gmra.mrb[0].mxu0 %v751
      %v966 = vpop.f32.mrb[0].mxu0
      %v967 = vadd.f32 %v666, %v966
      %v968 = vpop.f32.mrb[0].mxu0
      %969 = vmatprep.mubr.f32.mxu0 0.0
      %970 = vmatmul.mubr.f32.gmra.mrb[0].mxu0 %v754
      %v971 = vpop.f32.mrb[0].mxu0
      %v972 = vadd.f32 %v666, %v971
      %v973 = vpop.f32.mrb[0].mxu0
      %974 = vmatprep.mubr.f32.mxu0 0.0
      %975 = vmatmul.mubr.f32.gmra.mrb[0].mxu0 %v757
      %v976 = vpop.f32.mrb[0].mxu0
      %v977 = vadd.f32 %v666, %v976
      %v978 = vpop.f32.mrb[0].mxu0
      %979 = vmatprep.mubr.f32.mxu0 0.0
      %980 = vmatmul.mubr.f32.gmra.mrb[0].mxu0 %v760
      %v981 = vpop.f32.mrb[0].mxu0
      %v982 = vadd.f32 %v666, %v981
      %v983 = vpop.f32.mrb[0].mxu0
      %984 = vmatprep.mubr.f32.mxu0 0.0
      %985 = vmatmul.mubr.f32.gmra.mrb[0].mxu0 %v763
      %v986 = vpop.f32.mrb[0].mxu0
      %v987 = vadd.f32 %v666, %v986
      %v988 = vpop.f32.mrb[0].mxu0
      %989 = vdwg.mxu0
      %990 = vst [vmem:[%s253] sm:$0xff] %v832
      %991 = vst [vmem:[%s253 + $0x8] sm:$0xff] %v837
      %992 = vst [vmem:[%s253 + $0x10] sm:$0xff] %v842
      %993 = vst [vmem:[%s253 + $0x18] sm:$0xff] %v847
      %994 = vst [vmem:[%s253 + $0x20] sm:$0xff] %v852
      %995 = vst [vmem:[%s253 + $0x28] sm:$0xff] %v857
      %996 = vst [vmem:[%s253 + $0x30] sm:$0xff] %v862
      %997 = vst [vmem:[%s253 + $0x38] sm:$0xff] %v867
      %998 = vst [vmem:[%s253 + $0x40] sm:$0xff] %v872
      %999 = vst [vmem:[%s253 + $0x48] sm:$0xff] %v877
      %1000 = vst [vmem:[%s253 + $0x50] sm:$0xff] %v882
      %1001 = vst [vmem:[%s253 + $0x58] sm:$0xff] %v887
      %1002 = vst [vmem:[%s253 + $0x60] sm:$0xff] %v892
      %1003 = vst [vmem:[%s253 + $0x68] sm:$0xff] %v897
      %1004 = vst [vmem:[%s253 + $0x70] sm:$0xff] %v902
      %1005 = vst [vmem:[%s253 + $0x78] sm:$0xff] %v907
      %1006 = vst [vmem:[%s253 + $0x80] sm:$0xff] %v912
      %1007 = vst [vmem:[%s253 + $0x88] sm:$0xff] %v917
      %1008 = vst [vmem:[%s253 + $0x90] sm:$0xff] %v922
      %1009 = vst [vmem:[%s253 + $0x98] sm:$0xff] %v927
      %1010 = vst [vmem:[%s253 + $0xa0] sm:$0xff] %v932
      %1011 = vst [vmem:[%s253 + $0xa8] sm:$0xff] %v937
      %1012 = vst [vmem:[%s253 + $0xb0] sm:$0xff] %v942
      %1013 = vst [vmem:[%s253 + $0xb8] sm:$0xff] %v947
      %1014 = vst [vmem:[%s253 + $0xc0] sm:$0xff] %v952
      %1015 = vst [vmem:[%s253 + $0xc8] sm:$0xff] %v957
      %1016 = vst [vmem:[%s253 + $0xd0] sm:$0xff] %v962
      %1017 = vst [vmem:[%s253 + $0xd8] sm:$0xff] %v967
      %1018 = vst [vmem:[%s253 + $0xe0] sm:$0xff] %v972
      %1019 = vst [vmem:[%s253 + $0xe8] sm:$0xff] %v977
      %1020 = vst [vmem:[%s253 + $0xf0] sm:$0xff] %v982
      %1021 = vst [vmem:[%s253 + $0xf8] sm:$0xff] %v987
      %1054 = vrot.lane.b32.xlu0 %v832, 119
      %v1055 = vpop.permute.xlu0 %1054
      %1056 = vrot.lane.b32.xlu0 %v837, 119
      %v1057 = vpop.permute.xlu0 %1056
      %1058 = vrot.lane.b32.xlu0 %v842, 119
      %v1059 = vpop.permute.xlu0 %1058
      %1060 = vrot.lane.b32.xlu0 %v847, 119
      %v1061 = vpop.permute.xlu0 %1060
      %1062 = vrot.lane.b32.xlu0 %v852, 119
      %v1063 = vpop.permute.xlu0 %1062
      %1064 = vrot.lane.b32.xlu0 %v857, 119
      %v1065 = vpop.permute.xlu0 %1064
      %1066 = vrot.lane.b32.xlu0 %v862, 119
      %v1067 = vpop.permute.xlu0 %1066
      %1068 = vrot.lane.b32.xlu0 %v867, 119
      %v1069 = vpop.permute.xlu0 %1068
      %1070 = vrot.lane.b32.xlu0 %v872, 119
      %v1071 = vpop.permute.xlu0 %1070
      %1072 = vrot.lane.b32.xlu0 %v877, 119
      %v1073 = vpop.permute.xlu0 %1072
      %1074 = vrot.lane.b32.xlu0 %v882, 119
      %v1075 = vpop.permute.xlu0 %1074
      %1076 = vrot.lane.b32.xlu0 %v887, 119
      %v1077 = vpop.permute.xlu0 %1076
      %1078 = vrot.lane.b32.xlu0 %v892, 119
      %v1079 = vpop.permute.xlu0 %1078
      %1080 = vrot.lane.b32.xlu0 %v897, 119
      %v1081 = vpop.permute.xlu0 %1080
      %1082 = vrot.lane.b32.xlu0 %v902, 119
      %v1083 = vpop.permute.xlu0 %1082
      %1084 = vrot.lane.b32.xlu0 %v907, 119
      %v1085 = vpop.permute.xlu0 %1084
      %1086 = vrot.lane.b32.xlu0 %v912, 119
      %v1087 = vpop.permute.xlu0 %1086
      %1088 = vrot.lane.b32.xlu0 %v917, 119
      %v1089 = vpop.permute.xlu0 %1088
      %1090 = vrot.lane.b32.xlu0 %v922, 119
      %v1091 = vpop.permute.xlu0 %1090
      %1092 = vrot.lane.b32.xlu0 %v927, 119
      %v1093 = vpop.permute.xlu0 %1092
      %1094 = vrot.lane.b32.xlu0 %v932, 119
      %v1095 = vpop.permute.xlu0 %1094
      %1096 = vrot.lane.b32.xlu0 %v937, 119
      %v1097 = vpop.permute.xlu0 %1096
      %1098 = vrot.lane.b32.xlu0 %v942, 119
      %v1099 = vpop.permute.xlu0 %1098
      %1100 = vrot.lane.b32.xlu0 %v947, 119
      %v1101 = vpop.permute.xlu0 %1100
      %1102 = vrot.lane.b32.xlu0 %v952, 119
      %v1103 = vpop.permute.xlu0 %1102
      %1104 = vrot.lane.b32.xlu0 %v957, 119
      %v1105 = vpop.permute.xlu0 %1104
      %1106 = vrot.lane.b32.xlu0 %v962, 119
      %v1107 = vpop.permute.xlu0 %1106
      %1108 = vrot.lane.b32.xlu0 %v967, 119
      %v1109 = vpop.permute.xlu0 %1108
      %1110 = vrot.lane.b32.xlu0 %v972, 119
      %v1111 = vpop.permute.xlu0 %1110
      %1112 = vrot.lane.b32.xlu0 %v977, 119
      %v1113 = vpop.permute.xlu0 %1112
      %1114 = vrot.lane.b32.xlu0 %v982, 119
      %v1115 = vpop.permute.xlu0 %1114
      %1116 = vrot.lane.b32.xlu0 %v987, 119
      %v1117 = vpop.permute.xlu0 %1116
      %v1150 = vmax.f32 %v832, %v1055
      %v1151 = vmax.f32 %v837, %v1057
      %v1152 = vmax.f32 %v842, %v1059
      %v1153 = vmax.f32 %v847, %v1061
      %v1154 = vmax.f32 %v852, %v1063
      %v1155 = vmax.f32 %v857, %v1065
      %v1156 = vmax.f32 %v862, %v1067
      %v1157 = vmax.f32 %v867, %v1069
      %v1158 = vmax.f32 %v872, %v1071
      %v1159 = vmax.f32 %v877, %v1073
      %v1160 = vmax.f32 %v882, %v1075
      %v1161 = vmax.f32 %v887, %v1077
      %v1162 = vmax.f32 %v892, %v1079
      %v1163 = vmax.f32 %v897, %v1081
      %v1164 = vmax.f32 %v902, %v1083
      %v1165 = vmax.f32 %v907, %v1085
      %v1166 = vmax.f32 %v912, %v1087
      %v1167 = vmax.f32 %v917, %v1089
      %v1168 = vmax.f32 %v922, %v1091
      %v1169 = vmax.f32 %v927, %v1093
      %v1170 = vmax.f32 %v932, %v1095
      %v1171 = vmax.f32 %v937, %v1097
      %v1172 = vmax.f32 %v942, %v1099
      %v1173 = vmax.f32 %v947, %v1101
      %v1174 = vmax.f32 %v952, %v1103
      %v1175 = vmax.f32 %v957, %v1105
      %v1176 = vmax.f32 %v962, %v1107
      %v1177 = vmax.f32 %v967, %v1109
      %v1178 = vmax.f32 %v972, %v1111
      %v1179 = vmax.f32 %v977, %v1113
      %v1180 = vmax.f32 %v982, %v1115
      %v1181 = vmax.f32 %v987, %v1117
      %v1182 = vsub.f32 %v832, %v1150
      %v1183 = vsub.f32 %v837, %v1151
      %v1184 = vsub.f32 %v842, %v1152
      %v1185 = vsub.f32 %v847, %v1153
      %v1186 = vsub.f32 %v852, %v1154
      %v1187 = vsub.f32 %v857, %v1155
      %v1188 = vsub.f32 %v862, %v1156
      %v1189 = vsub.f32 %v867, %v1157
      %v1190 = vsub.f32 %v872, %v1158
      %v1191 = vsub.f32 %v877, %v1159
      %v1192 = vsub.f32 %v882, %v1160
      %v1193 = vsub.f32 %v887, %v1161
      %v1194 = vsub.f32 %v892, %v1162
      %v1195 = vsub.f32 %v897, %v1163
      %v1196 = vsub.f32 %v902, %v1164
      %v1197 = vsub.f32 %v907, %v1165
      %v1198 = vsub.f32 %v912, %v1166
      %v1199 = vsub.f32 %v917, %v1167
      %v1200 = vsub.f32 %v922, %v1168
      %v1201 = vsub.f32 %v927, %v1169
      %v1202 = vsub.f32 %v932, %v1170
      %v1203 = vsub.f32 %v937, %v1171
      %v1204 = vsub.f32 %v942, %v1172
      %v1205 = vsub.f32 %v947, %v1173
      %v1206 = vsub.f32 %v952, %v1174
      %v1207 = vsub.f32 %v957, %v1175
      %v1208 = vsub.f32 %v962, %v1176
      %v1209 = vsub.f32 %v967, %v1177
      %v1210 = vsub.f32 %v972, %v1178
      %v1211 = vsub.f32 %v977, %v1179
      %v1212 = vsub.f32 %v982, %v1180
      %v1213 = vsub.f32 %v987, %v1181
      %v1214 = vmul.f32 %v1182, 1.442695
      %v1215 = vpow.pop %v1214
      %v1216 = vmul.f32 %v1183, 1.442695
      %v1217 = vpow.pop %v1216
      %v1218 = vmul.f32 %v1184, 1.442695
      %v1219 = vpow.pop %v1218
      %v1220 = vmul.f32 %v1185, 1.442695
      %v1221 = vpow.pop %v1220
      %v1222 = vmul.f32 %v1186, 1.442695
      %v1223 = vpow.pop %v1222
      %v1224 = vmul.f32 %v1187, 1.442695
      %v1225 = vpow.pop %v1224
      %v1226 = vmul.f32 %v1188, 1.442695
      %v1227 = vpow.pop %v1226
      %v1228 = vmul.f32 %v1189, 1.442695
      %v1229 = vpow.pop %v1228
      %v1230 = vmul.f32 %v1190, 1.442695
      %v1231 = vpow.pop %v1230
      %v1232 = vmul.f32 %v1191, 1.442695
      %v1233 = vpow.pop %v1232
      %v1234 = vmul.f32 %v1192, 1.442695
      %v1235 = vpow.pop %v1234
      %v1236 = vmul.f32 %v1193, 1.442695
      %v1237 = vpow.pop %v1236
      %v1238 = vmul.f32 %v1194, 1.442695
      %v1239 = vpow.pop %v1238
      %v1240 = vmul.f32 %v1195, 1.442695
      %v1241 = vpow.pop %v1240
      %v1242 = vmul.f32 %v1196, 1.442695
      %v1243 = vpow.pop %v1242
      %v1244 = vmul.f32 %v1197, 1.442695
      %v1245 = vpow.pop %v1244
      %v1246 = vmul.f32 %v1198, 1.442695
      %v1247 = vpow.pop %v1246
      %v1248 = vmul.f32 %v1199, 1.442695
      %v1249 = vpow.pop %v1248
      %v1250 = vmul.f32 %v1200, 1.442695
      %v1251 = vpow.pop %v1250
      %v1252 = vmul.f32 %v1201, 1.442695
      %v1253 = vpow.pop %v1252
      %v1254 = vmul.f32 %v1202, 1.442695
      %v1255 = vpow.pop %v1254
      %v1256 = vmul.f32 %v1203, 1.442695
      %v1257 = vpow.pop %v1256
      %v1258 = vmul.f32 %v1204, 1.442695
      %v1259 = vpow.pop %v1258
      %v1260 = vmul.f32 %v1205, 1.442695
      %v1261 = vpow.pop %v1260
      %v1262 = vmul.f32 %v1206, 1.442695
      %v1263 = vpow.pop %v1262
      %v1264 = vmul.f32 %v1207, 1.442695
      %v1265 = vpow.pop %v1264
      %v1266 = vmul.f32 %v1208, 1.442695
      %v1267 = vpow.pop %v1266
      %v1268 = vmul.f32 %v1209, 1.442695
      %v1269 = vpow.pop %v1268
      %v1270 = vmul.f32 %v1210, 1.442695
      %v1271 = vpow.pop %v1270
      %v1272 = vmul.f32 %v1211, 1.442695
      %v1273 = vpow.pop %v1272
      %v1274 = vmul.f32 %v1212, 1.442695
      %v1275 = vpow.pop %v1274
      %v1276 = vmul.f32 %v1213, 1.442695
      %v1277 = vpow.pop %v1276
      %1310 = vrot.lane.b32.xlu0 %v1150, 9
      %v1311 = vpop.permute.xlu0 %1310
      %1312 = vrot.lane.b32.xlu0 %v1151, 9
      %v1313 = vpop.permute.xlu0 %1312
      %1314 = vrot.lane.b32.xlu0 %v1152, 9
      %v1315 = vpop.permute.xlu0 %1314
      %1316 = vrot.lane.b32.xlu0 %v1153, 9
      %v1317 = vpop.permute.xlu0 %1316
      %1318 = vrot.lane.b32.xlu0 %v1154, 9
      %v1319 = vpop.permute.xlu0 %1318
      %1320 = vrot.lane.b32.xlu0 %v1155, 9
      %v1321 = vpop.permute.xlu0 %1320
      %1322 = vrot.lane.b32.xlu0 %v1156, 9
      %v1323 = vpop.permute.xlu0 %1322
      %1324 = vrot.lane.b32.xlu0 %v1157, 9
      %v1325 = vpop.permute.xlu0 %1324
      %1326 = vrot.lane.b32.xlu0 %v1158, 9
      %v1327 = vpop.permute.xlu0 %1326
      %1328 = vrot.lane.b32.xlu0 %v1159, 9
      %v1329 = vpop.permute.xlu0 %1328
      %1330 = vrot.lane.b32.xlu0 %v1160, 9
      %v1331 = vpop.permute.xlu0 %1330
      %1332 = vrot.lane.b32.xlu0 %v1161, 9
      %v1333 = vpop.permute.xlu0 %1332
      %1334 = vrot.lane.b32.xlu0 %v1162, 9
      %v1335 = vpop.permute.xlu0 %1334
      %1336 = vrot.lane.b32.xlu0 %v1163, 9
      %v1337 = vpop.permute.xlu0 %1336
      %1338 = vrot.lane.b32.xlu0 %v1164, 9
      %v1339 = vpop.permute.xlu0 %1338
      %1340 = vrot.lane.b32.xlu0 %v1165, 9
      %v1341 = vpop.permute.xlu0 %1340
      %1342 = vrot.lane.b32.xlu0 %v1166, 9
      %v1343 = vpop.permute.xlu0 %1342
      %1344 = vrot.lane.b32.xlu0 %v1167, 9
      %v1345 = vpop.permute.xlu0 %1344
      %1346 = vrot.lane.b32.xlu0 %v1168, 9
      %v1347 = vpop.permute.xlu0 %1346
      %1348 = vrot.lane.b32.xlu0 %v1169, 9
      %v1349 = vpop.permute.xlu0 %1348
      %1350 = vrot.lane.b32.xlu0 %v1170, 9
      %v1351 = vpop.permute.xlu0 %1350
      %1352 = vrot.lane.b32.xlu0 %v1171, 9
      %v1353 = vpop.permute.xlu0 %1352
      %1354 = vrot.lane.b32.xlu0 %v1172, 9
      %v1355 = vpop.permute.xlu0 %1354
      %1356 = vrot.lane.b32.xlu0 %v1173, 9
      %v1357 = vpop.permute.xlu0 %1356
      %1358 = vrot.lane.b32.xlu0 %v1174, 9
      %v1359 = vpop.permute.xlu0 %1358
      %1360 = vrot.lane.b32.xlu0 %v1175, 9
      %v1361 = vpop.permute.xlu0 %1360
      %1362 = vrot.lane.b32.xlu0 %v1176, 9
      %v1363 = vpop.permute.xlu0 %1362
      %1364 = vrot.lane.b32.xlu0 %v1177, 9
      %v1365 = vpop.permute.xlu0 %1364
      %1366 = vrot.lane.b32.xlu0 %v1178, 9
      %v1367 = vpop.permute.xlu0 %1366
      %1368 = vrot.lane.b32.xlu0 %v1179, 9
      %v1369 = vpop.permute.xlu0 %1368
      %1370 = vrot.lane.b32.xlu0 %v1180, 9
      %v1371 = vpop.permute.xlu0 %1370
      %1372 = vrot.lane.b32.xlu0 %v1181, 9
      %v1373 = vpop.permute.xlu0 %1372
      %v1406 = vsub.f32 %v832, %v1311
      %v1407 = vsub.f32 %v837, %v1313
      %v1408 = vsub.f32 %v842, %v1315
      %v1409 = vsub.f32 %v847, %v1317
      %v1410 = vsub.f32 %v852, %v1319
      %v1411 = vsub.f32 %v857, %v1321
      %v1412 = vsub.f32 %v862, %v1323
      %v1413 = vsub.f32 %v867, %v1325
      %v1414 = vsub.f32 %v872, %v1327
      %v1415 = vsub.f32 %v877, %v1329
      %v1416 = vsub.f32 %v882, %v1331
      %v1417 = vsub.f32 %v887, %v1333
      %v1418 = vsub.f32 %v892, %v1335
      %v1419 = vsub.f32 %v897, %v1337
      %v1420 = vsub.f32 %v902, %v1339
      %v1421 = vsub.f32 %v907, %v1341
      %v1422 = vsub.f32 %v912, %v1343
      %v1423 = vsub.f32 %v917, %v1345
      %v1424 = vsub.f32 %v922, %v1347
      %v1425 = vsub.f32 %v927, %v1349
      %v1426 = vsub.f32 %v932, %v1351
      %v1427 = vsub.f32 %v937, %v1353
      %v1428 = vsub.f32 %v942, %v1355
      %v1429 = vsub.f32 %v947, %v1357
      %v1430 = vsub.f32 %v952, %v1359
      %v1431 = vsub.f32 %v957, %v1361
      %v1432 = vsub.f32 %v962, %v1363
      %v1433 = vsub.f32 %v967, %v1365
      %v1434 = vsub.f32 %v972, %v1367
      %v1435 = vsub.f32 %v977, %v1369
      %v1436 = vsub.f32 %v982, %v1371
      %v1437 = vsub.f32 %v987, %v1373
      %v1438 = vmul.f32 %v1406, 1.442695
      %v1439 = vpow.pop %v1438
      %v1440 = vmul.f32 %v1407, 1.442695
      %v1441 = vpow.pop %v1440
      %v1442 = vmul.f32 %v1408, 1.442695
      %v1443 = vpow.pop %v1442
      %v1444 = vmul.f32 %v1409, 1.442695
      %v1445 = vpow.pop %v1444
      %v1446 = vmul.f32 %v1410, 1.442695
      %v1447 = vpow.pop %v1446
      %v1448 = vmul.f32 %v1411, 1.442695
      %v1449 = vpow.pop %v1448
      %v1450 = vmul.f32 %v1412, 1.442695
      %v1451 = vpow.pop %v1450
      %v1452 = vmul.f32 %v1413, 1.442695
      %v1453 = vpow.pop %v1452
      %v1454 = vmul.f32 %v1414, 1.442695
      %v1455 = vpow.pop %v1454
      %v1456 = vmul.f32 %v1415, 1.442695
      %v1457 = vpow.pop %v1456
      %v1458 = vmul.f32 %v1416, 1.442695
      %v1459 = vpow.pop %v1458
      %v1460 = vmul.f32 %v1417, 1.442695
      %v1461 = vpow.pop %v1460
      %v1462 = vmul.f32 %v1418, 1.442695
      %v1463 = vpow.pop %v1462
      %v1464 = vmul.f32 %v1419, 1.442695
      %v1465 = vpow.pop %v1464
      %v1466 = vmul.f32 %v1420, 1.442695
      %v1467 = vpow.pop %v1466
      %v1468 = vmul.f32 %v1421, 1.442695
      %v1469 = vpow.pop %v1468
      %v1470 = vmul.f32 %v1422, 1.442695
      %v1471 = vpow.pop %v1470
      %v1472 = vmul.f32 %v1423, 1.442695
      %v1473 = vpow.pop %v1472
      %v1474 = vmul.f32 %v1424, 1.442695
      %v1475 = vpow.pop %v1474
      %v1476 = vmul.f32 %v1425, 1.442695
      %v1477 = vpow.pop %v1476
      %v1478 = vmul.f32 %v1426, 1.442695
      %v1479 = vpow.pop %v1478
      %v1480 = vmul.f32 %v1427, 1.442695
      %v1481 = vpow.pop %v1480
      %v1482 = vmul.f32 %v1428, 1.442695
      %v1483 = vpow.pop %v1482
      %v1484 = vmul.f32 %v1429, 1.442695
      %v1485 = vpow.pop %v1484
      %v1486 = vmul.f32 %v1430, 1.442695
      %v1487 = vpow.pop %v1486
      %v1488 = vmul.f32 %v1431, 1.442695
      %v1489 = vpow.pop %v1488
      %v1490 = vmul.f32 %v1432, 1.442695
      %v1491 = vpow.pop %v1490
      %v1492 = vmul.f32 %v1433, 1.442695
      %v1493 = vpow.pop %v1492
      %v1494 = vmul.f32 %v1434, 1.442695
      %v1495 = vpow.pop %v1494
      %v1496 = vmul.f32 %v1435, 1.442695
      %v1497 = vpow.pop %v1496
      %v1498 = vmul.f32 %v1436, 1.442695
      %v1499 = vpow.pop %v1498
      %v1500 = vmul.f32 %v1437, 1.442695
      %v1501 = vpow.pop %v1500
      %1534 = vrot.lane.b32.xlu0 %v1439, 119
      %v1535 = vpop.permute.xlu0 %1534
      %1536 = vrot.lane.b32.xlu0 %v1441, 119
      %v1537 = vpop.permute.xlu0 %1536
      %1538 = vrot.lane.b32.xlu0 %v1443, 119
      %v1539 = vpop.permute.xlu0 %1538
      %1540 = vrot.lane.b32.xlu0 %v1445, 119
      %v1541 = vpop.permute.xlu0 %1540
      %1542 = vrot.lane.b32.xlu0 %v1447, 119
      %v1543 = vpop.permute.xlu0 %1542
      %1544 = vrot.lane.b32.xlu0 %v1449, 119
      %v1545 = vpop.permute.xlu0 %1544
      %1546 = vrot.lane.b32.xlu0 %v1451, 119
      %v1547 = vpop.permute.xlu0 %1546
      %1548 = vrot.lane.b32.xlu0 %v1453, 119
      %v1549 = vpop.permute.xlu0 %1548
      %1550 = vrot.lane.b32.xlu0 %v1455, 119
      %v1551 = vpop.permute.xlu0 %1550
      %1552 = vrot.lane.b32.xlu0 %v1457, 119
      %v1553 = vpop.permute.xlu0 %1552
      %1554 = vrot.lane.b32.xlu0 %v1459, 119
      %v1555 = vpop.permute.xlu0 %1554
      %1556 = vrot.lane.b32.xlu0 %v1461, 119
      %v1557 = vpop.permute.xlu0 %1556
      %1558 = vrot.lane.b32.xlu0 %v1463, 119
      %v1559 = vpop.permute.xlu0 %1558
      %1560 = vrot.lane.b32.xlu0 %v1465, 119
      %v1561 = vpop.permute.xlu0 %1560
      %1562 = vrot.lane.b32.xlu0 %v1467, 119
      %v1563 = vpop.permute.xlu0 %1562
      %1564 = vrot.lane.b32.xlu0 %v1469, 119
      %v1565 = vpop.permute.xlu0 %1564
      %1566 = vrot.lane.b32.xlu0 %v1471, 119
      %v1567 = vpop.permute.xlu0 %1566
      %1568 = vrot.lane.b32.xlu0 %v1473, 119
      %v1569 = vpop.permute.xlu0 %1568
      %1570 = vrot.lane.b32.xlu0 %v1475, 119
      %v1571 = vpop.permute.xlu0 %1570
      %1572 = vrot.lane.b32.xlu0 %v1477, 119
      %v1573 = vpop.permute.xlu0 %1572
      %1574 = vrot.lane.b32.xlu0 %v1479, 119
      %v1575 = vpop.permute.xlu0 %1574
      %1576 = vrot.lane.b32.xlu0 %v1481, 119
      %v1577 = vpop.permute.xlu0 %1576
      %1578 = vrot.lane.b32.xlu0 %v1483, 119
      %v1579 = vpop.permute.xlu0 %1578
      %1580 = vrot.lane.b32.xlu0 %v1485, 119
      %v1581 = vpop.permute.xlu0 %1580
      %1582 = vrot.lane.b32.xlu0 %v1487, 119
      %v1583 = vpop.permute.xlu0 %1582
      %1584 = vrot.lane.b32.xlu0 %v1489, 119
      %v1585 = vpop.permute.xlu0 %1584
      %1586 = vrot.lane.b32.xlu0 %v1491, 119
      %v1587 = vpop.permute.xlu0 %1586
      %1588 = vrot.lane.b32.xlu0 %v1493, 119
      %v1589 = vpop.permute.xlu0 %1588
      %1590 = vrot.lane.b32.xlu0 %v1495, 119
      %v1591 = vpop.permute.xlu0 %1590
      %1592 = vrot.lane.b32.xlu0 %v1497, 119
      %v1593 = vpop.permute.xlu0 %1592
      %1594 = vrot.lane.b32.xlu0 %v1499, 119
      %v1595 = vpop.permute.xlu0 %1594
      %1596 = vrot.lane.b32.xlu0 %v1501, 119
      %v1597 = vpop.permute.xlu0 %1596
      %v1630 = vadd.f32 %v1215, %v1535
      %v1631 = vadd.f32 %v1217, %v1537
      %v1632 = vadd.f32 %v1219, %v1539
      %v1633 = vadd.f32 %v1221, %v1541
      %v1634 = vadd.f32 %v1223, %v1543
      %v1635 = vadd.f32 %v1225, %v1545
      %v1636 = vadd.f32 %v1227, %v1547
      %v1637 = vadd.f32 %v1229, %v1549
      %v1638 = vadd.f32 %v1231, %v1551
      %v1639 = vadd.f32 %v1233, %v1553
      %v1640 = vadd.f32 %v1235, %v1555
      %v1641 = vadd.f32 %v1237, %v1557
      %v1642 = vadd.f32 %v1239, %v1559
      %v1643 = vadd.f32 %v1241, %v1561
      %v1644 = vadd.f32 %v1243, %v1563
      %v1645 = vadd.f32 %v1245, %v1565
      %v1646 = vadd.f32 %v1247, %v1567
      %v1647 = vadd.f32 %v1249, %v1569
      %v1648 = vadd.f32 %v1251, %v1571
      %v1649 = vadd.f32 %v1253, %v1573
      %v1650 = vadd.f32 %v1255, %v1575
      %v1651 = vadd.f32 %v1257, %v1577
      %v1652 = vadd.f32 %v1259, %v1579
      %v1653 = vadd.f32 %v1261, %v1581
      %v1654 = vadd.f32 %v1263, %v1583
      %v1655 = vadd.f32 %v1265, %v1585
      %v1656 = vadd.f32 %v1267, %v1587
      %v1657 = vadd.f32 %v1269, %v1589
      %v1658 = vadd.f32 %v1271, %v1591
      %v1659 = vadd.f32 %v1273, %v1593
      %v1660 = vadd.f32 %v1275, %v1595
      %v1661 = vadd.f32 %v1277, %v1597
      %1694 = vrot.lane.b32.xlu0 %v1630, 9
      %v1695 = vpop.permute.xlu0 %1694
      %1696 = vrot.lane.b32.xlu0 %v1631, 9
      %v1697 = vpop.permute.xlu0 %1696
      %1698 = vrot.lane.b32.xlu0 %v1632, 9
      %v1699 = vpop.permute.xlu0 %1698
      %1700 = vrot.lane.b32.xlu0 %v1633, 9
      %v1701 = vpop.permute.xlu0 %1700
      %1702 = vrot.lane.b32.xlu0 %v1634, 9
      %v1703 = vpop.permute.xlu0 %1702
      %1704 = vrot.lane.b32.xlu0 %v1635, 9
      %v1705 = vpop.permute.xlu0 %1704
      %1706 = vrot.lane.b32.xlu0 %v1636, 9
      %v1707 = vpop.permute.xlu0 %1706
      %1708 = vrot.lane.b32.xlu0 %v1637, 9
      %v1709 = vpop.permute.xlu0 %1708
      %1710 = vrot.lane.b32.xlu0 %v1638, 9
      %v1711 = vpop.permute.xlu0 %1710
      %1712 = vrot.lane.b32.xlu0 %v1639, 9
      %v1713 = vpop.permute.xlu0 %1712
      %1714 = vrot.lane.b32.xlu0 %v1640, 9
      %v1715 = vpop.permute.xlu0 %1714
      %1716 = vrot.lane.b32.xlu0 %v1641, 9
      %v1717 = vpop.permute.xlu0 %1716
      %1718 = vrot.lane.b32.xlu0 %v1642, 9
      %v1719 = vpop.permute.xlu0 %1718
      %1720 = vrot.lane.b32.xlu0 %v1643, 9
      %v1721 = vpop.permute.xlu0 %1720
      %1722 = vrot.lane.b32.xlu0 %v1644, 9
      %v1723 = vpop.permute.xlu0 %1722
      %1724 = vrot.lane.b32.xlu0 %v1645, 9
      %v1725 = vpop.permute.xlu0 %1724
      %1726 = vrot.lane.b32.xlu0 %v1646, 9
      %v1727 = vpop.permute.xlu0 %1726
      %1728 = vrot.lane.b32.xlu0 %v1647, 9
      %v1729 = vpop.permute.xlu0 %1728
      %1730 = vrot.lane.b32.xlu0 %v1648, 9
      %v1731 = vpop.permute.xlu0 %1730
      %1732 = vrot.lane.b32.xlu0 %v1649, 9
      %v1733 = vpop.permute.xlu0 %1732
      %1734 = vrot.lane.b32.xlu0 %v1650, 9
      %v1735 = vpop.permute.xlu0 %1734
      %1736 = vrot.lane.b32.xlu0 %v1651, 9
      %v1737 = vpop.permute.xlu0 %1736
      %1738 = vrot.lane.b32.xlu0 %v1652, 9
      %v1739 = vpop.permute.xlu0 %1738
      %1740 = vrot.lane.b32.xlu0 %v1653, 9
      %v1741 = vpop.permute.xlu0 %1740
      %1742 = vrot.lane.b32.xlu0 %v1654, 9
      %v1743 = vpop.permute.xlu0 %1742
      %1744 = vrot.lane.b32.xlu0 %v1655, 9
      %v1745 = vpop.permute.xlu0 %1744
      %1746 = vrot.lane.b32.xlu0 %v1656, 9
      %v1747 = vpop.permute.xlu0 %1746
      %1748 = vrot.lane.b32.xlu0 %v1657, 9
      %v1749 = vpop.permute.xlu0 %1748
      %1750 = vrot.lane.b32.xlu0 %v1658, 9
      %v1751 = vpop.permute.xlu0 %1750
      %1752 = vrot.lane.b32.xlu0 %v1659, 9
      %v1753 = vpop.permute.xlu0 %1752
      %1754 = vrot.lane.b32.xlu0 %v1660, 9
      %v1755 = vpop.permute.xlu0 %1754
      %1756 = vrot.lane.b32.xlu0 %v1661, 9
      %v1757 = vpop.permute.xlu0 %1756
      %v1790 = vrcp.pop %v1695
      %v1791 = vmul.f32 %v1439, %v1790
      %v1792 = vrcp.pop %v1697
      %v1793 = vmul.f32 %v1441, %v1792
      %v1794 = vrcp.pop %v1699
      %v1795 = vmul.f32 %v1443, %v1794
      %v1796 = vrcp.pop %v1701
      %v1797 = vmul.f32 %v1445, %v1796
      %v1798 = vrcp.pop %v1703
      %v1799 = vmul.f32 %v1447, %v1798
      %v1800 = vrcp.pop %v1705
      %v1801 = vmul.f32 %v1449, %v1800
      %v1802 = vrcp.pop %v1707
      %v1803 = vmul.f32 %v1451, %v1802
      %v1804 = vrcp.pop %v1709
      %v1805 = vmul.f32 %v1453, %v1804
      %v1806 = vrcp.pop %v1711
      %v1807 = vmul.f32 %v1455, %v1806
      %v1808 = vrcp.pop %v1713
      %v1809 = vmul.f32 %v1457, %v1808
      %v1810 = vrcp.pop %v1715
      %v1811 = vmul.f32 %v1459, %v1810
      %v1812 = vrcp.pop %v1717
      %v1813 = vmul.f32 %v1461, %v1812
      %v1814 = vrcp.pop %v1719
      %v1815 = vmul.f32 %v1463, %v1814
      %v1816 = vrcp.pop %v1721
      %v1817 = vmul.f32 %v1465, %v1816
      %v1818 = vrcp.pop %v1723
      %v1819 = vmul.f32 %v1467, %v1818
      %v1820 = vrcp.pop %v1725
      %v1821 = vmul.f32 %v1469, %v1820
      %v1822 = vrcp.pop %v1727
      %v1823 = vmul.f32 %v1471, %v1822
      %v1824 = vrcp.pop %v1729
      %v1825 = vmul.f32 %v1473, %v1824
      %v1826 = vrcp.pop %v1731
      %v1827 = vmul.f32 %v1475, %v1826
      %v1828 = vrcp.pop %v1733
      %v1829 = vmul.f32 %v1477, %v1828
      %v1830 = vrcp.pop %v1735
      %v1831 = vmul.f32 %v1479, %v1830
      %v1832 = vrcp.pop %v1737
      %v1833 = vmul.f32 %v1481, %v1832
      %v1834 = vrcp.pop %v1739
      %v1835 = vmul.f32 %v1483, %v1834
      %v1836 = vrcp.pop %v1741
      %v1837 = vmul.f32 %v1485, %v1836
      %v1838 = vrcp.pop %v1743
      %v1839 = vmul.f32 %v1487, %v1838
      %v1840 = vrcp.pop %v1745
      %v1841 = vmul.f32 %v1489, %v1840
      %v1842 = vrcp.pop %v1747
      %v1843 = vmul.f32 %v1491, %v1842
      %v1844 = vrcp.pop %v1749
      %v1845 = vmul.f32 %v1493, %v1844
      %v1846 = vrcp.pop %v1751
      %v1847 = vmul.f32 %v1495, %v1846
      %v1848 = vrcp.pop %v1753
      %v1849 = vmul.f32 %v1497, %v1848
      %v1850 = vrcp.pop %v1755
      %v1851 = vmul.f32 %v1499, %v1850
      %v1852 = vrcp.pop %v1757
      %v1853 = vmul.f32 %v1501, %v1852
      %v1854 = vld [vmem:[%s5] sm:$0xff]
      %v1855 = vld [vmem:[%s5 + $0x8] sm:$0xff]
      %v1856 = vld [vmem:[%s5 + $0x10] sm:$0xff]
      %v1857 = vld [vmem:[%s5 + $0x18] sm:$0xff]
      %v1858 = vld [vmem:[%s5 + $0x20] sm:$0xff]
      %v1859 = vld [vmem:[%s5 + $0x28] sm:$0xff]
      %v1860 = vld [vmem:[%s5 + $0x30] sm:$0xff]
      %v1861 = vld [vmem:[%s5 + $0x38] sm:$0xff]
      %v1862 = vld [vmem:[%s5 + $0x40] sm:$0xff]
      %v1863 = vld [vmem:[%s5 + $0x48] sm:$0xff]
      %v1864 = vld [vmem:[%s5 + $0x50] sm:$0xff]
      %v1865 = vld [vmem:[%s5 + $0x58] sm:$0xff]
      %v1866 = vld [vmem:[%s5 + $0x60] sm:$0xff]
      %v1867 = vld [vmem:[%s5 + $0x68] sm:$0xff]
      %v1868 = vld [vmem:[%s5 + $0x70] sm:$0xff]
      %v1869 = vld [vmem:[%s5 + $0x78] sm:$0xff]
      %v1870 = vld [vmem:[%s5 + $0x80] sm:$0xff]
      %v1871 = vld [vmem:[%s5 + $0x88] sm:$0xff]
      %v1872 = vld [vmem:[%s5 + $0x90] sm:$0xff]
      %v1873 = vld [vmem:[%s5 + $0x98] sm:$0xff]
      %v1874 = vld [vmem:[%s5 + $0xa0] sm:$0xff]
      %v1875 = vld [vmem:[%s5 + $0xa8] sm:$0xff]
      %v1876 = vld [vmem:[%s5 + $0xb0] sm:$0xff]
      %v1877 = vld [vmem:[%s5 + $0xb8] sm:$0xff]
      %v1878 = vld [vmem:[%s5 + $0xc0] sm:$0xff]
      %v1879 = vld [vmem:[%s5 + $0xc8] sm:$0xff]
      %v1880 = vld [vmem:[%s5 + $0xd0] sm:$0xff]
      %v1881 = vld [vmem:[%s5 + $0xd8] sm:$0xff]
      %v1882 = vld [vmem:[%s5 + $0xe0] sm:$0xff]
      %v1883 = vld [vmem:[%s5 + $0xe8] sm:$0xff]
      %v1884 = vld [vmem:[%s5 + $0xf0] sm:$0xff]
      %v1885 = vld [vmem:[%s5 + $0xf8] sm:$0xff]
      %1918 = vrot.lane.b32.xlu0 %v1854, 72
      %v1919 = vpop.permute.xlu0 %1918
      %1920 = vrot.lane.b32.xlu0 %v1855, 72
      %v1921 = vpop.permute.xlu0 %1920
      %1922 = vrot.lane.b32.xlu0 %v1856, 72
      %v1923 = vpop.permute.xlu0 %1922
      %1924 = vrot.lane.b32.xlu0 %v1857, 72
      %v1925 = vpop.permute.xlu0 %1924
      %1926 = vrot.lane.b32.xlu0 %v1858, 72
      %v1927 = vpop.permute.xlu0 %1926
      %1928 = vrot.lane.b32.xlu0 %v1859, 72
      %v1929 = vpop.permute.xlu0 %1928
      %1930 = vrot.lane.b32.xlu0 %v1860, 72
      %v1931 = vpop.permute.xlu0 %1930
      %1932 = vrot.lane.b32.xlu0 %v1861, 72
      %v1933 = vpop.permute.xlu0 %1932
      %1934 = vrot.lane.b32.xlu0 %v1862, 72
      %v1935 = vpop.permute.xlu0 %1934
      %1936 = vrot.lane.b32.xlu0 %v1863, 72
      %v1937 = vpop.permute.xlu0 %1936
      %1938 = vrot.lane.b32.xlu0 %v1864, 72
      %v1939 = vpop.permute.xlu0 %1938
      %1940 = vrot.lane.b32.xlu0 %v1865, 72
      %v1941 = vpop.permute.xlu0 %1940
      %1942 = vrot.lane.b32.xlu0 %v1866, 72
      %v1943 = vpop.permute.xlu0 %1942
      %1944 = vrot.lane.b32.xlu0 %v1867, 72
      %v1945 = vpop.permute.xlu0 %1944
      %1946 = vrot.lane.b32.xlu0 %v1868, 72
      %v1947 = vpop.permute.xlu0 %1946
      %1948 = vrot.lane.b32.xlu0 %v1869, 72
      %v1949 = vpop.permute.xlu0 %1948
      %1950 = vrot.lane.b32.xlu0 %v1870, 72
      %v1951 = vpop.permute.xlu0 %1950
      %1952 = vrot.lane.b32.xlu0 %v1871, 72
      %v1953 = vpop.permute.xlu0 %1952
      %1954 = vrot.lane.b32.xlu0 %v1872, 72
      %v1955 = vpop.permute.xlu0 %1954
      %1956 = vrot.lane.b32.xlu0 %v1873, 72
      %v1957 = vpop.permute.xlu0 %1956
      %1958 = vrot.lane.b32.xlu0 %v1874, 72
      %v1959 = vpop.permute.xlu0 %1958
      %1960 = vrot.lane.b32.xlu0 %v1875, 72
      %v1961 = vpop.permute.xlu0 %1960
      %1962 = vrot.lane.b32.xlu0 %v1876, 72
      %v1963 = vpop.permute.xlu0 %1962
      %1964 = vrot.lane.b32.xlu0 %v1877, 72
      %v1965 = vpop.permute.xlu0 %1964
      %1966 = vrot.lane.b32.xlu0 %v1878, 72
      %v1967 = vpop.permute.xlu0 %1966
      %1968 = vrot.lane.b32.xlu0 %v1879, 72
      %v1969 = vpop.permute.xlu0 %1968
      %1970 = vrot.lane.b32.xlu0 %v1880, 72
      %v1971 = vpop.permute.xlu0 %1970
      %1972 = vrot.lane.b32.xlu0 %v1881, 72
      %v1973 = vpop.permute.xlu0 %1972
      %1974 = vrot.lane.b32.xlu0 %v1882, 72
      %v1975 = vpop.permute.xlu0 %1974
      %1976 = vrot.lane.b32.xlu0 %v1883, 72
      %v1977 = vpop.permute.xlu0 %1976
      %1978 = vrot.lane.b32.xlu0 %v1884, 72
      %v1979 = vpop.permute.xlu0 %1978
      %1980 = vrot.lane.b32.xlu0 %v1885, 72
      %v1981 = vpop.permute.xlu0 %1980
      %v2014 = vmul.f32 %v832, %v1919
      %v2015 = vmul.f32 %v837, %v1921
      %v2016 = vmul.f32 %v842, %v1923
      %v2017 = vmul.f32 %v847, %v1925
      %v2018 = vmul.f32 %v852, %v1927
      %v2019 = vmul.f32 %v857, %v1929
      %v2020 = vmul.f32 %v862, %v1931
      %v2021 = vmul.f32 %v867, %v1933
      %v2022 = vmul.f32 %v872, %v1935
      %v2023 = vmul.f32 %v877, %v1937
      %v2024 = vmul.f32 %v882, %v1939
      %v2025 = vmul.f32 %v887, %v1941
      %v2026 = vmul.f32 %v892, %v1943
      %v2027 = vmul.f32 %v897, %v1945
      %v2028 = vmul.f32 %v902, %v1947
      %v2029 = vmul.f32 %v907, %v1949
      %v2030 = vmul.f32 %v912, %v1951
      %v2031 = vmul.f32 %v917, %v1953
      %v2032 = vmul.f32 %v922, %v1955
      %v2033 = vmul.f32 %v927, %v1957
      %v2034 = vmul.f32 %v932, %v1959
      %v2035 = vmul.f32 %v937, %v1961
      %v2036 = vmul.f32 %v942, %v1963
      %v2037 = vmul.f32 %v947, %v1965
      %v2038 = vmul.f32 %v952, %v1967
      %v2039 = vmul.f32 %v957, %v1969
      %v2040 = vmul.f32 %v962, %v1971
      %v2041 = vmul.f32 %v967, %v1973
      %v2042 = vmul.f32 %v972, %v1975
      %v2043 = vmul.f32 %v977, %v1977
      %v2044 = vmul.f32 %v982, %v1979
      %v2045 = vmul.f32 %v987, %v1981
      %2046 = vrot.lane.b32.xlu0 %v1854, 54
      %v2047 = vpop.permute.xlu0 %2046
      %2048 = vrot.lane.b32.xlu0 %v1855, 54
      %v2049 = vpop.permute.xlu0 %2048
      %2050 = vrot.lane.b32.xlu0 %v1856, 54
      %v2051 = vpop.permute.xlu0 %2050
      %2052 = vrot.lane.b32.xlu0 %v1857, 54
      %v2053 = vpop.permute.xlu0 %2052
      %2054 = vrot.lane.b32.xlu0 %v1858, 54
      %v2055 = vpop.permute.xlu0 %2054
      %2056 = vrot.lane.b32.xlu0 %v1859, 54
      %v2057 = vpop.permute.xlu0 %2056
      %2058 = vrot.lane.b32.xlu0 %v1860, 54
      %v2059 = vpop.permute.xlu0 %2058
      %2060 = vrot.lane.b32.xlu0 %v1861, 54
      %v2061 = vpop.permute.xlu0 %2060
      %2062 = vrot.lane.b32.xlu0 %v1862, 54
      %v2063 = vpop.permute.xlu0 %2062
      %2064 = vrot.lane.b32.xlu0 %v1863, 54
      %v2065 = vpop.permute.xlu0 %2064
      %2066 = vrot.lane.b32.xlu0 %v1864, 54
      %v2067 = vpop.permute.xlu0 %2066
      %2068 = vrot.lane.b32.xlu0 %v1865, 54
      %v2069 = vpop.permute.xlu0 %2068
      %2070 = vrot.lane.b32.xlu0 %v1866, 54
      %v2071 = vpop.permute.xlu0 %2070
      %2072 = vrot.lane.b32.xlu0 %v1867, 54
      %v2073 = vpop.permute.xlu0 %2072
      %2074 = vrot.lane.b32.xlu0 %v1868, 54
      %v2075 = vpop.permute.xlu0 %2074
      %2076 = vrot.lane.b32.xlu0 %v1869, 54
      %v2077 = vpop.permute.xlu0 %2076
      %2078 = vrot.lane.b32.xlu0 %v1870, 54
      %v2079 = vpop.permute.xlu0 %2078
      %2080 = vrot.lane.b32.xlu0 %v1871, 54
      %v2081 = vpop.permute.xlu0 %2080
      %2082 = vrot.lane.b32.xlu0 %v1872, 54
      %v2083 = vpop.permute.xlu0 %2082
      %2084 = vrot.lane.b32.xlu0 %v1873, 54
      %v2085 = vpop.permute.xlu0 %2084
      %2086 = vrot.lane.b32.xlu0 %v1874, 54
      %v2087 = vpop.permute.xlu0 %2086
      %2088 = vrot.lane.b32.xlu0 %v1875, 54
      %v2089 = vpop.permute.xlu0 %2088
      %2090 = vrot.lane.b32.xlu0 %v1876, 54
      %v2091 = vpop.permute.xlu0 %2090
      %2092 = vrot.lane.b32.xlu0 %v1877, 54
      %v2093 = vpop.permute.xlu0 %2092
      %2094 = vrot.lane.b32.xlu0 %v1878, 54
      %v2095 = vpop.permute.xlu0 %2094
      %2096 = vrot.lane.b32.xlu0 %v1879, 54
      %v2097 = vpop.permute.xlu0 %2096
      %2098 = vrot.lane.b32.xlu0 %v1880, 54
      %v2099 = vpop.permute.xlu0 %2098
      %2100 = vrot.lane.b32.xlu0 %v1881, 54
      %v2101 = vpop.permute.xlu0 %2100
      %2102 = vrot.lane.b32.xlu0 %v1882, 54
      %v2103 = vpop.permute.xlu0 %2102
      %2104 = vrot.lane.b32.xlu0 %v1883, 54
      %v2105 = vpop.permute.xlu0 %2104
      %2106 = vrot.lane.b32.xlu0 %v1884, 54
      %v2107 = vpop.permute.xlu0 %2106
      %2108 = vrot.lane.b32.xlu0 %v1885, 54
      %v2109 = vpop.permute.xlu0 %2108
      %v2142 = vadd.f32 %v2014, %v2047
      %v2143 = vadd.f32 %v2015, %v2049
      %v2144 = vadd.f32 %v2016, %v2051
      %v2145 = vadd.f32 %v2017, %v2053
      %v2146 = vadd.f32 %v2018, %v2055
      %v2147 = vadd.f32 %v2019, %v2057
      %v2148 = vadd.f32 %v2020, %v2059
      %v2149 = vadd.f32 %v2021, %v2061
      %v2150 = vadd.f32 %v2022, %v2063
      %v2151 = vadd.f32 %v2023, %v2065
      %v2152 = vadd.f32 %v2024, %v2067
      %v2153 = vadd.f32 %v2025, %v2069
      %v2154 = vadd.f32 %v2026, %v2071
      %v2155 = vadd.f32 %v2027, %v2073
      %v2156 = vadd.f32 %v2028, %v2075
      %v2157 = vadd.f32 %v2029, %v2077
      %v2158 = vadd.f32 %v2030, %v2079
      %v2159 = vadd.f32 %v2031, %v2081
      %v2160 = vadd.f32 %v2032, %v2083
      %v2161 = vadd.f32 %v2033, %v2085
      %v2162 = vadd.f32 %v2034, %v2087
      %v2163 = vadd.f32 %v2035, %v2089
      %v2164 = vadd.f32 %v2036, %v2091
      %v2165 = vadd.f32 %v2037, %v2093
      %v2166 = vadd.f32 %v2038, %v2095
      %v2167 = vadd.f32 %v2039, %v2097
      %v2168 = vadd.f32 %v2040, %v2099
      %v2169 = vadd.f32 %v2041, %v2101
      %v2170 = vadd.f32 %v2042, %v2103
      %v2171 = vadd.f32 %v2043, %v2105
      %v2172 = vadd.f32 %v2044, %v2107
      %v2173 = vadd.f32 %v2045, %v2109
      %v2174 = vmin.f32 %v832, 4.1351666
      %v2175 = vmin.f32 %v837, 4.1351666
      %v2176 = vmin.f32 %v842, 4.1351666
      %v2177 = vmin.f32 %v847, 4.1351666
      %v2178 = vmin.f32 %v852, 4.1351666
      %v2179 = vmin.f32 %v857, 4.1351666
      %v2180 = vmin.f32 %v862, 4.1351666
      %v2181 = vmin.f32 %v867, 4.1351666
      %v2182 = vmin.f32 %v872, 4.1351666
      %v2183 = vmin.f32 %v877, 4.1351666
      %v2184 = vmin.f32 %v882, 4.1351666
      %v2185 = vmin.f32 %v887, 4.1351666
      %v2186 = vmin.f32 %v892, 4.1351666
      %v2187 = vmin.f32 %v897, 4.1351666
      %v2188 = vmin.f32 %v902, 4.1351666
      %v2189 = vmin.f32 %v907, 4.1351666
      %v2190 = vmin.f32 %v912, 4.1351666
      %v2191 = vmin.f32 %v917, 4.1351666
      %v2192 = vmin.f32 %v922, 4.1351666
      %v2193 = vmin.f32 %v927, 4.1351666
      %v2194 = vmin.f32 %v932, 4.1351666
      %v2195 = vmin.f32 %v937, 4.1351666
      %v2196 = vmin.f32 %v942, 4.1351666
      %v2197 = vmin.f32 %v947, 4.1351666
      %v2198 = vmin.f32 %v952, 4.1351666
      %v2199 = vmin.f32 %v957, 4.1351666
      %v2200 = vmin.f32 %v962, 4.1351666
      %v2201 = vmin.f32 %v967, 4.1351666
      %v2202 = vmin.f32 %v972, 4.1351666
      %v2203 = vmin.f32 %v977, 4.1351666
      %v2204 = vmin.f32 %v982, 4.1351666
      %v2205 = vmin.f32 %v987, 4.1351666
      %v2206 = vmul.f32 %v2174, 1.442695
      %v2207 = vpow.pop %v2206
      %v2208 = vmul.f32 %v2175, 1.442695
      %v2209 = vpow.pop %v2208
      %v2210 = vmul.f32 %v2176, 1.442695
      %v2211 = vpow.pop %v2210
      %v2212 = vmul.f32 %v2177, 1.442695
      %v2213 = vpow.pop %v2212
      %v2214 = vmul.f32 %v2178, 1.442695
      %v2215 = vpow.pop %v2214
      %v2216 = vmul.f32 %v2179, 1.442695
      %v2217 = vpow.pop %v2216
      %v2218 = vmul.f32 %v2180, 1.442695
      %v2219 = vpow.pop %v2218
      %v2220 = vmul.f32 %v2181, 1.442695
      %v2221 = vpow.pop %v2220
      %v2222 = vmul.f32 %v2182, 1.442695
      %v2223 = vpow.pop %v2222
      %v2224 = vmul.f32 %v2183, 1.442695
      %v2225 = vpow.pop %v2224
      %v2226 = vmul.f32 %v2184, 1.442695
      %v2227 = vpow.pop %v2226
      %v2228 = vmul.f32 %v2185, 1.442695
      %v2229 = vpow.pop %v2228
      %v2230 = vmul.f32 %v2186, 1.442695
      %v2231 = vpow.pop %v2230
      %v2232 = vmul.f32 %v2187, 1.442695
      %v2233 = vpow.pop %v2232
      %v2234 = vmul.f32 %v2188, 1.442695
      %v2235 = vpow.pop %v2234
      %v2236 = vmul.f32 %v2189, 1.442695
      %v2237 = vpow.pop %v2236
      %v2238 = vmul.f32 %v2190, 1.442695
      %v2239 = vpow.pop %v2238
      %v2240 = vmul.f32 %v2191, 1.442695
      %v2241 = vpow.pop %v2240
      %v2242 = vmul.f32 %v2192, 1.442695
      %v2243 = vpow.pop %v2242
      %v2244 = vmul.f32 %v2193, 1.442695
      %v2245 = vpow.pop %v2244
      %v2246 = vmul.f32 %v2194, 1.442695
      %v2247 = vpow.pop %v2246
      %v2248 = vmul.f32 %v2195, 1.442695
      %v2249 = vpow.pop %v2248
      %v2250 = vmul.f32 %v2196, 1.442695
      %v2251 = vpow.pop %v2250
      %v2252 = vmul.f32 %v2197, 1.442695
      %v2253 = vpow.pop %v2252
      %v2254 = vmul.f32 %v2198, 1.442695
      %v2255 = vpow.pop %v2254
      %v2256 = vmul.f32 %v2199, 1.442695
      %v2257 = vpow.pop %v2256
      %v2258 = vmul.f32 %v2200, 1.442695
      %v2259 = vpow.pop %v2258
      %v2260 = vmul.f32 %v2201, 1.442695
      %v2261 = vpow.pop %v2260
      %v2262 = vmul.f32 %v2202, 1.442695
      %v2263 = vpow.pop %v2262
      %v2264 = vmul.f32 %v2203, 1.442695
      %v2265 = vpow.pop %v2264
      %v2266 = vmul.f32 %v2204, 1.442695
      %v2267 = vpow.pop %v2266
      %v2268 = vmul.f32 %v2205, 1.442695
      %v2269 = vpow.pop %v2268
      %2270 = vrot.lane.b32.xlu0 %v1854, 90
      %v2271 = vpop.permute.xlu0 %2270
      %2272 = vrot.lane.b32.xlu0 %v1855, 90
      %v2273 = vpop.permute.xlu0 %2272
      %2274 = vrot.lane.b32.xlu0 %v1856, 90
      %v2275 = vpop.permute.xlu0 %2274
      %2276 = vrot.lane.b32.xlu0 %v1857, 90
      %v2277 = vpop.permute.xlu0 %2276
      %2278 = vrot.lane.b32.xlu0 %v1858, 90
      %v2279 = vpop.permute.xlu0 %2278
      %2280 = vrot.lane.b32.xlu0 %v1859, 90
      %v2281 = vpop.permute.xlu0 %2280
      %2282 = vrot.lane.b32.xlu0 %v1860, 90
      %v2283 = vpop.permute.xlu0 %2282
      %2284 = vrot.lane.b32.xlu0 %v1861, 90
      %v2285 = vpop.permute.xlu0 %2284
      %2286 = vrot.lane.b32.xlu0 %v1862, 90
      %v2287 = vpop.permute.xlu0 %2286
      %2288 = vrot.lane.b32.xlu0 %v1863, 90
      %v2289 = vpop.permute.xlu0 %2288
      %2290 = vrot.lane.b32.xlu0 %v1864, 90
      %v2291 = vpop.permute.xlu0 %2290
      %2292 = vrot.lane.b32.xlu0 %v1865, 90
      %v2293 = vpop.permute.xlu0 %2292
      %2294 = vrot.lane.b32.xlu0 %v1866, 90
      %v2295 = vpop.permute.xlu0 %2294
      %2296 = vrot.lane.b32.xlu0 %v1867, 90
      %v2297 = vpop.permute.xlu0 %2296
      %2298 = vrot.lane.b32.xlu0 %v1868, 90
      %v2299 = vpop.permute.xlu0 %2298
      %2300 = vrot.lane.b32.xlu0 %v1869, 90
      %v2301 = vpop.permute.xlu0 %2300
      %2302 = vrot.lane.b32.xlu0 %v1870, 90
      %v2303 = vpop.permute.xlu0 %2302
      %2304 = vrot.lane.b32.xlu0 %v1871, 90
      %v2305 = vpop.permute.xlu0 %2304
      %2306 = vrot.lane.b32.xlu0 %v1872, 90
      %v2307 = vpop.permute.xlu0 %2306
      %2308 = vrot.lane.b32.xlu0 %v1873, 90
      %v2309 = vpop.permute.xlu0 %2308
      %2310 = vrot.lane.b32.xlu0 %v1874, 90
      %v2311 = vpop.permute.xlu0 %2310
      %2312 = vrot.lane.b32.xlu0 %v1875, 90
      %v2313 = vpop.permute.xlu0 %2312
      %2314 = vrot.lane.b32.xlu0 %v1876, 90
      %v2315 = vpop.permute.xlu0 %2314
      %2316 = vrot.lane.b32.xlu0 %v1877, 90
      %v2317 = vpop.permute.xlu0 %2316
      %2318 = vrot.lane.b32.xlu0 %v1878, 90
      %v2319 = vpop.permute.xlu0 %2318
      %2320 = vrot.lane.b32.xlu0 %v1879, 90
      %v2321 = vpop.permute.xlu0 %2320
      %2322 = vrot.lane.b32.xlu0 %v1880, 90
      %v2323 = vpop.permute.xlu0 %2322
      %2324 = vrot.lane.b32.xlu0 %v1881, 90
      %v2325 = vpop.permute.xlu0 %2324
      %2326 = vrot.lane.b32.xlu0 %v1882, 90
      %v2327 = vpop.permute.xlu0 %2326
      %2328 = vrot.lane.b32.xlu0 %v1883, 90
      %v2329 = vpop.permute.xlu0 %2328
      %2330 = vrot.lane.b32.xlu0 %v1884, 90
      %v2331 = vpop.permute.xlu0 %2330
      %2332 = vrot.lane.b32.xlu0 %v1885, 90
      %v2333 = vpop.permute.xlu0 %2332
      %v2366 = vmul.f32 %v2207, %v2271
      %v2367 = vmul.f32 %v2209, %v2273
      %v2368 = vmul.f32 %v2211, %v2275
      %v2369 = vmul.f32 %v2213, %v2277
      %v2370 = vmul.f32 %v2215, %v2279
      %v2371 = vmul.f32 %v2217, %v2281
      %v2372 = vmul.f32 %v2219, %v2283
      %v2373 = vmul.f32 %v2221, %v2285
      %v2374 = vmul.f32 %v2223, %v2287
      %v2375 = vmul.f32 %v2225, %v2289
      %v2376 = vmul.f32 %v2227, %v2291
      %v2377 = vmul.f32 %v2229, %v2293
      %v2378 = vmul.f32 %v2231, %v2295
      %v2379 = vmul.f32 %v2233, %v2297
      %v2380 = vmul.f32 %v2235, %v2299
      %v2381 = vmul.f32 %v2237, %v2301
      %v2382 = vmul.f32 %v2239, %v2303
      %v2383 = vmul.f32 %v2241, %v2305
      %v2384 = vmul.f32 %v2243, %v2307
      %v2385 = vmul.f32 %v2245, %v2309
      %v2386 = vmul.f32 %v2247, %v2311
      %v2387 = vmul.f32 %v2249, %v2313
      %v2388 = vmul.f32 %v2251, %v2315
      %v2389 = vmul.f32 %v2253, %v2317
      %v2390 = vmul.f32 %v2255, %v2319
      %v2391 = vmul.f32 %v2257, %v2321
      %v2392 = vmul.f32 %v2259, %v2323
      %v2393 = vmul.f32 %v2261, %v2325
      %v2394 = vmul.f32 %v2263, %v2327
      %v2395 = vmul.f32 %v2265, %v2329
      %v2396 = vmul.f32 %v2267, %v2331
      %v2397 = vmul.f32 %v2269, %v2333
      %v2398 = vmul.f32 %v2366, 0.5
      %v2399 = vmul.f32 %v2367, 0.5
      %v2400 = vmul.f32 %v2368, 0.5
      %v2401 = vmul.f32 %v2369, 0.5
      %v2402 = vmul.f32 %v2370, 0.5
      %v2403 = vmul.f32 %v2371, 0.5
      %v2404 = vmul.f32 %v2372, 0.5
      %v2405 = vmul.f32 %v2373, 0.5
      %v2406 = vmul.f32 %v2374, 0.5
      %v2407 = vmul.f32 %v2375, 0.5
      %v2408 = vmul.f32 %v2376, 0.5
      %v2409 = vmul.f32 %v2377, 0.5
      %v2410 = vmul.f32 %v2378, 0.5
      %v2411 = vmul.f32 %v2379, 0.5
      %v2412 = vmul.f32 %v2380, 0.5
      %v2413 = vmul.f32 %v2381, 0.5
      %v2414 = vmul.f32 %v2382, 0.5
      %v2415 = vmul.f32 %v2383, 0.5
      %v2416 = vmul.f32 %v2384, 0.5
      %v2417 = vmul.f32 %v2385, 0.5
      %v2418 = vmul.f32 %v2386, 0.5
      %v2419 = vmul.f32 %v2387, 0.5
      %v2420 = vmul.f32 %v2388, 0.5
      %v2421 = vmul.f32 %v2389, 0.5
      %v2422 = vmul.f32 %v2390, 0.5
      %v2423 = vmul.f32 %v2391, 0.5
      %v2424 = vmul.f32 %v2392, 0.5
      %v2425 = vmul.f32 %v2393, 0.5
      %v2426 = vmul.f32 %v2394, 0.5
      %v2427 = vmul.f32 %v2395, 0.5
      %v2428 = vmul.f32 %v2396, 0.5
      %v2429 = vmul.f32 %v2397, 0.5
      %2462 = vrot.lane.b32.xlu0 %v2398, 110
      %v2463 = vpop.permute.xlu0 %2462
      %2464 = vrot.lane.b32.xlu0 %v2399, 110
      %v2465 = vpop.permute.xlu0 %2464
      %2466 = vrot.lane.b32.xlu0 %v2400, 110
      %v2467 = vpop.permute.xlu0 %2466
      %2468 = vrot.lane.b32.xlu0 %v2401, 110
      %v2469 = vpop.permute.xlu0 %2468
      %2470 = vrot.lane.b32.xlu0 %v2402, 110
      %v2471 = vpop.permute.xlu0 %2470
      %2472 = vrot.lane.b32.xlu0 %v2403, 110
      %v2473 = vpop.permute.xlu0 %2472
      %2474 = vrot.lane.b32.xlu0 %v2404, 110
      %v2475 = vpop.permute.xlu0 %2474
      %2476 = vrot.lane.b32.xlu0 %v2405, 110
      %v2477 = vpop.permute.xlu0 %2476
      %2478 = vrot.lane.b32.xlu0 %v2406, 110
      %v2479 = vpop.permute.xlu0 %2478
      %2480 = vrot.lane.b32.xlu0 %v2407, 110
      %v2481 = vpop.permute.xlu0 %2480
      %2482 = vrot.lane.b32.xlu0 %v2408, 110
      %v2483 = vpop.permute.xlu0 %2482
      %2484 = vrot.lane.b32.xlu0 %v2409, 110
      %v2485 = vpop.permute.xlu0 %2484
      %2486 = vrot.lane.b32.xlu0 %v2410, 110
      %v2487 = vpop.permute.xlu0 %2486
      %2488 = vrot.lane.b32.xlu0 %v2411, 110
      %v2489 = vpop.permute.xlu0 %2488
      %2490 = vrot.lane.b32.xlu0 %v2412, 110
      %v2491 = vpop.permute.xlu0 %2490
      %2492 = vrot.lane.b32.xlu0 %v2413, 110
      %v2493 = vpop.permute.xlu0 %2492
      %2494 = vrot.lane.b32.xlu0 %v2414, 110
      %v2495 = vpop.permute.xlu0 %2494
      %2496 = vrot.lane.b32.xlu0 %v2415, 110
      %v2497 = vpop.permute.xlu0 %2496
      %2498 = vrot.lane.b32.xlu0 %v2416, 110
      %v2499 = vpop.permute.xlu0 %2498
      %2500 = vrot.lane.b32.xlu0 %v2417, 110
      %v2501 = vpop.permute.xlu0 %2500
      %2502 = vrot.lane.b32.xlu0 %v2418, 110
      %v2503 = vpop.permute.xlu0 %2502
      %2504 = vrot.lane.b32.xlu0 %v2419, 110
      %v2505 = vpop.permute.xlu0 %2504
      %2506 = vrot.lane.b32.xlu0 %v2420, 110
      %v2507 = vpop.permute.xlu0 %2506
      %2508 = vrot.lane.b32.xlu0 %v2421, 110
      %v2509 = vpop.permute.xlu0 %2508
      %2510 = vrot.lane.b32.xlu0 %v2422, 110
      %v2511 = vpop.permute.xlu0 %2510
      %2512 = vrot.lane.b32.xlu0 %v2423, 110
      %v2513 = vpop.permute.xlu0 %2512
      %2514 = vrot.lane.b32.xlu0 %v2424, 110
      %v2515 = vpop.permute.xlu0 %2514
      %2516 = vrot.lane.b32.xlu0 %v2425, 110
      %v2517 = vpop.permute.xlu0 %2516
      %2518 = vrot.lane.b32.xlu0 %v2426, 110
      %v2519 = vpop.permute.xlu0 %2518
      %2520 = vrot.lane.b32.xlu0 %v2427, 110
      %v2521 = vpop.permute.xlu0 %2520
      %2522 = vrot.lane.b32.xlu0 %v2428, 110
      %v2523 = vpop.permute.xlu0 %2522
      %2524 = vrot.lane.b32.xlu0 %v2429, 110
      %v2525 = vpop.permute.xlu0 %2524
      %v2558 = vsub.f32 %v2142, %v2463
      %v2559 = vsub.f32 %v2143, %v2465
      %v2560 = vsub.f32 %v2144, %v2467
      %v2561 = vsub.f32 %v2145, %v2469
      %v2562 = vsub.f32 %v2146, %v2471
      %v2563 = vsub.f32 %v2147, %v2473
      %v2564 = vsub.f32 %v2148, %v2475
      %v2565 = vsub.f32 %v2149, %v2477
      %v2566 = vsub.f32 %v2150, %v2479
      %v2567 = vsub.f32 %v2151, %v2481
      %v2568 = vsub.f32 %v2152, %v2483
      %v2569 = vsub.f32 %v2153, %v2485
      %v2570 = vsub.f32 %v2154, %v2487
      %v2571 = vsub.f32 %v2155, %v2489
      %v2572 = vsub.f32 %v2156, %v2491
      %v2573 = vsub.f32 %v2157, %v2493
      %v2574 = vsub.f32 %v2158, %v2495
      %v2575 = vsub.f32 %v2159, %v2497
      %v2576 = vsub.f32 %v2160, %v2499
      %v2577 = vsub.f32 %v2161, %v2501
      %v2578 = vsub.f32 %v2162, %v2503
      %v2579 = vsub.f32 %v2163, %v2505
      %v2580 = vsub.f32 %v2164, %v2507
      %v2581 = vsub.f32 %v2165, %v2509
      %v2582 = vsub.f32 %v2166, %v2511
      %v2583 = vsub.f32 %v2167, %v2513
      %v2584 = vsub.f32 %v2168, %v2515
      %v2585 = vsub.f32 %v2169, %v2517
      %v2586 = vsub.f32 %v2170, %v2519
      %v2587 = vsub.f32 %v2171, %v2521
      %v2588 = vsub.f32 %v2172, %v2523
      %v2589 = vsub.f32 %v2173, %v2525
      %v2590 = vmax.f32 %v2558, 0.0
      %v2591 = vmax.f32 %v2559, 0.0
      %v2592 = vmax.f32 %v2560, 0.0
      %v2593 = vmax.f32 %v2561, 0.0
      %v2594 = vmax.f32 %v2562, 0.0
      %v2595 = vmax.f32 %v2563, 0.0
      %v2596 = vmax.f32 %v2564, 0.0
      %v2597 = vmax.f32 %v2565, 0.0
      %v2598 = vmax.f32 %v2566, 0.0
      %v2599 = vmax.f32 %v2567, 0.0
      %v2600 = vmax.f32 %v2568, 0.0
      %v2601 = vmax.f32 %v2569, 0.0
      %v2602 = vmax.f32 %v2570, 0.0
      %v2603 = vmax.f32 %v2571, 0.0
      %v2604 = vmax.f32 %v2572, 0.0
      %v2605 = vmax.f32 %v2573, 0.0
      %v2606 = vmax.f32 %v2574, 0.0
      %v2607 = vmax.f32 %v2575, 0.0
      %v2608 = vmax.f32 %v2576, 0.0
      %v2609 = vmax.f32 %v2577, 0.0
      %v2610 = vmax.f32 %v2578, 0.0
      %v2611 = vmax.f32 %v2579, 0.0
      %v2612 = vmax.f32 %v2580, 0.0
      %v2613 = vmax.f32 %v2581, 0.0
      %v2614 = vmax.f32 %v2582, 0.0
      %v2615 = vmax.f32 %v2583, 0.0
      %v2616 = vmax.f32 %v2584, 0.0
      %v2617 = vmax.f32 %v2585, 0.0
      %v2618 = vmax.f32 %v2586, 0.0
      %v2619 = vmax.f32 %v2587, 0.0
      %v2620 = vmax.f32 %v2588, 0.0
      %v2621 = vmax.f32 %v2589, 0.0
      %v2622 = vmin.f32 %v2590, 256.0
      %v2623 = vmin.f32 %v2591, 256.0
      %v2624 = vmin.f32 %v2592, 256.0
      %v2625 = vmin.f32 %v2593, 256.0
      %v2626 = vmin.f32 %v2594, 256.0
      %v2627 = vmin.f32 %v2595, 256.0
      %v2628 = vmin.f32 %v2596, 256.0
      %v2629 = vmin.f32 %v2597, 256.0
      %v2630 = vmin.f32 %v2598, 256.0
      %v2631 = vmin.f32 %v2599, 256.0
      %v2632 = vmin.f32 %v2600, 256.0
      %v2633 = vmin.f32 %v2601, 256.0
      %v2634 = vmin.f32 %v2602, 256.0
      %v2635 = vmin.f32 %v2603, 256.0
      %v2636 = vmin.f32 %v2604, 256.0
      %v2637 = vmin.f32 %v2605, 256.0
      %v2638 = vmin.f32 %v2606, 256.0
      %v2639 = vmin.f32 %v2607, 256.0
      %v2640 = vmin.f32 %v2608, 256.0
      %v2641 = vmin.f32 %v2609, 256.0
      %v2642 = vmin.f32 %v2610, 256.0
      %v2643 = vmin.f32 %v2611, 256.0
      %v2644 = vmin.f32 %v2612, 256.0
      %v2645 = vmin.f32 %v2613, 256.0
      %v2646 = vmin.f32 %v2614, 256.0
      %v2647 = vmin.f32 %v2615, 256.0
      %v2648 = vmin.f32 %v2616, 256.0
      %v2649 = vmin.f32 %v2617, 256.0
      %v2650 = vmin.f32 %v2618, 256.0
      %v2651 = vmin.f32 %v2619, 256.0
      %v2652 = vmin.f32 %v2620, 256.0
      %v2653 = vmin.f32 %v2621, 256.0
      %v2654 = vadd.f32 %v2142, %v2463
      %v2655 = vadd.f32 %v2143, %v2465
      %v2656 = vadd.f32 %v2144, %v2467
      %v2657 = vadd.f32 %v2145, %v2469
      %v2658 = vadd.f32 %v2146, %v2471
      %v2659 = vadd.f32 %v2147, %v2473
      %v2660 = vadd.f32 %v2148, %v2475
      %v2661 = vadd.f32 %v2149, %v2477
      %v2662 = vadd.f32 %v2150, %v2479
      %v2663 = vadd.f32 %v2151, %v2481
      %v2664 = vadd.f32 %v2152, %v2483
      %v2665 = vadd.f32 %v2153, %v2485
      %v2666 = vadd.f32 %v2154, %v2487
      %v2667 = vadd.f32 %v2155, %v2489
      %v2668 = vadd.f32 %v2156, %v2491
      %v2669 = vadd.f32 %v2157, %v2493
      %v2670 = vadd.f32 %v2158, %v2495
      %v2671 = vadd.f32 %v2159, %v2497
      %v2672 = vadd.f32 %v2160, %v2499
      %v2673 = vadd.f32 %v2161, %v2501
      %v2674 = vadd.f32 %v2162, %v2503
      %v2675 = vadd.f32 %v2163, %v2505
      %v2676 = vadd.f32 %v2164, %v2507
      %v2677 = vadd.f32 %v2165, %v2509
      %v2678 = vadd.f32 %v2166, %v2511
      %v2679 = vadd.f32 %v2167, %v2513
      %v2680 = vadd.f32 %v2168, %v2515
      %v2681 = vadd.f32 %v2169, %v2517
      %v2682 = vadd.f32 %v2170, %v2519
      %v2683 = vadd.f32 %v2171, %v2521
      %v2684 = vadd.f32 %v2172, %v2523
      %v2685 = vadd.f32 %v2173, %v2525
      %v2686 = vmax.f32 %v2654, 0.0
      %v2687 = vmax.f32 %v2655, 0.0
      %v2688 = vmax.f32 %v2656, 0.0
      %v2689 = vmax.f32 %v2657, 0.0
      %v2690 = vmax.f32 %v2658, 0.0
      %v2691 = vmax.f32 %v2659, 0.0
      %v2692 = vmax.f32 %v2660, 0.0
      %v2693 = vmax.f32 %v2661, 0.0
      %v2694 = vmax.f32 %v2662, 0.0
      %v2695 = vmax.f32 %v2663, 0.0
      %v2696 = vmax.f32 %v2664, 0.0
      %v2697 = vmax.f32 %v2665, 0.0
      %v2698 = vmax.f32 %v2666, 0.0
      %v2699 = vmax.f32 %v2667, 0.0
      %v2700 = vmax.f32 %v2668, 0.0
      %v2701 = vmax.f32 %v2669, 0.0
      %v2702 = vmax.f32 %v2670, 0.0
      %v2703 = vmax.f32 %v2671, 0.0
      %v2704 = vmax.f32 %v2672, 0.0
      %v2705 = vmax.f32 %v2673, 0.0
      %v2706 = vmax.f32 %v2674, 0.0
      %v2707 = vmax.f32 %v2675, 0.0
      %v2708 = vmax.f32 %v2676, 0.0
      %v2709 = vmax.f32 %v2677, 0.0
      %v2710 = vmax.f32 %v2678, 0.0
      %v2711 = vmax.f32 %v2679, 0.0
      %v2712 = vmax.f32 %v2680, 0.0
      %v2713 = vmax.f32 %v2681, 0.0
      %v2714 = vmax.f32 %v2682, 0.0
      %v2715 = vmax.f32 %v2683, 0.0
      %v2716 = vmax.f32 %v2684, 0.0
      %v2717 = vmax.f32 %v2685, 0.0
      %v2718 = vmin.f32 %v2686, 256.0
      %v2719 = vmin.f32 %v2687, 256.0
      %v2720 = vmin.f32 %v2688, 256.0
      %v2721 = vmin.f32 %v2689, 256.0
      %v2722 = vmin.f32 %v2690, 256.0
      %v2723 = vmin.f32 %v2691, 256.0
      %v2724 = vmin.f32 %v2692, 256.0
      %v2725 = vmin.f32 %v2693, 256.0
      %v2726 = vmin.f32 %v2694, 256.0
      %v2727 = vmin.f32 %v2695, 256.0
      %v2728 = vmin.f32 %v2696, 256.0
      %v2729 = vmin.f32 %v2697, 256.0
      %v2730 = vmin.f32 %v2698, 256.0
      %v2731 = vmin.f32 %v2699, 256.0
      %v2732 = vmin.f32 %v2700, 256.0
      %v2733 = vmin.f32 %v2701, 256.0
      %v2734 = vmin.f32 %v2702, 256.0
      %v2735 = vmin.f32 %v2703, 256.0
      %v2736 = vmin.f32 %v2704, 256.0
      %v2737 = vmin.f32 %v2705, 256.0
      %v2738 = vmin.f32 %v2706, 256.0
      %v2739 = vmin.f32 %v2707, 256.0
      %v2740 = vmin.f32 %v2708, 256.0
      %v2741 = vmin.f32 %v2709, 256.0
      %v2742 = vmin.f32 %v2710, 256.0
      %v2743 = vmin.f32 %v2711, 256.0
      %v2744 = vmin.f32 %v2712, 256.0
      %v2745 = vmin.f32 %v2713, 256.0
      %v2746 = vmin.f32 %v2714, 256.0
      %v2747 = vmin.f32 %v2715, 256.0
      %v2748 = vmin.f32 %v2716, 256.0
      %v2749 = vmin.f32 %v2717, 256.0
      %v2750 = vsub.f32 %v2718, %v2622
      %v2751 = vsub.f32 %v2719, %v2623
      %v2752 = vsub.f32 %v2720, %v2624
      %v2753 = vsub.f32 %v2721, %v2625
      %v2754 = vsub.f32 %v2722, %v2626
      %v2755 = vsub.f32 %v2723, %v2627
      %v2756 = vsub.f32 %v2724, %v2628
      %v2757 = vsub.f32 %v2725, %v2629
      %v2758 = vsub.f32 %v2726, %v2630
      %v2759 = vsub.f32 %v2727, %v2631
      %v2760 = vsub.f32 %v2728, %v2632
      %v2761 = vsub.f32 %v2729, %v2633
      %v2762 = vsub.f32 %v2730, %v2634
      %v2763 = vsub.f32 %v2731, %v2635
      %v2764 = vsub.f32 %v2732, %v2636
      %v2765 = vsub.f32 %v2733, %v2637
      %v2766 = vsub.f32 %v2734, %v2638
      %v2767 = vsub.f32 %v2735, %v2639
      %v2768 = vsub.f32 %v2736, %v2640
      %v2769 = vsub.f32 %v2737, %v2641
      %v2770 = vsub.f32 %v2738, %v2642
      %v2771 = vsub.f32 %v2739, %v2643
      %v2772 = vsub.f32 %v2740, %v2644
      %v2773 = vsub.f32 %v2741, %v2645
      %v2774 = vsub.f32 %v2742, %v2646
      %v2775 = vsub.f32 %v2743, %v2647
      %v2776 = vsub.f32 %v2744, %v2648
      %v2777 = vsub.f32 %v2745, %v2649
      %v2778 = vsub.f32 %v2746, %v2650
      %v2779 = vsub.f32 %v2747, %v2651
      %v2780 = vsub.f32 %v2748, %v2652
      %v2781 = vsub.f32 %v2749, %v2653
      %vm2782 = vcmp.ge.f32.partialorder %v2750, 16.0
      %vm2783 = vcmp.ge.f32.partialorder %v2751, 16.0
      %vm2784 = vcmp.ge.f32.partialorder %v2752, 16.0
      %vm2785 = vcmp.ge.f32.partialorder %v2753, 16.0
      %vm2786 = vcmp.ge.f32.partialorder %v2754, 16.0
      %vm2787 = vcmp.ge.f32.partialorder %v2755, 16.0
      %vm2788 = vcmp.ge.f32.partialorder %v2756, 16.0
      %vm2789 = vcmp.ge.f32.partialorder %v2757, 16.0
      %vm2790 = vcmp.ge.f32.partialorder %v2758, 16.0
      %vm2791 = vcmp.ge.f32.partialorder %v2759, 16.0
      %vm2792 = vcmp.ge.f32.partialorder %v2760, 16.0
      %vm2793 = vcmp.ge.f32.partialorder %v2761, 16.0
      %vm2794 = vcmp.ge.f32.partialorder %v2762, 16.0
      %vm2795 = vcmp.ge.f32.partialorder %v2763, 16.0
      %vm2796 = vcmp.ge.f32.partialorder %v2764, 16.0
      %vm2797 = vcmp.ge.f32.partialorder %v2765, 16.0
      %vm2798 = vcmp.ge.f32.partialorder %v2766, 16.0
      %vm2799 = vcmp.ge.f32.partialorder %v2767, 16.0
      %vm2800 = vcmp.ge.f32.partialorder %v2768, 16.0
      %vm2801 = vcmp.ge.f32.partialorder %v2769, 16.0
      %vm2802 = vcmp.ge.f32.partialorder %v2770, 16.0
      %vm2803 = vcmp.ge.f32.partialorder %v2771, 16.0
      %vm2804 = vcmp.ge.f32.partialorder %v2772, 16.0
      %vm2805 = vcmp.ge.f32.partialorder %v2773, 16.0
      %vm2806 = vcmp.ge.f32.partialorder %v2774, 16.0
      %vm2807 = vcmp.ge.f32.partialorder %v2775, 16.0
      %vm2808 = vcmp.ge.f32.partialorder %v2776, 16.0
      %vm2809 = vcmp.ge.f32.partialorder %v2777, 16.0
      %vm2810 = vcmp.ge.f32.partialorder %v2778, 16.0
      %vm2811 = vcmp.ge.f32.partialorder %v2779, 16.0
      %vm2812 = vcmp.ge.f32.partialorder %v2780, 16.0
      %vm2813 = vcmp.ge.f32.partialorder %v2781, 16.0
      %v2814 = vsel %vm2782, 1, 0
      %v2815 = vsel %vm2783, 1, 0
      %v2816 = vsel %vm2784, 1, 0
      %v2817 = vsel %vm2785, 1, 0
      %v2818 = vsel %vm2786, 1, 0
      %v2819 = vsel %vm2787, 1, 0
      %v2820 = vsel %vm2788, 1, 0
      %v2821 = vsel %vm2789, 1, 0
      %v2822 = vsel %vm2790, 1, 0
      %v2823 = vsel %vm2791, 1, 0
      %v2824 = vsel %vm2792, 1, 0
      %v2825 = vsel %vm2793, 1, 0
      %v2826 = vsel %vm2794, 1, 0
      %v2827 = vsel %vm2795, 1, 0
      %v2828 = vsel %vm2796, 1, 0
      %v2829 = vsel %vm2797, 1, 0
      %v2830 = vsel %vm2798, 1, 0
      %v2831 = vsel %vm2799, 1, 0
      %v2832 = vsel %vm2800, 1, 0
      %v2833 = vsel %vm2801, 1, 0
      %v2834 = vsel %vm2802, 1, 0
      %v2835 = vsel %vm2803, 1, 0
      %v2836 = vsel %vm2804, 1, 0
      %v2837 = vsel %vm2805, 1, 0
      %v2838 = vsel %vm2806, 1, 0
      %v2839 = vsel %vm2807, 1, 0
      %v2840 = vsel %vm2808, 1, 0
      %v2841 = vsel %vm2809, 1, 0
      %v2842 = vsel %vm2810, 1, 0
      %v2843 = vsel %vm2811, 1, 0
      %v2844 = vsel %vm2812, 1, 0
      %v2845 = vsel %vm2813, 1, 0
      %2846 = vrot.lane.b32.xlu0 %v2814, 119
      %v2847 = vpop.permute.xlu0 %2846
      %2848 = vrot.lane.b32.xlu0 %v2815, 119
      %v2849 = vpop.permute.xlu0 %2848
      %2850 = vrot.lane.b32.xlu0 %v2816, 119
      %v2851 = vpop.permute.xlu0 %2850
      %2852 = vrot.lane.b32.xlu0 %v2817, 119
      %v2853 = vpop.permute.xlu0 %2852
      %2854 = vrot.lane.b32.xlu0 %v2818, 119
      %v2855 = vpop.permute.xlu0 %2854
      %2856 = vrot.lane.b32.xlu0 %v2819, 119
      %v2857 = vpop.permute.xlu0 %2856
      %2858 = vrot.lane.b32.xlu0 %v2820, 119
      %v2859 = vpop.permute.xlu0 %2858
      %2860 = vrot.lane.b32.xlu0 %v2821, 119
      %v2861 = vpop.permute.xlu0 %2860
      %2862 = vrot.lane.b32.xlu0 %v2822, 119
      %v2863 = vpop.permute.xlu0 %2862
      %2864 = vrot.lane.b32.xlu0 %v2823, 119
      %v2865 = vpop.permute.xlu0 %2864
      %2866 = vrot.lane.b32.xlu0 %v2824, 119
      %v2867 = vpop.permute.xlu0 %2866
      %2868 = vrot.lane.b32.xlu0 %v2825, 119
      %v2869 = vpop.permute.xlu0 %2868
      %2870 = vrot.lane.b32.xlu0 %v2826, 119
      %v2871 = vpop.permute.xlu0 %2870
      %2872 = vrot.lane.b32.xlu0 %v2827, 119
      %v2873 = vpop.permute.xlu0 %2872
      %2874 = vrot.lane.b32.xlu0 %v2828, 119
      %v2875 = vpop.permute.xlu0 %2874
      %2876 = vrot.lane.b32.xlu0 %v2829, 119
      %v2877 = vpop.permute.xlu0 %2876
      %2878 = vrot.lane.b32.xlu0 %v2830, 119
      %v2879 = vpop.permute.xlu0 %2878
      %2880 = vrot.lane.b32.xlu0 %v2831, 119
      %v2881 = vpop.permute.xlu0 %2880
      %2882 = vrot.lane.b32.xlu0 %v2832, 119
      %v2883 = vpop.permute.xlu0 %2882
      %2884 = vrot.lane.b32.xlu0 %v2833, 119
      %v2885 = vpop.permute.xlu0 %2884
      %2886 = vrot.lane.b32.xlu0 %v2834, 119
      %v2887 = vpop.permute.xlu0 %2886
      %2888 = vrot.lane.b32.xlu0 %v2835, 119
      %v2889 = vpop.permute.xlu0 %2888
      %2890 = vrot.lane.b32.xlu0 %v2836, 119
      %v2891 = vpop.permute.xlu0 %2890
      %2892 = vrot.lane.b32.xlu0 %v2837, 119
      %v2893 = vpop.permute.xlu0 %2892
      %2894 = vrot.lane.b32.xlu0 %v2838, 119
      %v2895 = vpop.permute.xlu0 %2894
      %2896 = vrot.lane.b32.xlu0 %v2839, 119
      %v2897 = vpop.permute.xlu0 %2896
      %2898 = vrot.lane.b32.xlu0 %v2840, 119
      %v2899 = vpop.permute.xlu0 %2898
      %2900 = vrot.lane.b32.xlu0 %v2841, 119
      %v2901 = vpop.permute.xlu0 %2900
      %2902 = vrot.lane.b32.xlu0 %v2842, 119
      %v2903 = vpop.permute.xlu0 %2902
      %2904 = vrot.lane.b32.xlu0 %v2843, 119
      %v2905 = vpop.permute.xlu0 %2904
      %2906 = vrot.lane.b32.xlu0 %v2844, 119
      %v2907 = vpop.permute.xlu0 %2906
      %2908 = vrot.lane.b32.xlu0 %v2845, 119
      %v2909 = vpop.permute.xlu0 %2908
      %vm2910 = vcmp.ne.s32.totalorder %v2847, 0
      %vm2911 = vcmp.ne.s32.totalorder %v2849, 0
      %vm2912 = vcmp.ne.s32.totalorder %v2851, 0
      %vm2913 = vcmp.ne.s32.totalorder %v2853, 0
      %vm2914 = vcmp.ne.s32.totalorder %v2855, 0
      %vm2915 = vcmp.ne.s32.totalorder %v2857, 0
      %vm2916 = vcmp.ne.s32.totalorder %v2859, 0
      %vm2917 = vcmp.ne.s32.totalorder %v2861, 0
      %vm2918 = vcmp.ne.s32.totalorder %v2863, 0
      %vm2919 = vcmp.ne.s32.totalorder %v2865, 0
      %vm2920 = vcmp.ne.s32.totalorder %v2867, 0
      %vm2921 = vcmp.ne.s32.totalorder %v2869, 0
      %vm2922 = vcmp.ne.s32.totalorder %v2871, 0
      %vm2923 = vcmp.ne.s32.totalorder %v2873, 0
      %vm2924 = vcmp.ne.s32.totalorder %v2875, 0
      %vm2925 = vcmp.ne.s32.totalorder %v2877, 0
      %vm2926 = vcmp.ne.s32.totalorder %v2879, 0
      %vm2927 = vcmp.ne.s32.totalorder %v2881, 0
      %vm2928 = vcmp.ne.s32.totalorder %v2883, 0
      %vm2929 = vcmp.ne.s32.totalorder %v2885, 0
      %vm2930 = vcmp.ne.s32.totalorder %v2887, 0
      %vm2931 = vcmp.ne.s32.totalorder %v2889, 0
      %vm2932 = vcmp.ne.s32.totalorder %v2891, 0
      %vm2933 = vcmp.ne.s32.totalorder %v2893, 0
      %vm2934 = vcmp.ne.s32.totalorder %v2895, 0
      %vm2935 = vcmp.ne.s32.totalorder %v2897, 0
      %vm2936 = vcmp.ne.s32.totalorder %v2899, 0
      %vm2937 = vcmp.ne.s32.totalorder %v2901, 0
      %vm2938 = vcmp.ne.s32.totalorder %v2903, 0
      %vm2939 = vcmp.ne.s32.totalorder %v2905, 0
      %vm2940 = vcmp.ne.s32.totalorder %v2907, 0
      %vm2941 = vcmp.ne.s32.totalorder %v2909, 0
      %vm2942 = vmand %vm2782, %vm2910
      %vm2943 = vmand %vm2783, %vm2911
      %vm2944 = vmand %vm2784, %vm2912
      %vm2945 = vmand %vm2785, %vm2913
      %vm2946 = vmand %vm2786, %vm2914
      %vm2947 = vmand %vm2787, %vm2915
      %vm2948 = vmand %vm2788, %vm2916
      %vm2949 = vmand %vm2789, %vm2917
      %vm2950 = vmand %vm2790, %vm2918
      %vm2951 = vmand %vm2791, %vm2919
      %vm2952 = vmand %vm2792, %vm2920
      %vm2953 = vmand %vm2793, %vm2921
      %vm2954 = vmand %vm2794, %vm2922
      %vm2955 = vmand %vm2795, %vm2923
      %vm2956 = vmand %vm2796, %vm2924
      %vm2957 = vmand %vm2797, %vm2925
      %vm2958 = vmand %vm2798, %vm2926
      %vm2959 = vmand %vm2799, %vm2927
      %vm2960 = vmand %vm2800, %vm2928
      %vm2961 = vmand %vm2801, %vm2929
      %vm2962 = vmand %vm2802, %vm2930
      %vm2963 = vmand %vm2803, %vm2931
      %vm2964 = vmand %vm2804, %vm2932
      %vm2965 = vmand %vm2805, %vm2933
      %vm2966 = vmand %vm2806, %vm2934
      %vm2967 = vmand %vm2807, %vm2935
      %vm2968 = vmand %vm2808, %vm2936
      %vm2969 = vmand %vm2809, %vm2937
      %vm2970 = vmand %vm2810, %vm2938
      %vm2971 = vmand %vm2811, %vm2939
      %vm2972 = vmand %vm2812, %vm2940
      %vm2973 = vmand %vm2813, %vm2941
      %3006 = vrot.lane.b32.xlu0 %v1791, 9
      %v3007 = vpop.permute.xlu0 %3006
      %3008 = vrot.lane.b32.xlu0 %v1793, 9
      %v3009 = vpop.permute.xlu0 %3008
      %3010 = vrot.lane.b32.xlu0 %v1795, 9
      %v3011 = vpop.permute.xlu0 %3010
      %3012 = vrot.lane.b32.xlu0 %v1797, 9
      %v3013 = vpop.permute.xlu0 %3012
      %3014 = vrot.lane.b32.xlu0 %v1799, 9
      %v3015 = vpop.permute.xlu0 %3014
      %3016 = vrot.lane.b32.xlu0 %v1801, 9
      %v3017 = vpop.permute.xlu0 %3016
      %3018 = vrot.lane.b32.xlu0 %v1803, 9
      %v3019 = vpop.permute.xlu0 %3018
      %3020 = vrot.lane.b32.xlu0 %v1805, 9
      %v3021 = vpop.permute.xlu0 %3020
      %3022 = vrot.lane.b32.xlu0 %v1807, 9
      %v3023 = vpop.permute.xlu0 %3022
      %3024 = vrot.lane.b32.xlu0 %v1809, 9
      %v3025 = vpop.permute.xlu0 %3024
      %3026 = vrot.lane.b32.xlu0 %v1811, 9
      %v3027 = vpop.permute.xlu0 %3026
      %3028 = vrot.lane.b32.xlu0 %v1813, 9
      %v3029 = vpop.permute.xlu0 %3028
      %3030 = vrot.lane.b32.xlu0 %v1815, 9
      %v3031 = vpop.permute.xlu0 %3030
      %3032 = vrot.lane.b32.xlu0 %v1817, 9
      %v3033 = vpop.permute.xlu0 %3032
      %3034 = vrot.lane.b32.xlu0 %v1819, 9
      %v3035 = vpop.permute.xlu0 %3034
      %3036 = vrot.lane.b32.xlu0 %v1821, 9
      %v3037 = vpop.permute.xlu0 %3036
      %3038 = vrot.lane.b32.xlu0 %v1823, 9
      %v3039 = vpop.permute.xlu0 %3038
      %3040 = vrot.lane.b32.xlu0 %v1825, 9
      %v3041 = vpop.permute.xlu0 %3040
      %3042 = vrot.lane.b32.xlu0 %v1827, 9
      %v3043 = vpop.permute.xlu0 %3042
      %3044 = vrot.lane.b32.xlu0 %v1829, 9
      %v3045 = vpop.permute.xlu0 %3044
      %3046 = vrot.lane.b32.xlu0 %v1831, 9
      %v3047 = vpop.permute.xlu0 %3046
      %3048 = vrot.lane.b32.xlu0 %v1833, 9
      %v3049 = vpop.permute.xlu0 %3048
      %3050 = vrot.lane.b32.xlu0 %v1835, 9
      %v3051 = vpop.permute.xlu0 %3050
      %3052 = vrot.lane.b32.xlu0 %v1837, 9
      %v3053 = vpop.permute.xlu0 %3052
      %3054 = vrot.lane.b32.xlu0 %v1839, 9
      %v3055 = vpop.permute.xlu0 %3054
      %3056 = vrot.lane.b32.xlu0 %v1841, 9
      %v3057 = vpop.permute.xlu0 %3056
      %3058 = vrot.lane.b32.xlu0 %v1843, 9
      %v3059 = vpop.permute.xlu0 %3058
      %3060 = vrot.lane.b32.xlu0 %v1845, 9
      %v3061 = vpop.permute.xlu0 %3060
      %3062 = vrot.lane.b32.xlu0 %v1847, 9
      %v3063 = vpop.permute.xlu0 %3062
      %3064 = vrot.lane.b32.xlu0 %v1849, 9
      %v3065 = vpop.permute.xlu0 %3064
      %3066 = vrot.lane.b32.xlu0 %v1851, 9
      %v3067 = vpop.permute.xlu0 %3066
      %3068 = vrot.lane.b32.xlu0 %v1853, 9
      %v3069 = vpop.permute.xlu0 %3068
      %v3102 = vsel %vm2942, %v3007, -1e+09
      %v3103 = vsel %vm2943, %v3009, -1e+09
      %v3104 = vsel %vm2944, %v3011, -1e+09
      %v3105 = vsel %vm2945, %v3013, -1e+09
      %v3106 = vsel %vm2946, %v3015, -1e+09
      %v3107 = vsel %vm2947, %v3017, -1e+09
      %v3108 = vsel %vm2948, %v3019, -1e+09
      %v3109 = vsel %vm2949, %v3021, -1e+09
      %v3110 = vsel %vm2950, %v3023, -1e+09
      %v3111 = vsel %vm2951, %v3025, -1e+09
      %v3112 = vsel %vm2952, %v3027, -1e+09
      %v3113 = vsel %vm2953, %v3029, -1e+09
      %v3114 = vsel %vm2954, %v3031, -1e+09
      %v3115 = vsel %vm2955, %v3033, -1e+09
      %v3116 = vsel %vm2956, %v3035, -1e+09
      %v3117 = vsel %vm2957, %v3037, -1e+09
      %v3118 = vsel %vm2958, %v3039, -1e+09
      %v3119 = vsel %vm2959, %v3041, -1e+09
      %v3120 = vsel %vm2960, %v3043, -1e+09
      %v3121 = vsel %vm2961, %v3045, -1e+09
      %v3122 = vsel %vm2962, %v3047, -1e+09
      %v3123 = vsel %vm2963, %v3049, -1e+09
      %v3124 = vsel %vm2964, %v3051, -1e+09
      %v3125 = vsel %vm2965, %v3053, -1e+09
      %v3126 = vsel %vm2966, %v3055, -1e+09
      %v3127 = vsel %vm2967, %v3057, -1e+09
      %v3128 = vsel %vm2968, %v3059, -1e+09
      %v3129 = vsel %vm2969, %v3061, -1e+09
      %v3130 = vsel %vm2970, %v3063, -1e+09
      %v3131 = vsel %vm2971, %v3065, -1e+09
      %v3132 = vsel %vm2972, %v3067, -1e+09
      %v3133 = vsel %vm2973, %v3069, -1e+09
      %3134 = vrot.lane.b32.xlu0 %v1791, 119
      %v3135 = vpop.permute.xlu0 %3134
      %3136 = vrot.lane.b32.xlu0 %v1793, 119
      %v3137 = vpop.permute.xlu0 %3136
      %3138 = vrot.lane.b32.xlu0 %v1795, 119
      %v3139 = vpop.permute.xlu0 %3138
      %3140 = vrot.lane.b32.xlu0 %v1797, 119
      %v3141 = vpop.permute.xlu0 %3140
      %3142 = vrot.lane.b32.xlu0 %v1799, 119
      %v3143 = vpop.permute.xlu0 %3142
      %3144 = vrot.lane.b32.xlu0 %v1801, 119
      %v3145 = vpop.permute.xlu0 %3144
      %3146 = vrot.lane.b32.xlu0 %v1803, 119
      %v3147 = vpop.permute.xlu0 %3146
      %3148 = vrot.lane.b32.xlu0 %v1805, 119
      %v3149 = vpop.permute.xlu0 %3148
      %3150 = vrot.lane.b32.xlu0 %v1807, 119
      %v3151 = vpop.permute.xlu0 %3150
      %3152 = vrot.lane.b32.xlu0 %v1809, 119
      %v3153 = vpop.permute.xlu0 %3152
      %3154 = vrot.lane.b32.xlu0 %v1811, 119
      %v3155 = vpop.permute.xlu0 %3154
      %3156 = vrot.lane.b32.xlu0 %v1813, 119
      %v3157 = vpop.permute.xlu0 %3156
      %3158 = vrot.lane.b32.xlu0 %v1815, 119
      %v3159 = vpop.permute.xlu0 %3158
      %3160 = vrot.lane.b32.xlu0 %v1817, 119
      %v3161 = vpop.permute.xlu0 %3160
      %3162 = vrot.lane.b32.xlu0 %v1819, 119
      %v3163 = vpop.permute.xlu0 %3162
      %3164 = vrot.lane.b32.xlu0 %v1821, 119
      %v3165 = vpop.permute.xlu0 %3164
      %3166 = vrot.lane.b32.xlu0 %v1823, 119
      %v3167 = vpop.permute.xlu0 %3166
      %3168 = vrot.lane.b32.xlu0 %v1825, 119
      %v3169 = vpop.permute.xlu0 %3168
      %3170 = vrot.lane.b32.xlu0 %v1827, 119
      %v3171 = vpop.permute.xlu0 %3170
      %3172 = vrot.lane.b32.xlu0 %v1829, 119
      %v3173 = vpop.permute.xlu0 %3172
      %3174 = vrot.lane.b32.xlu0 %v1831, 119
      %v3175 = vpop.permute.xlu0 %3174
      %3176 = vrot.lane.b32.xlu0 %v1833, 119
      %v3177 = vpop.permute.xlu0 %3176
      %3178 = vrot.lane.b32.xlu0 %v1835, 119
      %v3179 = vpop.permute.xlu0 %3178
      %3180 = vrot.lane.b32.xlu0 %v1837, 119
      %v3181 = vpop.permute.xlu0 %3180
      %3182 = vrot.lane.b32.xlu0 %v1839, 119
      %v3183 = vpop.permute.xlu0 %3182
      %3184 = vrot.lane.b32.xlu0 %v1841, 119
      %v3185 = vpop.permute.xlu0 %3184
      %3186 = vrot.lane.b32.xlu0 %v1843, 119
      %v3187 = vpop.permute.xlu0 %3186
      %3188 = vrot.lane.b32.xlu0 %v1845, 119
      %v3189 = vpop.permute.xlu0 %3188
      %3190 = vrot.lane.b32.xlu0 %v1847, 119
      %v3191 = vpop.permute.xlu0 %3190
      %3192 = vrot.lane.b32.xlu0 %v1849, 119
      %v3193 = vpop.permute.xlu0 %3192
      %3194 = vrot.lane.b32.xlu0 %v1851, 119
      %v3195 = vpop.permute.xlu0 %3194
      %3196 = vrot.lane.b32.xlu0 %v1853, 119
      %v3197 = vpop.permute.xlu0 %3196
      %vm3230 = vcmask 515504
      %3231 = vst.msk [vmem:[%s253] sm:$0xff] %vm3230, %v3135
      %3232 = vst.msk [vmem:[%s253 + $0x8] sm:$0xff] %vm3230, %v3137
      %3233 = vst.msk [vmem:[%s253 + $0x10] sm:$0xff] %vm3230, %v3139
      %3234 = vst.msk [vmem:[%s253 + $0x18] sm:$0xff] %vm3230, %v3141
      %3235 = vst.msk [vmem:[%s253 + $0x20] sm:$0xff] %vm3230, %v3143
      %3236 = vst.msk [vmem:[%s253 + $0x28] sm:$0xff] %vm3230, %v3145
      %3237 = vst.msk [vmem:[%s253 + $0x30] sm:$0xff] %vm3230, %v3147
      %3238 = vst.msk [vmem:[%s253 + $0x38] sm:$0xff] %vm3230, %v3149
      %3239 = vst.msk [vmem:[%s253 + $0x40] sm:$0xff] %vm3230, %v3151
      %3240 = vst.msk [vmem:[%s253 + $0x48] sm:$0xff] %vm3230, %v3153
      %3241 = vst.msk [vmem:[%s253 + $0x50] sm:$0xff] %vm3230, %v3155
      %3242 = vst.msk [vmem:[%s253 + $0x58] sm:$0xff] %vm3230, %v3157
      %3243 = vst.msk [vmem:[%s253 + $0x60] sm:$0xff] %vm3230, %v3159
      %3244 = vst.msk [vmem:[%s253 + $0x68] sm:$0xff] %vm3230, %v3161
      %3245 = vst.msk [vmem:[%s253 + $0x70] sm:$0xff] %vm3230, %v3163
      %3246 = vst.msk [vmem:[%s253 + $0x78] sm:$0xff] %vm3230, %v3165
      %3247 = vst.msk [vmem:[%s253 + $0x80] sm:$0xff] %vm3230, %v3167
      %3248 = vst.msk [vmem:[%s253 + $0x88] sm:$0xff] %vm3230, %v3169
      %3249 = vst.msk [vmem:[%s253 + $0x90] sm:$0xff] %vm3230, %v3171
      %3250 = vst.msk [vmem:[%s253 + $0x98] sm:$0xff] %vm3230, %v3173
      %3251 = vst.msk [vmem:[%s253 + $0xa0] sm:$0xff] %vm3230, %v3175
      %3252 = vst.msk [vmem:[%s253 + $0xa8] sm:$0xff] %vm3230, %v3177
      %3253 = vst.msk [vmem:[%s253 + $0xb0] sm:$0xff] %vm3230, %v3179
      %3254 = vst.msk [vmem:[%s253 + $0xb8] sm:$0xff] %vm3230, %v3181
      %3255 = vst.msk [vmem:[%s253 + $0xc0] sm:$0xff] %vm3230, %v3183
      %3256 = vst.msk [vmem:[%s253 + $0xc8] sm:$0xff] %vm3230, %v3185
      %3257 = vst.msk [vmem:[%s253 + $0xd0] sm:$0xff] %vm3230, %v3187
      %3258 = vst.msk [vmem:[%s253 + $0xd8] sm:$0xff] %vm3230, %v3189
      %3259 = vst.msk [vmem:[%s253 + $0xe0] sm:$0xff] %vm3230, %v3191
      %3260 = vst.msk [vmem:[%s253 + $0xe8] sm:$0xff] %vm3230, %v3193
      %3261 = vst.msk [vmem:[%s253 + $0xf0] sm:$0xff] %vm3230, %v3195
      %3262 = vst.msk [vmem:[%s253 + $0xf8] sm:$0xff] %vm3230, %v3197
      %3295 = vrot.lane.b32.xlu0 %v2622, 119
      %v3296 = vpop.permute.xlu0 %3295
      %3297 = vrot.lane.b32.xlu0 %v2623, 119
      %v3298 = vpop.permute.xlu0 %3297
      %3299 = vrot.lane.b32.xlu0 %v2624, 119
      %v3300 = vpop.permute.xlu0 %3299
      %3301 = vrot.lane.b32.xlu0 %v2625, 119
      %v3302 = vpop.permute.xlu0 %3301
      %3303 = vrot.lane.b32.xlu0 %v2626, 119
      %v3304 = vpop.permute.xlu0 %3303
      %3305 = vrot.lane.b32.xlu0 %v2627, 119
      %v3306 = vpop.permute.xlu0 %3305
      %3307 = vrot.lane.b32.xlu0 %v2628, 119
      %v3308 = vpop.permute.xlu0 %3307
      %3309 = vrot.lane.b32.xlu0 %v2629, 119
      %v3310 = vpop.permute.xlu0 %3309
      %3311 = vrot.lane.b32.xlu0 %v2630, 119
      %v3312 = vpop.permute.xlu0 %3311
      %3313 = vrot.lane.b32.xlu0 %v2631, 119
      %v3314 = vpop.permute.xlu0 %3313
      %3315 = vrot.lane.b32.xlu0 %v2632, 119
      %v3316 = vpop.permute.xlu0 %3315
      %3317 = vrot.lane.b32.xlu0 %v2633, 119
      %v3318 = vpop.permute.xlu0 %3317
      %3319 = vrot.lane.b32.xlu0 %v2634, 119
      %v3320 = vpop.permute.xlu0 %3319
      %3321 = vrot.lane.b32.xlu0 %v2635, 119
      %v3322 = vpop.permute.xlu0 %3321
      %3323 = vrot.lane.b32.xlu0 %v2636, 119
      %v3324 = vpop.permute.xlu0 %3323
      %3325 = vrot.lane.b32.xlu0 %v2637, 119
      %v3326 = vpop.permute.xlu0 %3325
      %3327 = vrot.lane.b32.xlu0 %v2638, 119
      %v3328 = vpop.permute.xlu0 %3327
      %3329 = vrot.lane.b32.xlu0 %v2639, 119
      %v3330 = vpop.permute.xlu0 %3329
      %3331 = vrot.lane.b32.xlu0 %v2640, 119
      %v3332 = vpop.permute.xlu0 %3331
      %3333 = vrot.lane.b32.xlu0 %v2641, 119
      %v3334 = vpop.permute.xlu0 %3333
      %3335 = vrot.lane.b32.xlu0 %v2642, 119
      %v3336 = vpop.permute.xlu0 %3335
      %3337 = vrot.lane.b32.xlu0 %v2643, 119
      %v3338 = vpop.permute.xlu0 %3337
      %3339 = vrot.lane.b32.xlu0 %v2644, 119
      %v3340 = vpop.permute.xlu0 %3339
      %3341 = vrot.lane.b32.xlu0 %v2645, 119
      %v3342 = vpop.permute.xlu0 %3341
      %3343 = vrot.lane.b32.xlu0 %v2646, 119
      %v3344 = vpop.permute.xlu0 %3343
      %3345 = vrot.lane.b32.xlu0 %v2647, 119
      %v3346 = vpop.permute.xlu0 %3345
      %3347 = vrot.lane.b32.xlu0 %v2648, 119
      %v3348 = vpop.permute.xlu0 %3347
      %3349 = vrot.lane.b32.xlu0 %v2649, 119
      %v3350 = vpop.permute.xlu0 %3349
      %3351 = vrot.lane.b32.xlu0 %v2650, 119
      %v3352 = vpop.permute.xlu0 %3351
      %3353 = vrot.lane.b32.xlu0 %v2651, 119
      %v3354 = vpop.permute.xlu0 %3353
      %3355 = vrot.lane.b32.xlu0 %v2652, 119
      %v3356 = vpop.permute.xlu0 %3355
      %3357 = vrot.lane.b32.xlu0 %v2653, 119
      %v3358 = vpop.permute.xlu0 %3357
      %vm3391 = vcmask 589304
      %3392 = vst.msk [vmem:[%s253] sm:$0xff] %vm3391, %v3296
      %3393 = vst.msk [vmem:[%s253 + $0x8] sm:$0xff] %vm3391, %v3298
      %3394 = vst.msk [vmem:[%s253 + $0x10] sm:$0xff] %vm3391, %v3300
      %3395 = vst.msk [vmem:[%s253 + $0x18] sm:$0xff] %vm3391, %v3302
      %3396 = vst.msk [vmem:[%s253 + $0x20] sm:$0xff] %vm3391, %v3304
      %3397 = vst.msk [vmem:[%s253 + $0x28] sm:$0xff] %vm3391, %v3306
      %3398 = vst.msk [vmem:[%s253 + $0x30] sm:$0xff] %vm3391, %v3308
      %3399 = vst.msk [vmem:[%s253 + $0x38] sm:$0xff] %vm3391, %v3310
      %3400 = vst.msk [vmem:[%s253 + $0x40] sm:$0xff] %vm3391, %v3312
      %3401 = vst.msk [vmem:[%s253 + $0x48] sm:$0xff] %vm3391, %v3314
      %3402 = vst.msk [vmem:[%s253 + $0x50] sm:$0xff] %vm3391, %v3316
      %3403 = vst.msk [vmem:[%s253 + $0x58] sm:$0xff] %vm3391, %v3318
      %3404 = vst.msk [vmem:[%s253 + $0x60] sm:$0xff] %vm3391, %v3320
      %3405 = vst.msk [vmem:[%s253 + $0x68] sm:$0xff] %vm3391, %v3322
      %3406 = vst.msk [vmem:[%s253 + $0x70] sm:$0xff] %vm3391, %v3324
      %3407 = vst.msk [vmem:[%s253 + $0x78] sm:$0xff] %vm3391, %v3326
      %3408 = vst.msk [vmem:[%s253 + $0x80] sm:$0xff] %vm3391, %v3328
      %3409 = vst.msk [vmem:[%s253 + $0x88] sm:$0xff] %vm3391, %v3330
      %3410 = vst.msk [vmem:[%s253 + $0x90] sm:$0xff] %vm3391, %v3332
      %3411 = vst.msk [vmem:[%s253 + $0x98] sm:$0xff] %vm3391, %v3334
      %3412 = vst.msk [vmem:[%s253 + $0xa0] sm:$0xff] %vm3391, %v3336
      %3413 = vst.msk [vmem:[%s253 + $0xa8] sm:$0xff] %vm3391, %v3338
      %3414 = vst.msk [vmem:[%s253 + $0xb0] sm:$0xff] %vm3391, %v3340
      %3415 = vst.msk [vmem:[%s253 + $0xb8] sm:$0xff] %vm3391, %v3342
      %3416 = vst.msk [vmem:[%s253 + $0xc0] sm:$0xff] %vm3391, %v3344
      %3417 = vst.msk [vmem:[%s253 + $0xc8] sm:$0xff] %vm3391, %v3346
      %3418 = vst.msk [vmem:[%s253 + $0xd0] sm:$0xff] %vm3391, %v3348
      %3419 = vst.msk [vmem:[%s253 + $0xd8] sm:$0xff] %vm3391, %v3350
      %3420 = vst.msk [vmem:[%s253 + $0xe0] sm:$0xff] %vm3391, %v3352
      %3421 = vst.msk [vmem:[%s253 + $0xe8] sm:$0xff] %vm3391, %v3354
      %3422 = vst.msk [vmem:[%s253 + $0xf0] sm:$0xff] %vm3391, %v3356
      %3423 = vst.msk [vmem:[%s253 + $0xf8] sm:$0xff] %vm3391, %v3358
      %vm3424 = vcmask 663104
      %3425 = vst.msk [vmem:[%s253] sm:$0xff] %vm3424, %v3296
      %3426 = vst.msk [vmem:[%s253 + $0x8] sm:$0xff] %vm3424, %v3298
      %3427 = vst.msk [vmem:[%s253 + $0x10] sm:$0xff] %vm3424, %v3300
      %3428 = vst.msk [vmem:[%s253 + $0x18] sm:$0xff] %vm3424, %v3302
      %3429 = vst.msk [vmem:[%s253 + $0x20] sm:$0xff] %vm3424, %v3304
      %3430 = vst.msk [vmem:[%s253 + $0x28] sm:$0xff] %vm3424, %v3306
      %3431 = vst.msk [vmem:[%s253 + $0x30] sm:$0xff] %vm3424, %v3308
      %3432 = vst.msk [vmem:[%s253 + $0x38] sm:$0xff] %vm3424, %v3310
      %3433 = vst.msk [vmem:[%s253 + $0x40] sm:$0xff] %vm3424, %v3312
      %3434 = vst.msk [vmem:[%s253 + $0x48] sm:$0xff] %vm3424, %v3314
      %3435 = vst.msk [vmem:[%s253 + $0x50] sm:$0xff] %vm3424, %v3316
      %3436 = vst.msk [vmem:[%s253 + $0x58] sm:$0xff] %vm3424, %v3318
      %3437 = vst.msk [vmem:[%s253 + $0x60] sm:$0xff] %vm3424, %v3320
      %3438 = vst.msk [vmem:[%s253 + $0x68] sm:$0xff] %vm3424, %v3322
      %3439 = vst.msk [vmem:[%s253 + $0x70] sm:$0xff] %vm3424, %v3324
      %3440 = vst.msk [vmem:[%s253 + $0x78] sm:$0xff] %vm3424, %v3326
      %3441 = vst.msk [vmem:[%s253 + $0x80] sm:$0xff] %vm3424, %v3328
      %3442 = vst.msk [vmem:[%s253 + $0x88] sm:$0xff] %vm3424, %v3330
      %3443 = vst.msk [vmem:[%s253 + $0x90] sm:$0xff] %vm3424, %v3332
      %3444 = vst.msk [vmem:[%s253 + $0x98] sm:$0xff] %vm3424, %v3334
      %3445 = vst.msk [vmem:[%s253 + $0xa0] sm:$0xff] %vm3424, %v3336
      %3446 = vst.msk [vmem:[%s253 + $0xa8] sm:$0xff] %vm3424, %v3338
      %3447 = vst.msk [vmem:[%s253 + $0xb0] sm:$0xff] %vm3424, %v3340
      %3448 = vst.msk [vmem:[%s253 + $0xb8] sm:$0xff] %vm3424, %v3342
      %3449 = vst.msk [vmem:[%s253 + $0xc0] sm:$0xff] %vm3424, %v3344
      %3450 = vst.msk [vmem:[%s253 + $0xc8] sm:$0xff] %vm3424, %v3346
      %3451 = vst.msk [vmem:[%s253 + $0xd0] sm:$0xff] %vm3424, %v3348
      %3452 = vst.msk [vmem:[%s253 + $0xd8] sm:$0xff] %vm3424, %v3350
      %3453 = vst.msk [vmem:[%s253 + $0xe0] sm:$0xff] %vm3424, %v3352
      %3454 = vst.msk [vmem:[%s253 + $0xe8] sm:$0xff] %vm3424, %v3354
      %3455 = vst.msk [vmem:[%s253 + $0xf0] sm:$0xff] %vm3424, %v3356
      %3456 = vst.msk [vmem:[%s253 + $0xf8] sm:$0xff] %vm3424, %v3358
      %3489 = vrot.lane.b32.xlu0 %v2718, 9
      %v3490 = vpop.permute.xlu0 %3489
      %3491 = vrot.lane.b32.xlu0 %v2719, 9
      %v3492 = vpop.permute.xlu0 %3491
      %3493 = vrot.lane.b32.xlu0 %v2720, 9
      %v3494 = vpop.permute.xlu0 %3493
      %3495 = vrot.lane.b32.xlu0 %v2721, 9
      %v3496 = vpop.permute.xlu0 %3495
      %3497 = vrot.lane.b32.xlu0 %v2722, 9
      %v3498 = vpop.permute.xlu0 %3497
      %3499 = vrot.lane.b32.xlu0 %v2723, 9
      %v3500 = vpop.permute.xlu0 %3499
      %3501 = vrot.lane.b32.xlu0 %v2724, 9
      %v3502 = vpop.permute.xlu0 %3501
      %3503 = vrot.lane.b32.xlu0 %v2725, 9
      %v3504 = vpop.permute.xlu0 %3503
      %3505 = vrot.lane.b32.xlu0 %v2726, 9
      %v3506 = vpop.permute.xlu0 %3505
      %3507 = vrot.lane.b32.xlu0 %v2727, 9
      %v3508 = vpop.permute.xlu0 %3507
      %3509 = vrot.lane.b32.xlu0 %v2728, 9
      %v3510 = vpop.permute.xlu0 %3509
      %3511 = vrot.lane.b32.xlu0 %v2729, 9
      %v3512 = vpop.permute.xlu0 %3511
      %3513 = vrot.lane.b32.xlu0 %v2730, 9
      %v3514 = vpop.permute.xlu0 %3513
      %3515 = vrot.lane.b32.xlu0 %v2731, 9
      %v3516 = vpop.permute.xlu0 %3515
      %3517 = vrot.lane.b32.xlu0 %v2732, 9
      %v3518 = vpop.permute.xlu0 %3517
      %3519 = vrot.lane.b32.xlu0 %v2733, 9
      %v3520 = vpop.permute.xlu0 %3519
      %3521 = vrot.lane.b32.xlu0 %v2734, 9
      %v3522 = vpop.permute.xlu0 %3521
      %3523 = vrot.lane.b32.xlu0 %v2735, 9
      %v3524 = vpop.permute.xlu0 %3523
      %3525 = vrot.lane.b32.xlu0 %v2736, 9
      %v3526 = vpop.permute.xlu0 %3525
      %3527 = vrot.lane.b32.xlu0 %v2737, 9
      %v3528 = vpop.permute.xlu0 %3527
      %3529 = vrot.lane.b32.xlu0 %v2738, 9
      %v3530 = vpop.permute.xlu0 %3529
      %3531 = vrot.lane.b32.xlu0 %v2739, 9
      %v3532 = vpop.permute.xlu0 %3531
      %3533 = vrot.lane.b32.xlu0 %v2740, 9
      %v3534 = vpop.permute.xlu0 %3533
      %3535 = vrot.lane.b32.xlu0 %v2741, 9
      %v3536 = vpop.permute.xlu0 %3535
      %3537 = vrot.lane.b32.xlu0 %v2742, 9
      %v3538 = vpop.permute.xlu0 %3537
      %3539 = vrot.lane.b32.xlu0 %v2743, 9
      %v3540 = vpop.permute.xlu0 %3539
      %3541 = vrot.lane.b32.xlu0 %v2744, 9
      %v3542 = vpop.permute.xlu0 %3541
      %3543 = vrot.lane.b32.xlu0 %v2745, 9
      %v3544 = vpop.permute.xlu0 %3543
      %3545 = vrot.lane.b32.xlu0 %v2746, 9
      %v3546 = vpop.permute.xlu0 %3545
      %3547 = vrot.lane.b32.xlu0 %v2747, 9
      %v3548 = vpop.permute.xlu0 %3547
      %3549 = vrot.lane.b32.xlu0 %v2748, 9
      %v3550 = vpop.permute.xlu0 %3549
      %3551 = vrot.lane.b32.xlu0 %v2749, 9
      %v3552 = vpop.permute.xlu0 %3551
      %vm3585 = vcmask 736904
      %3586 = vst.msk [vmem:[%s253] sm:$0xff] %vm3585, %v3490
      %3587 = vst.msk [vmem:[%s253 + $0x8] sm:$0xff] %vm3585, %v3492
      %3588 = vst.msk [vmem:[%s253 + $0x10] sm:$0xff] %vm3585, %v3494
      %3589 = vst.msk [vmem:[%s253 + $0x18] sm:$0xff] %vm3585, %v3496
      %3590 = vst.msk [vmem:[%s253 + $0x20] sm:$0xff] %vm3585, %v3498
      %3591 = vst.msk [vmem:[%s253 + $0x28] sm:$0xff] %vm3585, %v3500
      %3592 = vst.msk [vmem:[%s253 + $0x30] sm:$0xff] %vm3585, %v3502
      %3593 = vst.msk [vmem:[%s253 + $0x38] sm:$0xff] %vm3585, %v3504
      %3594 = vst.msk [vmem:[%s253 + $0x40] sm:$0xff] %vm3585, %v3506
      %3595 = vst.msk [vmem:[%s253 + $0x48] sm:$0xff] %vm3585, %v3508
      %3596 = vst.msk [vmem:[%s253 + $0x50] sm:$0xff] %vm3585, %v3510
      %3597 = vst.msk [vmem:[%s253 + $0x58] sm:$0xff] %vm3585, %v3512
      %3598 = vst.msk [vmem:[%s253 + $0x60] sm:$0xff] %vm3585, %v3514
      %3599 = vst.msk [vmem:[%s253 + $0x68] sm:$0xff] %vm3585, %v3516
      %3600 = vst.msk [vmem:[%s253 + $0x70] sm:$0xff] %vm3585, %v3518
      %3601 = vst.msk [vmem:[%s253 + $0x78] sm:$0xff] %vm3585, %v3520
      %3602 = vst.msk [vmem:[%s253 + $0x80] sm:$0xff] %vm3585, %v3522
      %3603 = vst.msk [vmem:[%s253 + $0x88] sm:$0xff] %vm3585, %v3524
      %3604 = vst.msk [vmem:[%s253 + $0x90] sm:$0xff] %vm3585, %v3526
      %3605 = vst.msk [vmem:[%s253 + $0x98] sm:$0xff] %vm3585, %v3528
      %3606 = vst.msk [vmem:[%s253 + $0xa0] sm:$0xff] %vm3585, %v3530
      %3607 = vst.msk [vmem:[%s253 + $0xa8] sm:$0xff] %vm3585, %v3532
      %3608 = vst.msk [vmem:[%s253 + $0xb0] sm:$0xff] %vm3585, %v3534
      %3609 = vst.msk [vmem:[%s253 + $0xb8] sm:$0xff] %vm3585, %v3536
      %3610 = vst.msk [vmem:[%s253 + $0xc0] sm:$0xff] %vm3585, %v3538
      %3611 = vst.msk [vmem:[%s253 + $0xc8] sm:$0xff] %vm3585, %v3540
      %3612 = vst.msk [vmem:[%s253 + $0xd0] sm:$0xff] %vm3585, %v3542
      %3613 = vst.msk [vmem:[%s253 + $0xd8] sm:$0xff] %vm3585, %v3544
      %3614 = vst.msk [vmem:[%s253 + $0xe0] sm:$0xff] %vm3585, %v3546
      %3615 = vst.msk [vmem:[%s253 + $0xe8] sm:$0xff] %vm3585, %v3548
      %3616 = vst.msk [vmem:[%s253 + $0xf0] sm:$0xff] %vm3585, %v3550
      %3617 = vst.msk [vmem:[%s253 + $0xf8] sm:$0xff] %vm3585, %v3552
      %vm3618 = vcmask 810704
      %3619 = vst.msk [vmem:[%s253] sm:$0xff] %vm3618, %v3490
      %3620 = vst.msk [vmem:[%s253 + $0x8] sm:$0xff] %vm3618, %v3492
      %3621 = vst.msk [vmem:[%s253 + $0x10] sm:$0xff] %vm3618, %v3494
      %3622 = vst.msk [vmem:[%s253 + $0x18] sm:$0xff] %vm3618, %v3496
      %3623 = vst.msk [vmem:[%s253 + $0x20] sm:$0xff] %vm3618, %v3498
      %3624 = vst.msk [vmem:[%s253 + $0x28] sm:$0xff] %vm3618, %v3500
      %3625 = vst.msk [vmem:[%s253 + $0x30] sm:$0xff] %vm3618, %v3502
      %3626 = vst.msk [vmem:[%s253 + $0x38] sm:$0xff] %vm3618, %v3504
      %3627 = vst.msk [vmem:[%s253 + $0x40] sm:$0xff] %vm3618, %v3506
      %3628 = vst.msk [vmem:[%s253 + $0x48] sm:$0xff] %vm3618, %v3508
      %3629 = vst.msk [vmem:[%s253 + $0x50] sm:$0xff] %vm3618, %v3510
      %3630 = vst.msk [vmem:[%s253 + $0x58] sm:$0xff] %vm3618, %v3512
      %3631 = vst.msk [vmem:[%s253 + $0x60] sm:$0xff] %vm3618, %v3514
      %3632 = vst.msk [vmem:[%s253 + $0x68] sm:$0xff] %vm3618, %v3516
      %3633 = vst.msk [vmem:[%s253 + $0x70] sm:$0xff] %vm3618, %v3518
      %3634 = vst.msk [vmem:[%s253 + $0x78] sm:$0xff] %vm3618, %v3520
      %3635 = vst.msk [vmem:[%s253 + $0x80] sm:$0xff] %vm3618, %v3522
      %3636 = vst.msk [vmem:[%s253 + $0x88] sm:$0xff] %vm3618, %v3524
      %3637 = vst.msk [vmem:[%s253 + $0x90] sm:$0xff] %vm3618, %v3526
      %3638 = vst.msk [vmem:[%s253 + $0x98] sm:$0xff] %vm3618, %v3528
      %3639 = vst.msk [vmem:[%s253 + $0xa0] sm:$0xff] %vm3618, %v3530
      %3640 = vst.msk [vmem:[%s253 + $0xa8] sm:$0xff] %vm3618, %v3532
      %3641 = vst.msk [vmem:[%s253 + $0xb0] sm:$0xff] %vm3618, %v3534
      %3642 = vst.msk [vmem:[%s253 + $0xb8] sm:$0xff] %vm3618, %v3536
      %3643 = vst.msk [vmem:[%s253 + $0xc0] sm:$0xff] %vm3618, %v3538
      %3644 = vst.msk [vmem:[%s253 + $0xc8] sm:$0xff] %vm3618, %v3540
      %3645 = vst.msk [vmem:[%s253 + $0xd0] sm:$0xff] %vm3618, %v3542
      %3646 = vst.msk [vmem:[%s253 + $0xd8] sm:$0xff] %vm3618, %v3544
      %3647 = vst.msk [vmem:[%s253 + $0xe0] sm:$0xff] %vm3618, %v3546
      %3648 = vst.msk [vmem:[%s253 + $0xe8] sm:$0xff] %vm3618, %v3548
      %3649 = vst.msk [vmem:[%s253 + $0xf0] sm:$0xff] %vm3618, %v3550
      %3650 = vst.msk [vmem:[%s253 + $0xf8] sm:$0xff] %vm3618, %v3552
      %3683 = vrot.lane.b32.xlu0 %v3102, 27
      %v3684 = vpop.permute.xlu0 %3683
      %3685 = vrot.lane.b32.xlu0 %v3103, 27
      %v3686 = vpop.permute.xlu0 %3685
      %3687 = vrot.lane.b32.xlu0 %v3104, 27
      %v3688 = vpop.permute.xlu0 %3687
      %3689 = vrot.lane.b32.xlu0 %v3105, 27
      %v3690 = vpop.permute.xlu0 %3689
      %3691 = vrot.lane.b32.xlu0 %v3106, 27
      %v3692 = vpop.permute.xlu0 %3691
      %3693 = vrot.lane.b32.xlu0 %v3107, 27
      %v3694 = vpop.permute.xlu0 %3693
      %3695 = vrot.lane.b32.xlu0 %v3108, 27
      %v3696 = vpop.permute.xlu0 %3695
      %3697 = vrot.lane.b32.xlu0 %v3109, 27
      %v3698 = vpop.permute.xlu0 %3697
      %3699 = vrot.lane.b32.xlu0 %v3110, 27
      %v3700 = vpop.permute.xlu0 %3699
      %3701 = vrot.lane.b32.xlu0 %v3111, 27
      %v3702 = vpop.permute.xlu0 %3701
      %3703 = vrot.lane.b32.xlu0 %v3112, 27
      %v3704 = vpop.permute.xlu0 %3703
      %3705 = vrot.lane.b32.xlu0 %v3113, 27
      %v3706 = vpop.permute.xlu0 %3705
      %3707 = vrot.lane.b32.xlu0 %v3114, 27
      %v3708 = vpop.permute.xlu0 %3707
      %3709 = vrot.lane.b32.xlu0 %v3115, 27
      %v3710 = vpop.permute.xlu0 %3709
      %3711 = vrot.lane.b32.xlu0 %v3116, 27
      %v3712 = vpop.permute.xlu0 %3711
      %3713 = vrot.lane.b32.xlu0 %v3117, 27
      %v3714 = vpop.permute.xlu0 %3713
      %3715 = vrot.lane.b32.xlu0 %v3118, 27
      %v3716 = vpop.permute.xlu0 %3715
      %3717 = vrot.lane.b32.xlu0 %v3119, 27
      %v3718 = vpop.permute.xlu0 %3717
      %3719 = vrot.lane.b32.xlu0 %v3120, 27
      %v3720 = vpop.permute.xlu0 %3719
      %3721 = vrot.lane.b32.xlu0 %v3121, 27
      %v3722 = vpop.permute.xlu0 %3721
      %3723 = vrot.lane.b32.xlu0 %v3122, 27
      %v3724 = vpop.permute.xlu0 %3723
      %3725 = vrot.lane.b32.xlu0 %v3123, 27
      %v3726 = vpop.permute.xlu0 %3725
      %3727 = vrot.lane.b32.xlu0 %v3124, 27
      %v3728 = vpop.permute.xlu0 %3727
      %3729 = vrot.lane.b32.xlu0 %v3125, 27
      %v3730 = vpop.permute.xlu0 %3729
      %3731 = vrot.lane.b32.xlu0 %v3126, 27
      %v3732 = vpop.permute.xlu0 %3731
      %3733 = vrot.lane.b32.xlu0 %v3127, 27
      %v3734 = vpop.permute.xlu0 %3733
      %3735 = vrot.lane.b32.xlu0 %v3128, 27
      %v3736 = vpop.permute.xlu0 %3735
      %3737 = vrot.lane.b32.xlu0 %v3129, 27
      %v3738 = vpop.permute.xlu0 %3737
      %3739 = vrot.lane.b32.xlu0 %v3130, 27
      %v3740 = vpop.permute.xlu0 %3739
      %3741 = vrot.lane.b32.xlu0 %v3131, 27
      %v3742 = vpop.permute.xlu0 %3741
      %3743 = vrot.lane.b32.xlu0 %v3132, 27
      %v3744 = vpop.permute.xlu0 %3743
      %3745 = vrot.lane.b32.xlu0 %v3133, 27
      %v3746 = vpop.permute.xlu0 %3745
      %vm3779 = vcmask 884504
      %3780 = vst.msk [vmem:[%s253] sm:$0xff] %vm3779, %v3684
      %3781 = vst.msk [vmem:[%s253 + $0x8] sm:$0xff] %vm3779, %v3686
      %3782 = vst.msk [vmem:[%s253 + $0x10] sm:$0xff] %vm3779, %v3688
      %3783 = vst.msk [vmem:[%s253 + $0x18] sm:$0xff] %vm3779, %v3690
      %3784 = vst.msk [vmem:[%s253 + $0x20] sm:$0xff] %vm3779, %v3692
      %3785 = vst.msk [vmem:[%s253 + $0x28] sm:$0xff] %vm3779, %v3694
      %3786 = vst.msk [vmem:[%s253 + $0x30] sm:$0xff] %vm3779, %v3696
      %3787 = vst.msk [vmem:[%s253 + $0x38] sm:$0xff] %vm3779, %v3698
      %3788 = vst.msk [vmem:[%s253 + $0x40] sm:$0xff] %vm3779, %v3700
      %3789 = vst.msk [vmem:[%s253 + $0x48] sm:$0xff] %vm3779, %v3702
      %3790 = vst.msk [vmem:[%s253 + $0x50] sm:$0xff] %vm3779, %v3704
      %3791 = vst.msk [vmem:[%s253 + $0x58] sm:$0xff] %vm3779, %v3706
      %3792 = vst.msk [vmem:[%s253 + $0x60] sm:$0xff] %vm3779, %v3708
      %3793 = vst.msk [vmem:[%s253 + $0x68] sm:$0xff] %vm3779, %v3710
      %3794 = vst.msk [vmem:[%s253 + $0x70] sm:$0xff] %vm3779, %v3712
      %3795 = vst.msk [vmem:[%s253 + $0x78] sm:$0xff] %vm3779, %v3714
      %3796 = vst.msk [vmem:[%s253 + $0x80] sm:$0xff] %vm3779, %v3716
      %3797 = vst.msk [vmem:[%s253 + $0x88] sm:$0xff] %vm3779, %v3718
      %3798 = vst.msk [vmem:[%s253 + $0x90] sm:$0xff] %vm3779, %v3720
      %3799 = vst.msk [vmem:[%s253 + $0x98] sm:$0xff] %vm3779, %v3722
      %3800 = vst.msk [vmem:[%s253 + $0xa0] sm:$0xff] %vm3779, %v3724
      %3801 = vst.msk [vmem:[%s253 + $0xa8] sm:$0xff] %vm3779, %v3726
      %3802 = vst.msk [vmem:[%s253 + $0xb0] sm:$0xff] %vm3779, %v3728
      %3803 = vst.msk [vmem:[%s253 + $0xb8] sm:$0xff] %vm3779, %v3730
      %3804 = vst.msk [vmem:[%s253 + $0xc0] sm:$0xff] %vm3779, %v3732
      %3805 = vst.msk [vmem:[%s253 + $0xc8] sm:$0xff] %vm3779, %v3734
      %3806 = vst.msk [vmem:[%s253 + $0xd0] sm:$0xff] %vm3779, %v3736
      %3807 = vst.msk [vmem:[%s253 + $0xd8] sm:$0xff] %vm3779, %v3738
      %3808 = vst.msk [vmem:[%s253 + $0xe0] sm:$0xff] %vm3779, %v3740
      %3809 = vst.msk [vmem:[%s253 + $0xe8] sm:$0xff] %vm3779, %v3742
      %3810 = vst.msk [vmem:[%s253 + $0xf0] sm:$0xff] %vm3779, %v3744
      %3811 = vst.msk [vmem:[%s253 + $0xf8] sm:$0xff] %vm3779, %v3746
      %s3812 = smul.u32 32, %s17
      %p3813 = scmp.lt.s32.totalorder %s3812, 63
      %s3814 = scalar_select %p3813, %s3812, 63
      %s3815 = smul.addr %s3814, 8
      %s3816 = scalar_lea.vmem %s6, %s3815
      // Predicated region
      $region45: #{rpn_forward.1} parent=43 // pred_check
        %p3817 = pneg %p166
      $region46: #{rpn_forward.1} parent=43 // pred_check_branch
        %3819 = sbr.rel (%p3817) target = $region48
      $region47: #{rpn_forward.1} parent=43 // pred_region
        %s3820 = smul.u32 32, %s17
      $region48: #{rpn_forward.1} parent=43 // pred_fallthru
        _
    $region44: #{rpn_forward.1} parent=5 // pred_fallthru
      _
    %p3821 = scmp.le.s32.totalorder 2, %s12
    // Predicated region
    $region49: #{rpn_forward.1} parent=5 // pred_check
      %p3822 = pneg %p3821
    $region50: #{rpn_forward.1} parent=5 // pred_check_branch
      %3824 = sbr.rel (%p3822) target = $region52
    $region51: #{rpn_forward.1} parent=5 // pred_region
      %s3825 = ssub.s32 %s12, 2
      // Predicated region
      $region53: #{rpn_forward.1} parent=51 // pred_check
        %p3826 = pneg %p172
      $region54: #{rpn_forward.1} parent=51 // pred_check_branch
        %3828 = sbr.rel (%p3826) target = $region56
      $region55: #{rpn_forward.1} parent=51 // pred_region
        %s3829 = smul.u32 32, %s18
        %p3830 = scmp.lt.s32.totalorder %s3829, 63
        %s3831 = scalar_select %p3830, %s3829, 63
        %s3832 = smul.addr %s3831, 8
        %s3833 = scalar_lea.vmem %s6, %s3832
      $region56: #{rpn_forward.1} parent=51 // pred_fallthru
        _
    $region52: #{rpn_forward.1} parent=5 // pred_fallthru
      _
  $region6: #{rpn_forward.1} parent=0 // loop_footer
    %s16 = sadd.s32 1, %s12
  $region7: #{rpn_forward.1} parent=0 // loop_footer_branch
    %11 = sbr.rel target = $region3
  $region8: #{rpn_forward.1} parent=0 // loop_exit
    _

</llo_original>
